<compile_context>
chip_gen: v7x
topology: tpu7x:2x2x1
jax: 0.10.0
libtpu: 0.0.40
codegen_flags: <defaults>
</compile_context>

<pallas_src>
import math

import jax
import jax.numpy as jnp
from jax.experimental import pallas as pl
from jax.experimental.pallas import tpu as pltpu


def _mlp_kernel(z_ref,
                w1_ref, b1_ref,
                w2_ref, b2_ref,
                w3_ref, b3_ref,
                w4_ref, b4_ref,
                w5_ref, b5_ref,
                o_ref):
    """Fused 5-layer MLP forward for one batch tile: 4x (Linear+ReLU), Linear, Sigmoid."""
    # Layer 1..4: bf16 matmul on the MXU (f32 accumulate), bias/ReLU in f32 on VPU.
    x = z_ref[...].astype(jnp.bfloat16)
    h = jnp.dot(x, w1_ref[...], preferred_element_type=jnp.float32) + b1_ref[...]
    h = jnp.maximum(h, 0.0)

    h = jnp.dot(h.astype(jnp.bfloat16), w2_ref[...],
                preferred_element_type=jnp.float32) + b2_ref[...]
    h = jnp.maximum(h, 0.0)

    h = jnp.dot(h.astype(jnp.bfloat16), w3_ref[...],
                preferred_element_type=jnp.float32) + b3_ref[...]
    h = jnp.maximum(h, 0.0)

    h = jnp.dot(h.astype(jnp.bfloat16), w4_ref[...],
                preferred_element_type=jnp.float32) + b4_ref[...]
    h = jnp.maximum(h, 0.0)

    # Output layer: Linear + Sigmoid.  exp -> EUP, approx reciprocal -> EUP,
    # keeping the VALU slots free.
    logits = jnp.dot(h.astype(jnp.bfloat16), w5_ref[...],
                     preferred_element_type=jnp.float32) + b5_ref[...]
    t = jnp.exp(-logits)
    o_ref[...] = pl.reciprocal(1.0 + t, approx=True).astype(o_ref.dtype)


def discriminator_forward(z, params, *, tb=128):
    """z: (B, z_dim) float32; params: list of (W:(in,out) bf16, b:(1,out) f32)."""
    B, z_dim = z.shape
    n_tiles = pl.cdiv(B, tb)
    b_pad = n_tiles * tb
    if b_pad != B:
        z = jnp.pad(z, ((0, b_pad - B), (0, 0)))

    flat = [z]
    in_specs = [pl.BlockSpec((tb, z_dim), lambda i: (i, 0))]
    for (w, b) in params:
        flat.extend([w, b])
        # Constant index_map: weights/biases are resident in VMEM, DMA'd once.
        in_specs.append(pl.BlockSpec(w.shape, lambda i: (0, 0)))
        in_specs.append(pl.BlockSpec(b.shape, lambda i: (0, 0)))

    out_spec = pl.BlockSpec((tb, 1), lambda i: (i, 0))

    out = pl.pallas_call(
        _mlp_kernel,
        out_shape=jax.ShapeDtypeStruct((b_pad, 1), jnp.float32),
        grid=(n_tiles,),
        in_specs=in_specs,
        out_specs=out_spec,
        compiler_params=pltpu.CompilerParams(
            dimension_semantics=("parallel",),   # megacore sharding on v7x
            vmem_limit_bytes=32 << 20,
        ),
    )(*flat)
    return out[:B]


def init_params(key, z_dim=10, hidden=512):
    """Kaiming-normal init matching kaiming_init() in model.py.

    PyTorch kaiming_normal_ (fan_in, gain=sqrt(2)): std = sqrt(2 / fan_in).
    Biases zero.  Weights stored as (in, out) = W_pytorch.T, in bf16.
    """
    dims = [(z_dim, hidden), (hidden, hidden), (hidden, hidden),
            (hidden, hidden), (hidden, 1)]
    params = []
    for (fan_in, fan_out) in dims:
        key, sub = jax.random.split(key)
        std = math.sqrt(2.0 / fan_in)
        w = (jax.random.normal(sub, (fan_in, fan_out), dtype=jnp.float32)
             * std).astype(jnp.bfloat16)
        b = jnp.zeros((1, fan_out), dtype=jnp.float32)
        params.append((w, b))
    return params


def reference_forward(z, params):
    """Matching-precision reference: bf16 matmuls with f32 accumulation, exact sigmoid."""
    h = z
    n = len(params)
    for i, (w, b) in enumerate(params):
        h = jnp.dot(h.astype(jnp.bfloat16), w,
                    preferred_element_type=jnp.float32) + b
        if i < n - 1:
            h = jnp.maximum(h, 0.0)
    return jax.nn.sigmoid(h)


if __name__ == "__main__":
    key = jax.random.PRNGKey(0)
    k_param, k_z = jax.random.split(key)

    B, Z_DIM, TB = 256, 10, 128   # 2 batch tiles of 128 rows each
    params = init_params(k_param, z_dim=Z_DIM, hidden=512)
    z = jax.random.normal(k_z, (B, Z_DIM), dtype=jnp.float32)

    out = discriminator_forward(z, params, tb=TB)
    out = jax.block_until_ready(out)

    ref = jax.block_until_ready(reference_forward(z, params))
    assert out.shape == (B, 1), out.shape
    # Kernel differs from the reference only via the EUP approximate reciprocal
    # (and MXU accumulation order), so a tight-ish tolerance suffices.
    assert jnp.allclose(out, ref, atol=5e-3, rtol=5e-3), (
        f"max abs err {jnp.max(jnp.abs(out - ref))}")
    assert bool(jnp.all(jnp.isfinite(out)))

    print("KERNEL_OK")
</pallas_src>

<mosaic_0001>
module attributes {stable_mosaic.version = 11 : i64} {
  func.func @_mlp_kernel(%arg0: i32, %arg1: memref<128x10xf32, #tpu.memory_space<vmem>>, %arg2: memref<10x512xbf16, #tpu.memory_space<vmem>>, %arg3: memref<1x512xf32, #tpu.memory_space<vmem>>, %arg4: memref<512x512xbf16, #tpu.memory_space<vmem>>, %arg5: memref<1x512xf32, #tpu.memory_space<vmem>>, %arg6: memref<512x512xbf16, #tpu.memory_space<vmem>>, %arg7: memref<1x512xf32, #tpu.memory_space<vmem>>, %arg8: memref<512x512xbf16, #tpu.memory_space<vmem>>, %arg9: memref<1x512xf32, #tpu.memory_space<vmem>>, %arg10: memref<512x1xbf16, #tpu.memory_space<vmem>>, %arg11: memref<1x1xf32, #tpu.memory_space<vmem>>, %arg12: memref<128x1xf32, #tpu.memory_space<vmem>>) attributes {dimension_semantics = [#tpu.dimension_semantics<parallel>], iteration_bounds = array<i64: 2>, scalar_prefetch = 0 : i64, scratch_operands = 0 : i64, tpu.core_type = #tpu.core_type<tc>, window_params = [{transform_indices = @transform_0, window_bounds = array<i64: 128, 10>}, {pipeline_mode = #tpu.pipeline_mode<synchronous>, transform_indices = @transform_1, window_bounds = array<i64: 10, 512>}, {pipeline_mode = #tpu.pipeline_mode<synchronous>, transform_indices = @transform_2, window_bounds = array<i64: 1, 512>}, {pipeline_mode = #tpu.pipeline_mode<synchronous>, transform_indices = @transform_3, window_bounds = array<i64: 512, 512>}, {pipeline_mode = #tpu.pipeline_mode<synchronous>, transform_indices = @transform_4, window_bounds = array<i64: 1, 512>}, {pipeline_mode = #tpu.pipeline_mode<synchronous>, transform_indices = @transform_5, window_bounds = array<i64: 512, 512>}, {pipeline_mode = #tpu.pipeline_mode<synchronous>, transform_indices = @transform_6, window_bounds = array<i64: 1, 512>}, {pipeline_mode = #tpu.pipeline_mode<synchronous>, transform_indices = @transform_7, window_bounds = array<i64: 512, 512>}, {pipeline_mode = #tpu.pipeline_mode<synchronous>, transform_indices = @transform_8, window_bounds = array<i64: 1, 512>}, {pipeline_mode = #tpu.pipeline_mode<synchronous>, transform_indices = @transform_9, window_bounds = array<i64: 512, 1>}, {pipeline_mode = #tpu.pipeline_mode<synchronous>, transform_indices = @transform_10, window_bounds = array<i64: 1, 1>}, {transform_indices = @transform_11, window_bounds = array<i64: 128, 1>}]} {
    %c0 = arith.constant 0 : index
    %c0_0 = arith.constant 0 : index
    %0 = vector.load %arg1[%c0, %c0_0] : memref<128x10xf32, #tpu.memory_space<vmem>>, vector<128x10xf32>
    %1 = arith.truncf %0 : vector<128x10xf32> to vector<128x10xbf16>
    %c0_1 = arith.constant 0 : index
    %c0_2 = arith.constant 0 : index
    %2 = vector.load %arg2[%c0_1, %c0_2] : memref<10x512xbf16, #tpu.memory_space<vmem>>, vector<10x512xbf16>
    %cst = arith.constant dense<0.000000e+00> : vector<128x512xf32>
    %3 = tpu.matmul %1, %2, %cst {dimension_numbers = #tpu.dot_dimension_numbers<[1], [0], [0], [1], [0, 0, 1, 1], [], []>} : vector<128x10xbf16>, vector<10x512xbf16>, vector<128x512xf32> -> vector<128x512xf32>
    %c0_3 = arith.constant 0 : index
    %c0_4 = arith.constant 0 : index
    %4 = vector.load %arg3[%c0_3, %c0_4] : memref<1x512xf32, #tpu.memory_space<vmem>>, vector<1x512xf32>
    %5 = vector.broadcast %4 : vector<1x512xf32> to vector<128x512xf32>
    %6 = arith.addf %3, %5 : vector<128x512xf32>
    %cst_5 = arith.constant 0.000000e+00 : f32
    %7 = vector.broadcast %cst_5 : f32 to vector<128x512xf32>
    %8 = arith.maximumf %6, %7 : vector<128x512xf32>
    %9 = arith.truncf %8 : vector<128x512xf32> to vector<128x512xbf16>
    %c0_6 = arith.constant 0 : index
    %c0_7 = arith.constant 0 : index
    %10 = vector.load %arg4[%c0_6, %c0_7] : memref<512x512xbf16, #tpu.memory_space<vmem>>, vector<512x512xbf16>
    %cst_8 = arith.constant dense<0.000000e+00> : vector<128x512xf32>
    %11 = tpu.matmul %9, %10, %cst_8 {dimension_numbers = #tpu.dot_dimension_numbers<[1], [0], [0], [1], [0, 0, 1, 1], [], []>} : vector<128x512xbf16>, vector<512x512xbf16>, vector<128x512xf32> -> vector<128x512xf32>
    %c0_9 = arith.constant 0 : index
    %c0_10 = arith.constant 0 : index
    %12 = vector.load %arg5[%c0_9, %c0_10] : memref<1x512xf32, #tpu.memory_space<vmem>>, vector<1x512xf32>
    %13 = vector.broadcast %12 : vector<1x512xf32> to vector<128x512xf32>
    %14 = arith.addf %11, %13 : vector<128x512xf32>
    %cst_11 = arith.constant 0.000000e+00 : f32
    %15 = vector.broadcast %cst_11 : f32 to vector<128x512xf32>
    %16 = arith.maximumf %14, %15 : vector<128x512xf32>
    %17 = arith.truncf %16 : vector<128x512xf32> to vector<128x512xbf16>
    %c0_12 = arith.constant 0 : index
    %c0_13 = arith.constant 0 : index
    %18 = vector.load %arg6[%c0_12, %c0_13] : memref<512x512xbf16, #tpu.memory_space<vmem>>, vector<512x512xbf16>
    %cst_14 = arith.constant dense<0.000000e+00> : vector<128x512xf32>
    %19 = tpu.matmul %17, %18, %cst_14 {dimension_numbers = #tpu.dot_dimension_numbers<[1], [0], [0], [1], [0, 0, 1, 1], [], []>} : vector<128x512xbf16>, vector<512x512xbf16>, vector<128x512xf32> -> vector<128x512xf32>
    %c0_15 = arith.constant 0 : index
    %c0_16 = arith.constant 0 : index
    %20 = vector.load %arg7[%c0_15, %c0_16] : memref<1x512xf32, #tpu.memory_space<vmem>>, vector<1x512xf32>
    %21 = vector.broadcast %20 : vector<1x512xf32> to vector<128x512xf32>
    %22 = arith.addf %19, %21 : vector<128x512xf32>
    %cst_17 = arith.constant 0.000000e+00 : f32
    %23 = vector.broadcast %cst_17 : f32 to vector<128x512xf32>
    %24 = arith.maximumf %22, %23 : vector<128x512xf32>
    %25 = arith.truncf %24 : vector<128x512xf32> to vector<128x512xbf16>
    %c0_18 = arith.constant 0 : index
    %c0_19 = arith.constant 0 : index
    %26 = vector.load %arg8[%c0_18, %c0_19] : memref<512x512xbf16, #tpu.memory_space<vmem>>, vector<512x512xbf16>
    %cst_20 = arith.constant dense<0.000000e+00> : vector<128x512xf32>
    %27 = tpu.matmul %25, %26, %cst_20 {dimension_numbers = #tpu.dot_dimension_numbers<[1], [0], [0], [1], [0, 0, 1, 1], [], []>} : vector<128x512xbf16>, vector<512x512xbf16>, vector<128x512xf32> -> vector<128x512xf32>
    %c0_21 = arith.constant 0 : index
    %c0_22 = arith.constant 0 : index
    %28 = vector.load %arg9[%c0_21, %c0_22] : memref<1x512xf32, #tpu.memory_space<vmem>>, vector<1x512xf32>
    %29 = vector.broadcast %28 : vector<1x512xf32> to vector<128x512xf32>
    %30 = arith.addf %27, %29 : vector<128x512xf32>
    %cst_23 = arith.constant 0.000000e+00 : f32
    %31 = vector.broadcast %cst_23 : f32 to vector<128x512xf32>
    %32 = arith.maximumf %30, %31 : vector<128x512xf32>
    %33 = arith.truncf %32 : vector<128x512xf32> to vector<128x512xbf16>
    %c0_24 = arith.constant 0 : index
    %c0_25 = arith.constant 0 : index
    %34 = vector.load %arg10[%c0_24, %c0_25] : memref<512x1xbf16, #tpu.memory_space<vmem>>, vector<512x1xbf16>
    %cst_26 = arith.constant dense<0.000000e+00> : vector<128x1xf32>
    %35 = tpu.matmul %33, %34, %cst_26 {dimension_numbers = #tpu.dot_dimension_numbers<[1], [0], [0], [1], [0, 0, 1, 1], [], []>} : vector<128x512xbf16>, vector<512x1xbf16>, vector<128x1xf32> -> vector<128x1xf32>
    %c0_27 = arith.constant 0 : index
    %c0_28 = arith.constant 0 : index
    %36 = vector.load %arg11[%c0_27, %c0_28] : memref<1x1xf32, #tpu.memory_space<vmem>>, vector<1x1xf32>
    %37 = vector.broadcast %36 : vector<1x1xf32> to vector<128x1xf32>
    %38 = arith.addf %35, %37 : vector<128x1xf32>
    %cst_29 = arith.constant 0.000000e+00 : f32
    %39 = vector.broadcast %cst_29 : f32 to vector<128x1xf32>
    %40 = arith.subf %39, %38 : vector<128x1xf32>
    %41 = math.exp %40 : vector<128x1xf32>
    %cst_30 = arith.constant 1.000000e+00 : f32
    %42 = vector.broadcast %cst_30 : f32 to vector<128x1xf32>
    %43 = arith.addf %42, %41 : vector<128x1xf32>
    %44 = tpu.reciprocal %43 {approx = true} : vector<128x1xf32> -> vector<128x1xf32>
    %c0_31 = arith.constant 0 : index
    %c0_32 = arith.constant 0 : index
    %45 = vector.load %arg12[%c0_31, %c0_32] : memref<128x1xf32, #tpu.memory_space<vmem>>, vector<128x1xf32>
    tpu.vector_store %arg12[%c0_31, %c0_32], %44 {strides = array<i32>} : memref<128x1xf32, #tpu.memory_space<vmem>>, vector<128x1xf32>,
    return
  }
  func.func @transform_0(%arg0: i32) -> (i32, i32) {
    %c0_i32 = arith.constant 0 : i32
    %c0_i32_0 = arith.constant 0 : i32
    return %arg0, %c0_i32 : i32, i32
  }
  func.func @transform_1(%arg0: i32) -> (i32, i32) {
    %c0_i32 = arith.constant 0 : i32
    %c0_i32_0 = arith.constant 0 : i32
    %c0_i32_1 = arith.constant 0 : i32
    return %c0_i32, %c0_i32_0 : i32, i32
  }
  func.func @transform_2(%arg0: i32) -> (i32, i32) {
    %c0_i32 = arith.constant 0 : i32
    %c0_i32_0 = arith.constant 0 : i32
    %c0_i32_1 = arith.constant 0 : i32
    return %c0_i32, %c0_i32_0 : i32, i32
  }
  func.func @transform_3(%arg0: i32) -> (i32, i32) {
    %c0_i32 = arith.constant 0 : i32
    %c0_i32_0 = arith.constant 0 : i32
    %c0_i32_1 = arith.constant 0 : i32
    return %c0_i32, %c0_i32_0 : i32, i32
  }
  func.func @transform_4(%arg0: i32) -> (i32, i32) {
    %c0_i32 = arith.constant 0 : i32
    %c0_i32_0 = arith.constant 0 : i32
    %c0_i32_1 = arith.constant 0 : i32
    return %c0_i32, %c0_i32_0 : i32, i32
  }
  func.func @transform_5(%arg0: i32) -> (i32, i32) {
    %c0_i32 = arith.constant 0 : i32
    %c0_i32_0 = arith.constant 0 : i32
    %c0_i32_1 = arith.constant 0 : i32
    return %c0_i32, %c0_i32_0 : i32, i32
  }
  func.func @transform_6(%arg0: i32) -> (i32, i32) {
    %c0_i32 = arith.constant 0 : i32
    %c0_i32_0 = arith.constant 0 : i32
    %c0_i32_1 = arith.constant 0 : i32
    return %c0_i32, %c0_i32_0 : i32, i32
  }
  func.func @transform_7(%arg0: i32) -> (i32, i32) {
    %c0_i32 = arith.constant 0 : i32
    %c0_i32_0 = arith.constant 0 : i32
    %c0_i32_1 = arith.constant 0 : i32
    return %c0_i32, %c0_i32_0 : i32, i32
  }
  func.func @transform_8(%arg0: i32) -> (i32, i32) {
    %c0_i32 = arith.constant 0 : i32
    %c0_i32_0 = arith.constant 0 : i32
    %c0_i32_1 = arith.constant 0 : i32
    return %c0_i32, %c0_i32_0 : i32, i32
  }
  func.func @transform_9(%arg0: i32) -> (i32, i32) {
    %c0_i32 = arith.constant 0 : i32
    %c0_i32_0 = arith.constant 0 : i32
    %c0_i32_1 = arith.constant 0 : i32
    return %c0_i32, %c0_i32_0 : i32, i32
  }
  func.func @transform_10(%arg0: i32) -> (i32, i32) {
    %c0_i32 = arith.constant 0 : i32
    %c0_i32_0 = arith.constant 0 : i32
    %c0_i32_1 = arith.constant 0 : i32
    return %c0_i32, %c0_i32_0 : i32, i32
  }
  func.func @transform_11(%arg0: i32) -> (i32, i32) {
    %c0_i32 = arith.constant 0 : i32
    %c0_i32_0 = arith.constant 0 : i32
    return %arg0, %c0_i32 : i32, i32
  }
}

</mosaic_0001>

<llo_original>
// kernel: tpu_custom_call.1
$region0: #{tpu_custom_call.1}
  #allocation0 [shape = 'u32[]', space=smem, size = 0x4, offset = 0x4, fixed_abs, tag = 'smem constant byte address 0x4 - core index']
  #allocation1 [shape = 'u32[144,128]{1,0:T(1,128)}', space=vmem, size = 0x12000, scoped, tag = 'internal scratch']
  #allocation2 [shape = 'f32[1,1]{1,0:T(1,128)S(1)}', space=vmem, size = 0x200, scoped, tag = 'scoped memory for tpu_custom_call.1']
  %s0 = inlined_call_operand.vmem [shape: f32[256,10], index: 0, kind: input, shape index: {}]
  %s1 = inlined_call_operand.vmem [shape: bf16[10,512], index: 1, kind: input, shape index: {}]
  %s2 = inlined_call_operand.vmem [shape: f32[1,512], index: 2, kind: input, shape index: {}]
  %s3 = inlined_call_operand.hbm [shape: bf16[512,512], index: 3, kind: input, shape index: {}]
  %s4 = inlined_call_operand.vmem [shape: f32[1,512], index: 4, kind: input, shape index: {}]
  %s5 = inlined_call_operand.hbm [shape: bf16[512,512], index: 5, kind: input, shape index: {}]
  %s6 = inlined_call_operand.vmem [shape: f32[1,512], index: 6, kind: input, shape index: {}]
  %s7 = inlined_call_operand.hbm [shape: bf16[512,512], index: 7, kind: input, shape index: {}]
  %s8 = inlined_call_operand.vmem [shape: f32[1,512], index: 8, kind: input, shape index: {}]
  %s9 = inlined_call_operand.vmem [shape: bf16[512,1], index: 9, kind: input, shape index: {}]
  %s10 = inlined_call_operand.<no memory space> [shape: f32[1,1], index: 10, kind: input, shape index: {}]
  %s11 = inlined_call_operand.vmem [shape: f32[256,1], index: 11, kind: output, shape index: {}]
  %s12 = sld [smem:[#allocation0]]
  $region89: #{tpu_custom_call.1} parent=0
    _
  %s14 = ssub.s32 1, %s12
  %s15 = scalar_select 0, %s14, %s12
  %v16 = vstv %s10
  %17 = vst [vmem:[#allocation2] sm:$0x1] %v16
  $region1: #{tpu_custom_call.1} parent=0
    #allocation3 [shape = 'u8[524288]{0}', space=vmem, size = 0x80000, scoped, tag = 'input window, operand 3, single buffered']
    #allocation4 [shape = 's32[2]{0}', space=sflag, size = 0x8, scoped, tag = 'scoped memory for tpu_custom_call.1']
    #allocation5 [shape = 'u8[524288]{0}', space=vmem, size = 0x80000, scoped, tag = 'input window, operand 5, single buffered']
    #allocation6 [shape = 's32[1]{0}', space=sflag, size = 0x4, scoped, tag = 'scoped memory for tpu_custom_call.1']
    #allocation7 [shape = 'u8[524288]{0}', space=vmem, size = 0x80000, scoped, tag = 'input window, operand 7, single buffered']
    %18 = vsyncpa [#allocation4], 0
    %19 = vsyncpa [#allocation6], 0
    loop: start=0, step=1, limit=4
    $region2: #{tpu_custom_call.1} parent=1 // loop_pre_header
      _
    $region3: #{tpu_custom_call.1} parent=1 // loop_header
      %s21 = sphi 0, %s25
      %p22 = scmp.ge.s32.totalorder %s21, 4
      %s31 = sphi 0, %s33
      %s34 = sphi 0, %s31
      %s35 = sphi 0, %s34
      %s51 = sphi 0, %s35
      %s55 = sphi 0, %s55
      %s57 = sphi 0, %s55
      %s58 = sphi 0, %s57
      %s72 = sphi 0, %s58
      %s76 = sphi 0, %s76
      %s78 = sphi 0, %s76
      %s79 = sphi 0, %s78
      %s93 = sphi 0, %s79
      %s97 = sphi 0, %s97
      %s99 = sphi 0, %s97
      %s100 = sphi 0, %s99
      %s114 = sphi 0, %s100
      %s118 = sphi 0, %s118
      %s120 = sphi 0, %s118
      %s121 = sphi 0, %s120
      %s135 = sphi 0, %s121
      %s139 = sphi 0, %s139
      %s141 = sphi 0, %s139
      %s142 = sphi 0, %s141
      %s156 = sphi 0, %s142
      %s160 = sphi 0, %s160
      %s162 = sphi 0, %s160
      %s163 = sphi 0, %s162
      %s177 = sphi 0, %s163
      %s181 = sphi 0, %s181
      %s183 = sphi 0, %s181
      %s184 = sphi 0, %s183
      %s198 = sphi 0, %s184
      %s202 = sphi 0, %s202
      %s204 = sphi 0, %s202
      %s205 = sphi 0, %s204
      %s219 = sphi 0, %s205
      %s223 = sphi 0, %s223
      %s225 = sphi 0, %s223
      %s226 = sphi 0, %s225
      %s240 = sphi 0, %s226
      %s244 = sphi 0, %s244
      %s246 = sphi 0, %s244
      %s247 = sphi 0, %s246
      %s261 = sphi 0, %s247
      %s267 = sphi 0, %s269
      %s270 = sphi 0, %s267
      %s271 = sphi 0, %s270
      %s287 = sphi 0, %s271
    $region4: #{tpu_custom_call.1} parent=1 // loop_header_branch
      %24 = sbr.rel (%p22) target = $region8
    $region5: #{tpu_custom_call.1} parent=1 // loop_body
      %s26 = ssub.s32 %s21, 1
      %s27 = ssub.s32 %s21, 2
      %s28 = sadd.s32 %s21, 1
      %s29 = ssub.s32 %s21, %s28
      %p30 = scmp.eq.s32.totalorder %s29, 0
      %s32 = sadd.s32 %s31, 1
      %s33 = scalar_select %p30, %s31, %s32
      %p36 = pneg %p30
      %p37 = scmp.eq.s32.totalorder %s21, 1
      %p38 = por %p36, %p37
      %p39 = scmp.ne.s32.totalorder %s31, %s34
      %p40 = scmp.eq.s32.totalorder %s21, 0
      %p41 = por %p39, %p40
      %p42 = scmp.ne.s32.totalorder %s31, %s34
      %p43 = scmp.eq.s32.totalorder %s26, 1
      %p44 = por %p42, %p43
      %p45 = scmp.ne.s32.totalorder %s34, %s35
      %p46 = scmp.eq.s32.totalorder %s26, 0
      %p47 = por %p45, %p46
      %p48 = scmp.ne.s32.totalorder %s34, %s35
      %p49 = scmp.eq.s32.totalorder %s27, 1
      %p50 = por %p48, %p49
      %p52 = scmp.ne.s32.totalorder %s35, %s51
      %p53 = scmp.eq.s32.totalorder %s27, 0
      %p54 = por %p52, %p53
      %s56 = sadd.s32 %s55, 1
      %p59 = scmp.eq.s32.totalorder %s21, 1
      %p60 = scmp.ne.s32.totalorder %s55, %s57
      %p61 = scmp.eq.s32.totalorder %s21, 0
      %p62 = por %p60, %p61
      %p63 = scmp.ne.s32.totalorder %s55, %s57
      %p64 = scmp.eq.s32.totalorder %s26, 1
      %p65 = por %p63, %p64
      %p66 = scmp.ne.s32.totalorder %s57, %s58
      %p67 = scmp.eq.s32.totalorder %s26, 0
      %p68 = por %p66, %p67
      %p69 = scmp.ne.s32.totalorder %s57, %s58
      %p70 = scmp.eq.s32.totalorder %s27, 1
      %p71 = por %p69, %p70
      %p73 = scmp.ne.s32.totalorder %s58, %s72
      %p74 = scmp.eq.s32.totalorder %s27, 0
      %p75 = por %p73, %p74
      %s77 = sadd.s32 %s76, 1
      %p80 = scmp.eq.s32.totalorder %s21, 1
      %p81 = scmp.ne.s32.totalorder %s76, %s78
      %p82 = scmp.eq.s32.totalorder %s21, 0
      %p83 = por %p81, %p82
      %p84 = scmp.ne.s32.totalorder %s76, %s78
      %p85 = scmp.eq.s32.totalorder %s26, 1
      %p86 = por %p84, %p85
      %p87 = scmp.ne.s32.totalorder %s78, %s79
      %p88 = scmp.eq.s32.totalorder %s26, 0
      %p89 = por %p87, %p88
      %p90 = scmp.ne.s32.totalorder %s78, %s79
      %p91 = scmp.eq.s32.totalorder %s27, 1
      %p92 = por %p90, %p91
      %p94 = scmp.ne.s32.totalorder %s79, %s93
      %p95 = scmp.eq.s32.totalorder %s27, 0
      %p96 = por %p94, %p95
      %s98 = sadd.s32 %s97, 1
      %p101 = scmp.eq.s32.totalorder %s21, 1
      %p102 = scmp.ne.s32.totalorder %s97, %s99
      %p103 = scmp.eq.s32.totalorder %s21, 0
      %p104 = por %p102, %p103
      %p105 = scmp.ne.s32.totalorder %s97, %s99
      %p106 = scmp.eq.s32.totalorder %s26, 1
      %p107 = por %p105, %p106
      %p108 = scmp.ne.s32.totalorder %s99, %s100
      %p109 = scmp.eq.s32.totalorder %s26, 0
      %p110 = por %p108, %p109
      %p111 = scmp.ne.s32.totalorder %s99, %s100
      %p112 = scmp.eq.s32.totalorder %s27, 1
      %p113 = por %p111, %p112
      %p115 = scmp.ne.s32.totalorder %s100, %s114
      %p116 = scmp.eq.s32.totalorder %s27, 0
      %p117 = por %p115, %p116
      %s119 = sadd.s32 %s118, 1
      %p122 = scmp.eq.s32.totalorder %s21, 1
      %p123 = scmp.ne.s32.totalorder %s118, %s120
      %p124 = scmp.eq.s32.totalorder %s21, 0
      %p125 = por %p123, %p124
      %p126 = scmp.ne.s32.totalorder %s118, %s120
      %p127 = scmp.eq.s32.totalorder %s26, 1
      %p128 = por %p126, %p127
      %p129 = scmp.ne.s32.totalorder %s120, %s121
      %p130 = scmp.eq.s32.totalorder %s26, 0
      %p131 = por %p129, %p130
      %p132 = scmp.ne.s32.totalorder %s120, %s121
      %p133 = scmp.eq.s32.totalorder %s27, 1
      %p134 = por %p132, %p133
      %p136 = scmp.ne.s32.totalorder %s121, %s135
      %p137 = scmp.eq.s32.totalorder %s27, 0
      %p138 = por %p136, %p137
      %s140 = sadd.s32 %s139, 1
      %p143 = scmp.eq.s32.totalorder %s21, 1
      %p144 = scmp.ne.s32.totalorder %s139, %s141
      %p145 = scmp.eq.s32.totalorder %s21, 0
      %p146 = por %p144, %p145
      %p147 = scmp.ne.s32.totalorder %s139, %s141
      %p148 = scmp.eq.s32.totalorder %s26, 1
      %p149 = por %p147, %p148
      %p150 = scmp.ne.s32.totalorder %s141, %s142
      %p151 = scmp.eq.s32.totalorder %s26, 0
      %p152 = por %p150, %p151
      %p153 = scmp.ne.s32.totalorder %s141, %s142
      %p154 = scmp.eq.s32.totalorder %s27, 1
      %p155 = por %p153, %p154
      %p157 = scmp.ne.s32.totalorder %s142, %s156
      %p158 = scmp.eq.s32.totalorder %s27, 0
      %p159 = por %p157, %p158
      %s161 = sadd.s32 %s160, 1
      %p164 = scmp.eq.s32.totalorder %s21, 1
      %p165 = scmp.ne.s32.totalorder %s160, %s162
      %p166 = scmp.eq.s32.totalorder %s21, 0
      %p167 = por %p165, %p166
      %p168 = scmp.ne.s32.totalorder %s160, %s162
      %p169 = scmp.eq.s32.totalorder %s26, 1
      %p170 = por %p168, %p169
      %p171 = scmp.ne.s32.totalorder %s162, %s163
      %p172 = scmp.eq.s32.totalorder %s26, 0
      %p173 = por %p171, %p172
      %p174 = scmp.ne.s32.totalorder %s162, %s163
      %p175 = scmp.eq.s32.totalorder %s27, 1
      %p176 = por %p174, %p175
      %p178 = scmp.ne.s32.totalorder %s163, %s177
      %p179 = scmp.eq.s32.totalorder %s27, 0
      %p180 = por %p178, %p179
      %s182 = sadd.s32 %s181, 1
      %p185 = scmp.eq.s32.totalorder %s21, 1
      %p186 = scmp.ne.s32.totalorder %s181, %s183
      %p187 = scmp.eq.s32.totalorder %s21, 0
      %p188 = por %p186, %p187
      %p189 = scmp.ne.s32.totalorder %s181, %s183
      %p190 = scmp.eq.s32.totalorder %s26, 1
      %p191 = por %p189, %p190
      %p192 = scmp.ne.s32.totalorder %s183, %s184
      %p193 = scmp.eq.s32.totalorder %s26, 0
      %p194 = por %p192, %p193
      %p195 = scmp.ne.s32.totalorder %s183, %s184
      %p196 = scmp.eq.s32.totalorder %s27, 1
      %p197 = por %p195, %p196
      %p199 = scmp.ne.s32.totalorder %s184, %s198
      %p200 = scmp.eq.s32.totalorder %s27, 0
      %p201 = por %p199, %p200
      %s203 = sadd.s32 %s202, 1
      %p206 = scmp.eq.s32.totalorder %s21, 1
      %p207 = scmp.ne.s32.totalorder %s202, %s204
      %p208 = scmp.eq.s32.totalorder %s21, 0
      %p209 = por %p207, %p208
      %p210 = scmp.ne.s32.totalorder %s202, %s204
      %p211 = scmp.eq.s32.totalorder %s26, 1
      %p212 = por %p210, %p211
      %p213 = scmp.ne.s32.totalorder %s204, %s205
      %p214 = scmp.eq.s32.totalorder %s26, 0
      %p215 = por %p213, %p214
      %p216 = scmp.ne.s32.totalorder %s204, %s205
      %p217 = scmp.eq.s32.totalorder %s27, 1
      %p218 = por %p216, %p217
      %p220 = scmp.ne.s32.totalorder %s205, %s219
      %p221 = scmp.eq.s32.totalorder %s27, 0
      %p222 = por %p220, %p221
      %s224 = sadd.s32 %s223, 1
      %p227 = scmp.eq.s32.totalorder %s21, 1
      %p228 = scmp.ne.s32.totalorder %s223, %s225
      %p229 = scmp.eq.s32.totalorder %s21, 0
      %p230 = por %p228, %p229
      %p231 = scmp.ne.s32.totalorder %s223, %s225
      %p232 = scmp.eq.s32.totalorder %s26, 1
      %p233 = por %p231, %p232
      %p234 = scmp.ne.s32.totalorder %s225, %s226
      %p235 = scmp.eq.s32.totalorder %s26, 0
      %p236 = por %p234, %p235
      %p237 = scmp.ne.s32.totalorder %s225, %s226
      %p238 = scmp.eq.s32.totalorder %s27, 1
      %p239 = por %p237, %p238
      %p241 = scmp.ne.s32.totalorder %s226, %s240
      %p242 = scmp.eq.s32.totalorder %s27, 0
      %p243 = por %p241, %p242
      %s245 = sadd.s32 %s244, 1
      %p248 = scmp.eq.s32.totalorder %s21, 1
      %p249 = scmp.ne.s32.totalorder %s244, %s246
      %p250 = scmp.eq.s32.totalorder %s21, 0
      %p251 = por %p249, %p250
      %p252 = scmp.ne.s32.totalorder %s244, %s246
      %p253 = scmp.eq.s32.totalorder %s26, 1
      %p254 = por %p252, %p253
      %p255 = scmp.ne.s32.totalorder %s246, %s247
      %p256 = scmp.eq.s32.totalorder %s26, 0
      %p257 = por %p255, %p256
      %p258 = scmp.ne.s32.totalorder %s246, %s247
      %p259 = scmp.eq.s32.totalorder %s27, 1
      %p260 = por %p258, %p259
      %p262 = scmp.ne.s32.totalorder %s247, %s261
      %p263 = scmp.eq.s32.totalorder %s27, 0
      %p264 = por %p262, %p263
      %s265 = ssub.s32 %s21, %s28
      %p266 = scmp.eq.s32.totalorder %s265, 0
      %s268 = sadd.s32 %s267, 1
      %s269 = scalar_select %p266, %s267, %s268
      %p272 = pneg %p266
      %p273 = scmp.eq.s32.totalorder %s21, 1
      %p274 = por %p272, %p273
      %p275 = scmp.ne.s32.totalorder %s267, %s270
      %p276 = scmp.eq.s32.totalorder %s21, 0
      %p277 = por %p275, %p276
      %p278 = scmp.ne.s32.totalorder %s267, %s270
      %p279 = scmp.eq.s32.totalorder %s26, 1
      %p280 = por %p278, %p279
      %p281 = scmp.ne.s32.totalorder %s270, %s271
      %p282 = scmp.eq.s32.totalorder %s26, 0
      %p283 = por %p281, %p282
      %p284 = scmp.ne.s32.totalorder %s270, %s271
      %p285 = scmp.eq.s32.totalorder %s27, 1
      %p286 = por %p284, %p285
      %p288 = scmp.ne.s32.totalorder %s271, %s287
      %p289 = scmp.eq.s32.totalorder %s27, 0
      %p290 = por %p288, %p289
      %p291 = scmp.le.s32.totalorder 1, %s21
      %p292 = scmp.lt.s32.totalorder %s21, 3
      %p293 = pnand %p291, %p292
      %p294 = pneg %p293
      // Predicated region
      $region9: #{tpu_custom_call.1} parent=5 // pred_check
        _
      $region10: #{tpu_custom_call.1} parent=5 // pred_check_branch
        %296 = sbr.rel (%p293) target = $region12
      $region11: #{tpu_custom_call.1} parent=5 // pred_region
        %s297 = ssub.s32 %s21, 1
        // Predicated region
        $region13: #{tpu_custom_call.1} parent=11 // pred_check
          %p298 = pneg %p68
        $region14: #{tpu_custom_call.1} parent=11 // pred_check_branch
          %300 = sbr.rel (%p298) target = $region16
        $region15: #{tpu_custom_call.1} parent=11 // pred_region
          _
        $region16: #{tpu_custom_call.1} parent=11 // pred_fallthru
          _
        // Predicated region
        $region17: #{tpu_custom_call.1} parent=11 // pred_check
          %p301 = pneg %p89
        $region18: #{tpu_custom_call.1} parent=11 // pred_check_branch
          %303 = sbr.rel (%p301) target = $region20
        $region19: #{tpu_custom_call.1} parent=11 // pred_region
          _
        $region20: #{tpu_custom_call.1} parent=11 // pred_fallthru
          _
        // Predicated region
        $region21: #{tpu_custom_call.1} parent=11 // pred_check
          %p304 = pneg %p110
        $region22: #{tpu_custom_call.1} parent=11 // pred_check_branch
          %306 = sbr.rel (%p304) target = $region24
        $region23: #{tpu_custom_call.1} parent=11 // pred_region
          %s308 = ssub.s32 16384, 16384
          %309 = vsyncadd [#allocation4], %s308
          %s310 = sshll.u32 [#allocation3], 4
          %s311 = int_to_ptr.vmem [resolvable:$true] %s310
          %316 = dma.hbm_to_vmem [thread:$0]  %s3, 16384, %s311, [#allocation4], 256, 256, 16
        $region24: #{tpu_custom_call.1} parent=11 // pred_fallthru
          _
        // Predicated region
        $region25: #{tpu_custom_call.1} parent=11 // pred_check
          %p317 = pneg %p131
        $region26: #{tpu_custom_call.1} parent=11 // pred_check_branch
          %319 = sbr.rel (%p317) target = $region28
        $region27: #{tpu_custom_call.1} parent=11 // pred_region
          _
        $region28: #{tpu_custom_call.1} parent=11 // pred_fallthru
          _
        // Predicated region
        $region29: #{tpu_custom_call.1} parent=11 // pred_check
          %p320 = pneg %p152
        $region30: #{tpu_custom_call.1} parent=11 // pred_check_branch
          %322 = sbr.rel (%p320) target = $region32
        $region31: #{tpu_custom_call.1} parent=11 // pred_region
          %s324 = ssub.s32 16384, 16384
          %325 = vsyncadd [#allocation6], %s324
          %s326 = sshll.u32 [#allocation5], 4
          %s327 = int_to_ptr.vmem [resolvable:$true] %s326
          %332 = dma.hbm_to_vmem [thread:$0]  %s5, 16384, %s327, [#allocation6], 256, 256, 16
        $region32: #{tpu_custom_call.1} parent=11 // pred_fallthru
          _
        // Predicated region
        $region33: #{tpu_custom_call.1} parent=11 // pred_check
          %p333 = pneg %p173
        $region34: #{tpu_custom_call.1} parent=11 // pred_check_branch
          %335 = sbr.rel (%p333) target = $region36
        $region35: #{tpu_custom_call.1} parent=11 // pred_region
          _
        $region36: #{tpu_custom_call.1} parent=11 // pred_fallthru
          _
        // Predicated region
        $region37: #{tpu_custom_call.1} parent=11 // pred_check
          %p336 = pneg %p194
        $region38: #{tpu_custom_call.1} parent=11 // pred_check_branch
          %338 = sbr.rel (%p336) target = $region40
        $region39: #{tpu_custom_call.1} parent=11 // pred_region
          %s340 = ssub.s32 16384, 16384
          %341 = vsyncadd [#allocation6], %s340
          %s342 = sshll.u32 [#allocation7], 4
          %s343 = int_to_ptr.vmem [resolvable:$true] %s342
          %348 = dma.hbm_to_vmem [thread:$0]  %s7, 16384, %s343, [#allocation6], 256, 256, 16
        $region40: #{tpu_custom_call.1} parent=11 // pred_fallthru
          _
        // Predicated region
        $region41: #{tpu_custom_call.1} parent=11 // pred_check
          %p349 = pneg %p215
        $region42: #{tpu_custom_call.1} parent=11 // pred_check_branch
          %351 = sbr.rel (%p349) target = $region44
        $region43: #{tpu_custom_call.1} parent=11 // pred_region
          _
        $region44: #{tpu_custom_call.1} parent=11 // pred_fallthru
          _
        // Predicated region
        $region45: #{tpu_custom_call.1} parent=11 // pred_check
          %p352 = pneg %p236
        $region46: #{tpu_custom_call.1} parent=11 // pred_check_branch
          %354 = sbr.rel (%p352) target = $region48
        $region47: #{tpu_custom_call.1} parent=11 // pred_region
          _
        $region48: #{tpu_custom_call.1} parent=11 // pred_fallthru
          _
        // Predicated region
        $region49: #{tpu_custom_call.1} parent=11 // pred_check
          %p355 = pneg %p257
        $region50: #{tpu_custom_call.1} parent=11 // pred_check_branch
          %357 = sbr.rel (%p355) target = $region52
        $region51: #{tpu_custom_call.1} parent=11 // pred_region
          _
        $region52: #{tpu_custom_call.1} parent=11 // pred_fallthru
          _
      $region12: #{tpu_custom_call.1} parent=5 // pred_fallthru
        _
      %p358 = scmp.lt.s32.totalorder %s21, 2
      // Predicated region
      $region53: #{tpu_custom_call.1} parent=5 // pred_check
        %p359 = pneg %p358
      $region54: #{tpu_custom_call.1} parent=5 // pred_check_branch
        %361 = sbr.rel (%p359) target = $region56
      $region55: #{tpu_custom_call.1} parent=5 // pred_region
        // Predicated region
        $region57: #{tpu_custom_call.1} parent=55 // pred_check
          %p362 = pneg %p41
        $region58: #{tpu_custom_call.1} parent=55 // pred_check_branch
          %364 = sbr.rel (%p362) target = $region60
        $region59: #{tpu_custom_call.1} parent=55 // pred_region
          %s365 = smul.u32 16, %s21
          %p366 = scmp.lt.s32.totalorder %s365, 31
          %s367 = scalar_select %p366, %s365, 31
          %s368 = smul.addr %s367, 8
          %s369 = scalar_lea.vmem %s0, %s368
          %s370 = smul.u32 16, %s21
        $region60: #{tpu_custom_call.1} parent=55 // pred_fallthru
          _
      $region56: #{tpu_custom_call.1} parent=5 // pred_fallthru
        _
      %p371 = scmp.le.s32.totalorder 1, %s21
      %p372 = scmp.lt.s32.totalorder %s21, 3
      %p373 = pnand %p371, %p372
      %p374 = pneg %p373
      // Predicated region
      $region61: #{tpu_custom_call.1} parent=5 // pred_check
        _
      $region62: #{tpu_custom_call.1} parent=5 // pred_check_branch
        %376 = sbr.rel (%p373) target = $region64
      $region63: #{tpu_custom_call.1} parent=5 // pred_region
        %s377 = ssub.s32 %s21, 1
        // Predicated region
        $region65: #{tpu_custom_call.1} parent=63 // pred_check
          %p378 = pneg %p110
        $region66: #{tpu_custom_call.1} parent=63 // pred_check_branch
          %380 = sbr.rel (%p378) target = $region68
        $region67: #{tpu_custom_call.1} parent=63 // pred_region
          %381 = dma.done [#allocation4], 16384
        $region68: #{tpu_custom_call.1} parent=63 // pred_fallthru
          _
        // Predicated region
        $region69: #{tpu_custom_call.1} parent=63 // pred_check
          %p382 = pneg %p152
        $region70: #{tpu_custom_call.1} parent=63 // pred_check_branch
          %384 = sbr.rel (%p382) target = $region72
        $region71: #{tpu_custom_call.1} parent=63 // pred_region
          %385 = dma.done [#allocation6], 16384
        $region72: #{tpu_custom_call.1} parent=63 // pred_fallthru
          _
        // Predicated region
        $region73: #{tpu_custom_call.1} parent=63 // pred_check
          %p386 = pneg %p194
        $region74: #{tpu_custom_call.1} parent=63 // pred_check_branch
          %388 = sbr.rel (%p386) target = $region76
        $region75: #{tpu_custom_call.1} parent=63 // pred_region
          %389 = dma.done [#allocation6], 16384
        $region76: #{tpu_custom_call.1} parent=63 // pred_fallthru
          _
        %s390 = smul.u32 16, %s26
        %p391 = scmp.lt.s32.totalorder %s390, 31
        %s392 = scalar_select %p391, %s390, 31
        %s393 = smul.addr %s392, 8
        %s394 = scalar_lea.vmem %s0, %s393
        %p395 = pneg %p47
        %p396 = pneg %p44
        %p397 = pneg %p68
        %p398 = pneg %p65
        %p399 = pneg %p89
        %p400 = pneg %p86
        %p401 = pneg %p110
        %p402 = pneg %p107
        %p403 = pneg %p131
        %p404 = pneg %p128
        %p405 = pneg %p152
        %p406 = pneg %p149
        %p407 = pneg %p173
        %p408 = pneg %p170
        %p409 = pneg %p194
        %p410 = pneg %p191
        %p411 = pneg %p215
        %p412 = pneg %p212
        %p413 = pneg %p236
        %p414 = pneg %p233
        %p415 = pneg %p257
        %p416 = pneg %p254
        %p417 = pneg %p283
        %p418 = pneg %p280
        %s419 = smul.u32 16, %s26
        %p420 = scmp.lt.s32.totalorder %s419, 31
        %s421 = scalar_select %p420, %s419, 31
        %s422 = smul.addr %s421, 8
        %s423 = scalar_lea.vmem %s11, %s422
        %s424 = smul.u32 16, %s26
        %p425 = scmp.lt.s32.totalorder %s424, 31
        %s426 = scalar_select %p425, %s424, 31
        %s427 = smul.addr %s426, 8
        %s428 = scalar_lea.vmem %s0, %s427
        %s429 = smul.u32 16, %s26
        %s430 = smul.u32 16, %s26
        %p431 = scmp.lt.s32.totalorder %s430, 31
        %s432 = scalar_select %p431, %s430, 31
        %s433 = smul.addr %s432, 8
        %s434 = scalar_lea.vmem %s11, %s433
        %s435 = smul.u32 16, %s26
        %v437 = vld [vmem:[%s428] sm:$0xff]
        %v438 = vld [vmem:[%s428 + $0x8] sm:$0xff]
        %v439 = vld [vmem:[%s428 + $0x10] sm:$0xff]
        %v440 = vld [vmem:[%s428 + $0x18] sm:$0xff]
        %v441 = vld [vmem:[%s428 + $0x20] sm:$0xff]
        %v442 = vld [vmem:[%s428 + $0x28] sm:$0xff]
        %v443 = vld [vmem:[%s428 + $0x30] sm:$0xff]
        %v444 = vld [vmem:[%s428 + $0x38] sm:$0xff]
        %v445 = vld [vmem:[%s428 + $0x40] sm:$0xff]
        %v446 = vld [vmem:[%s428 + $0x48] sm:$0xff]
        %v447 = vld [vmem:[%s428 + $0x50] sm:$0xff]
        %v448 = vld [vmem:[%s428 + $0x58] sm:$0xff]
        %v449 = vld [vmem:[%s428 + $0x60] sm:$0xff]
        %v450 = vld [vmem:[%s428 + $0x68] sm:$0xff]
        %v451 = vld [vmem:[%s428 + $0x70] sm:$0xff]
        %v452 = vld [vmem:[%s428 + $0x78] sm:$0xff]
        %v453 = vpack.c.bf16 %v438, %v437
        %v454 = vpack.c.bf16 %v440, %v439
        %v455 = vpack.c.bf16 %v442, %v441
        %v456 = vpack.c.bf16 %v444, %v443
        %v457 = vpack.c.bf16 %v446, %v445
        %v458 = vpack.c.bf16 %v448, %v447
        %v459 = vpack.c.bf16 %v450, %v449
        %v460 = vpack.c.bf16 %v452, %v451
        %v461 = vld [vmem:[%s1] sm:$0xff]
        %v462 = vld [vmem:[%s1 + $0x8] sm:$0xff]
        %v463 = vld [vmem:[%s1 + $0x10] sm:$0x11]
        %v464 = vld [vmem:[%s1 + $0x18] sm:$0x11]
        %v465 = vld [vmem:[%s2] sm:$0xf]
        %v467 = vlaneseq
        %v468 = vshrl.u32 %v467, 7
        %v469 = vsub.s32 0, %v468
        %v470 = vrot.slane %v465, %v469
        %v471 = vlaneseq
        %v472 = vshrl.u32 %v471, 7
        %v473 = vsub.s32 1, %v472
        %v474 = vrot.slane %v465, %v473
        %v475 = vlaneseq
        %v476 = vshrl.u32 %v475, 7
        %v477 = vsub.s32 2, %v476
        %v478 = vrot.slane %v465, %v477
        %v479 = vlaneseq
        %v480 = vshrl.u32 %v479, 7
        %v481 = vsub.s32 3, %v480
        %v482 = vrot.slane %v465, %v481
        %v491 = vunpack.c.l.b16 %v461
        %v492 = vunpack.c.h.b16 %v461
        %v493 = vunpack.c.l.b16 %v462
        %v494 = vunpack.c.h.b16 %v462
        %v495 = vunpack.c.l.b16 %v463
        %v496 = vunpack.c.h.b16 %v463
        %v497 = vunpack.c.l.b16 %v464
        %v498 = vunpack.c.h.b16 %v464
        %v499 = vpack.c.b16 %v495, %v491
        %v500 = vpack.c.b16 %v496, %v492
        %v501 = vpack.c.b16 %v497, %v493
        %v502 = vpack.c.b16 %v498, %v494
        %vm503 = vcmask 80896
        %v505 = vsel %vm503, %v453, 0
        %v508 = vsel %vm503, %v454, 0
        %v511 = vsel %vm503, %v455, 0
        %v514 = vsel %vm503, %v456, 0
        %v517 = vsel %vm503, %v457, 0
        %v520 = vsel %vm503, %v458, 0
        %v523 = vsel %vm503, %v459, 0
        %v526 = vsel %vm503, %v460, 0
        %vm528 = vcmask 1044480
        %v530 = vsel %vm528, %v499, 0
        %v533 = vsel %vm528, %v500, 0
        %v536 = vsel %vm528, %v501, 0
        %v539 = vsel %vm528, %v502, 0
        %541 = vmatprep.subr.bf16.mxu0 %v533
        %542 = vmatpush1.bf16.msra.mxu0 %v530
        %543 = vmatprep.subr.bf16.mxu0 0
        %544 = vmatpush1.bf16.msra.mxu0 0
        %545 = vmatprep.subr.bf16.mxu0 0
        %546 = vmatpush1.bf16.msra.mxu0 0
        %547 = vmatprep.subr.bf16.mxu0 0
        %548 = vmatpush1.bf16.msra.mxu0 0
        %549 = vmatprep.subr.bf16.mxu0 0
        %550 = vmatpush1.bf16.msra.mxu0 0
        %551 = vmatprep.subr.bf16.mxu0 0
        %552 = vmatpush1.bf16.msra.mxu0 0
        %553 = vmatprep.subr.bf16.mxu0 0
        %554 = vmatpush1.bf16.msra.mxu0 0
        %555 = vmatprep.subr.bf16.mxu0 0
        %556 = vmatpush1.bf16.msra.mxu0 0
        %557 = vmatprep.subr.bf16.mxu0 0
        %558 = vmatpush1.bf16.msra.mxu0 0
        %559 = vmatprep.subr.bf16.mxu0 0
        %560 = vmatpush1.bf16.msra.mxu0 0
        %561 = vmatprep.subr.bf16.mxu0 0
        %562 = vmatpush1.bf16.msra.mxu0 0
        %563 = vmatprep.subr.bf16.mxu0 0
        %564 = vmatpush1.bf16.msra.mxu0 0
        %565 = vmatprep.subr.bf16.mxu0 0
        %566 = vmatpush1.bf16.msra.mxu0 0
        %567 = vmatprep.subr.bf16.mxu0 0
        %568 = vmatpush1.bf16.msra.mxu0 0
        %569 = vmatprep.subr.bf16.mxu0 0
        %570 = vmatpush1.bf16.msra.mxu0 0
        %571 = vmatprep.subr.bf16.mxu0 0
        %572 = vmatpush1.bf16.msra.mxu0 0
        %573 = vmatprep.mubr.bf16.mxu0 0
        %574 = vmatmul.mubr.bf16.gmra.mrb[0].mxu0 %v505
        %v575 = vpop.f32.mrb[0].mxu0
        %v576 = vadd.f32 %v470, %v575
        %v577 = vpop.f32.mrb[0].mxu0
        %v578 = vadd.f32 %v474, %v577
        %v579 = vpop.f32.mrb[0].mxu0
        %v580 = vadd.f32 %v470, %v579
        %v581 = vpop.f32.mrb[0].mxu0
        %v582 = vadd.f32 %v474, %v581
        %583 = vmatprep.mubr.bf16.mxu0 0
        %584 = vmatmul.mubr.bf16.gmra.mrb[0].mxu0 %v508
        %v585 = vpop.f32.mrb[0].mxu0
        %v586 = vadd.f32 %v470, %v585
        %v587 = vpop.f32.mrb[0].mxu0
        %v588 = vadd.f32 %v474, %v587
        %v589 = vpop.f32.mrb[0].mxu0
        %v590 = vadd.f32 %v470, %v589
        %v591 = vpop.f32.mrb[0].mxu0
        %v592 = vadd.f32 %v474, %v591
        %593 = vmatprep.mubr.bf16.mxu0 0
        %594 = vmatmul.mubr.bf16.gmra.mrb[0].mxu0 %v511
        %v595 = vpop.f32.mrb[0].mxu0
        %v596 = vadd.f32 %v470, %v595
        %v597 = vpop.f32.mrb[0].mxu0
        %v598 = vadd.f32 %v474, %v597
        %v599 = vpop.f32.mrb[0].mxu0
        %v600 = vadd.f32 %v470, %v599
        %v601 = vpop.f32.mrb[0].mxu0
        %v602 = vadd.f32 %v474, %v601
        %603 = vmatprep.mubr.bf16.mxu0 0
        %604 = vmatmul.mubr.bf16.gmra.mrb[0].mxu0 %v514
        %v605 = vpop.f32.mrb[0].mxu0
        %v606 = vadd.f32 %v470, %v605
        %v607 = vpop.f32.mrb[0].mxu0
        %v608 = vadd.f32 %v474, %v607
        %v609 = vpop.f32.mrb[0].mxu0
        %v610 = vadd.f32 %v470, %v609
        %v611 = vpop.f32.mrb[0].mxu0
        %v612 = vadd.f32 %v474, %v611
        %613 = vmatprep.mubr.bf16.mxu0 0
        %614 = vmatmul.mubr.bf16.gmra.mrb[0].mxu0 %v517
        %v615 = vpop.f32.mrb[0].mxu0
        %v616 = vadd.f32 %v470, %v615
        %v617 = vpop.f32.mrb[0].mxu0
        %v618 = vadd.f32 %v474, %v617
        %v619 = vpop.f32.mrb[0].mxu0
        %v620 = vadd.f32 %v470, %v619
        %v621 = vpop.f32.mrb[0].mxu0
        %v622 = vadd.f32 %v474, %v621
        %623 = vmatprep.mubr.bf16.mxu0 0
        %624 = vmatmul.mubr.bf16.gmra.mrb[0].mxu0 %v520
        %v625 = vpop.f32.mrb[0].mxu0
        %v626 = vadd.f32 %v470, %v625
        %v627 = vpop.f32.mrb[0].mxu0
        %v628 = vadd.f32 %v474, %v627
        %v629 = vpop.f32.mrb[0].mxu0
        %v630 = vadd.f32 %v470, %v629
        %v631 = vpop.f32.mrb[0].mxu0
        %v632 = vadd.f32 %v474, %v631
        %633 = vmatprep.mubr.bf16.mxu0 0
        %634 = vmatmul.mubr.bf16.gmra.mrb[0].mxu0 %v523
        %v635 = vpop.f32.mrb[0].mxu0
        %v636 = vadd.f32 %v470, %v635
        %v637 = vpop.f32.mrb[0].mxu0
        %v638 = vadd.f32 %v474, %v637
        %v639 = vpop.f32.mrb[0].mxu0
        %v640 = vadd.f32 %v470, %v639
        %v641 = vpop.f32.mrb[0].mxu0
        %v642 = vadd.f32 %v474, %v641
        %643 = vmatprep.mubr.bf16.mxu0 0
        %644 = vmatmul.mubr.bf16.gmra.mrb[0].mxu0 %v526
        %v645 = vpop.f32.mrb[0].mxu0
        %v646 = vadd.f32 %v470, %v645
        %v647 = vpop.f32.mrb[0].mxu0
        %v648 = vadd.f32 %v474, %v647
        %v649 = vpop.f32.mrb[0].mxu0
        %v650 = vadd.f32 %v470, %v649
        %v651 = vpop.f32.mrb[0].mxu0
        %v652 = vadd.f32 %v474, %v651
        %653 = vdwg.mxu0
        %654 = vmatprep.subr.bf16.mxu0 %v539
        %655 = vmatpush1.bf16.msra.mxu0 %v536
        %656 = vmatprep.subr.bf16.mxu0 0
        %657 = vmatpush1.bf16.msra.mxu0 0
        %658 = vmatprep.subr.bf16.mxu0 0
        %659 = vmatpush1.bf16.msra.mxu0 0
        %660 = vmatprep.subr.bf16.mxu0 0
        %661 = vmatpush1.bf16.msra.mxu0 0
        %662 = vmatprep.subr.bf16.mxu0 0
        %663 = vmatpush1.bf16.msra.mxu0 0
        %664 = vmatprep.subr.bf16.mxu0 0
        %665 = vmatpush1.bf16.msra.mxu0 0
        %666 = vmatprep.subr.bf16.mxu0 0
        %667 = vmatpush1.bf16.msra.mxu0 0
        %668 = vmatprep.subr.bf16.mxu0 0
        %669 = vmatpush1.bf16.msra.mxu0 0
        %670 = vmatprep.subr.bf16.mxu0 0
        %671 = vmatpush1.bf16.msra.mxu0 0
        %672 = vmatprep.subr.bf16.mxu0 0
        %673 = vmatpush1.bf16.msra.mxu0 0
        %674 = vmatprep.subr.bf16.mxu0 0
        %675 = vmatpush1.bf16.msra.mxu0 0
        %676 = vmatprep.subr.bf16.mxu0 0
        %677 = vmatpush1.bf16.msra.mxu0 0
        %678 = vmatprep.subr.bf16.mxu0 0
        %679 = vmatpush1.bf16.msra.mxu0 0
        %680 = vmatprep.subr.bf16.mxu0 0
        %681 = vmatpush1.bf16.msra.mxu0 0
        %682 = vmatprep.subr.bf16.mxu0 0
        %683 = vmatpush1.bf16.msra.mxu0 0
        %684 = vmatprep.subr.bf16.mxu0 0
        %685 = vmatpush1.bf16.msra.mxu0 0
        %686 = vmatprep.mubr.bf16.mxu0 0
        %687 = vmatmul.mubr.bf16.gmra.mrb[0].mxu0 %v505
        %v688 = vpop.f32.mrb[0].mxu0
        %v689 = vadd.f32 %v478, %v688
        %v690 = vpop.f32.mrb[0].mxu0
        %v691 = vadd.f32 %v482, %v690
        %v692 = vpop.f32.mrb[0].mxu0
        %v693 = vadd.f32 %v478, %v692
        %v694 = vpop.f32.mrb[0].mxu0
        %v695 = vadd.f32 %v482, %v694
        %696 = vmatprep.mubr.bf16.mxu0 0
        %697 = vmatmul.mubr.bf16.gmra.mrb[0].mxu0 %v508
        %v698 = vpop.f32.mrb[0].mxu0
        %v699 = vadd.f32 %v478, %v698
        %v700 = vpop.f32.mrb[0].mxu0
        %v701 = vadd.f32 %v482, %v700
        %v702 = vpop.f32.mrb[0].mxu0
        %v703 = vadd.f32 %v478, %v702
        %v704 = vpop.f32.mrb[0].mxu0
        %v705 = vadd.f32 %v482, %v704
        %706 = vmatprep.mubr.bf16.mxu0 0
        %707 = vmatmul.mubr.bf16.gmra.mrb[0].mxu0 %v511
        %v708 = vpop.f32.mrb[0].mxu0
        %v709 = vadd.f32 %v478, %v708
        %v710 = vpop.f32.mrb[0].mxu0
        %v711 = vadd.f32 %v482, %v710
        %v712 = vpop.f32.mrb[0].mxu0
        %v713 = vadd.f32 %v478, %v712
        %v714 = vpop.f32.mrb[0].mxu0
        %v715 = vadd.f32 %v482, %v714
        %716 = vmatprep.mubr.bf16.mxu0 0
        %717 = vmatmul.mubr.bf16.gmra.mrb[0].mxu0 %v514
        %v718 = vpop.f32.mrb[0].mxu0
        %v719 = vadd.f32 %v478, %v718
        %v720 = vpop.f32.mrb[0].mxu0
        %v721 = vadd.f32 %v482, %v720
        %v722 = vpop.f32.mrb[0].mxu0
        %v723 = vadd.f32 %v478, %v722
        %v724 = vpop.f32.mrb[0].mxu0
        %v725 = vadd.f32 %v482, %v724
        %726 = vmatprep.mubr.bf16.mxu0 0
        %727 = vmatmul.mubr.bf16.gmra.mrb[0].mxu0 %v517
        %v728 = vpop.f32.mrb[0].mxu0
        %v729 = vadd.f32 %v478, %v728
        %v730 = vpop.f32.mrb[0].mxu0
        %v731 = vadd.f32 %v482, %v730
        %v732 = vpop.f32.mrb[0].mxu0
        %v733 = vadd.f32 %v478, %v732
        %v734 = vpop.f32.mrb[0].mxu0
        %v735 = vadd.f32 %v482, %v734
        %736 = vmatprep.mubr.bf16.mxu0 0
        %737 = vmatmul.mubr.bf16.gmra.mrb[0].mxu0 %v520
        %v738 = vpop.f32.mrb[0].mxu0
        %v739 = vadd.f32 %v478, %v738
        %v740 = vpop.f32.mrb[0].mxu0
        %v741 = vadd.f32 %v482, %v740
        %v742 = vpop.f32.mrb[0].mxu0
        %v743 = vadd.f32 %v478, %v742
        %v744 = vpop.f32.mrb[0].mxu0
        %v745 = vadd.f32 %v482, %v744
        %746 = vmatprep.mubr.bf16.mxu0 0
        %747 = vmatmul.mubr.bf16.gmra.mrb[0].mxu0 %v523
        %v748 = vpop.f32.mrb[0].mxu0
        %v749 = vadd.f32 %v478, %v748
        %v750 = vpop.f32.mrb[0].mxu0
        %v751 = vadd.f32 %v482, %v750
        %v752 = vpop.f32.mrb[0].mxu0
        %v753 = vadd.f32 %v478, %v752
        %v754 = vpop.f32.mrb[0].mxu0
        %v755 = vadd.f32 %v482, %v754
        %756 = vmatprep.mubr.bf16.mxu0 0
        %757 = vmatmul.mubr.bf16.gmra.mrb[0].mxu0 %v526
        %v758 = vpop.f32.mrb[0].mxu0
        %v759 = vadd.f32 %v478, %v758
        %v760 = vpop.f32.mrb[0].mxu0
        %v761 = vadd.f32 %v482, %v760
        %v762 = vpop.f32.mrb[0].mxu0
        %v763 = vadd.f32 %v478, %v762
        %v764 = vpop.f32.mrb[0].mxu0
        %v765 = vadd.f32 %v482, %v764
        %766 = vdwg.mxu0
        %v767 = vmax.f32 %v576, 0.0
        %v768 = vmax.f32 %v578, 0.0
        %v769 = vmax.f32 %v689, 0.0
        %v770 = vmax.f32 %v691, 0.0
        %v771 = vmax.f32 %v580, 0.0
        %v772 = vmax.f32 %v582, 0.0
        %v773 = vmax.f32 %v693, 0.0
        %v774 = vmax.f32 %v695, 0.0
        %v775 = vmax.f32 %v586, 0.0
        %v776 = vmax.f32 %v588, 0.0
        %v777 = vmax.f32 %v699, 0.0
        %v778 = vmax.f32 %v701, 0.0
        %v779 = vmax.f32 %v590, 0.0
        %v780 = vmax.f32 %v592, 0.0
        %v781 = vmax.f32 %v703, 0.0
        %v782 = vmax.f32 %v705, 0.0
        %v783 = vmax.f32 %v596, 0.0
        %v784 = vmax.f32 %v598, 0.0
        %v785 = vmax.f32 %v709, 0.0
        %v786 = vmax.f32 %v711, 0.0
        %v787 = vmax.f32 %v600, 0.0
        %v788 = vmax.f32 %v602, 0.0
        %v789 = vmax.f32 %v713, 0.0
        %v790 = vmax.f32 %v715, 0.0
        %v791 = vmax.f32 %v606, 0.0
        %v792 = vmax.f32 %v608, 0.0
        %v793 = vmax.f32 %v719, 0.0
        %v794 = vmax.f32 %v721, 0.0
        %v795 = vmax.f32 %v610, 0.0
        %v796 = vmax.f32 %v612, 0.0
        %v797 = vmax.f32 %v723, 0.0
        %v798 = vmax.f32 %v725, 0.0
        %v799 = vmax.f32 %v616, 0.0
        %v800 = vmax.f32 %v618, 0.0
        %v801 = vmax.f32 %v729, 0.0
        %v802 = vmax.f32 %v731, 0.0
        %v803 = vmax.f32 %v620, 0.0
        %v804 = vmax.f32 %v622, 0.0
        %v805 = vmax.f32 %v733, 0.0
        %v806 = vmax.f32 %v735, 0.0
        %v807 = vmax.f32 %v626, 0.0
        %v808 = vmax.f32 %v628, 0.0
        %v809 = vmax.f32 %v739, 0.0
        %v810 = vmax.f32 %v741, 0.0
        %v811 = vmax.f32 %v630, 0.0
        %v812 = vmax.f32 %v632, 0.0
        %v813 = vmax.f32 %v743, 0.0
        %v814 = vmax.f32 %v745, 0.0
        %v815 = vmax.f32 %v636, 0.0
        %v816 = vmax.f32 %v638, 0.0
        %v817 = vmax.f32 %v749, 0.0
        %v818 = vmax.f32 %v751, 0.0
        %v819 = vmax.f32 %v640, 0.0
        %v820 = vmax.f32 %v642, 0.0
        %v821 = vmax.f32 %v753, 0.0
        %v822 = vmax.f32 %v755, 0.0
        %v823 = vmax.f32 %v646, 0.0
        %v824 = vmax.f32 %v648, 0.0
        %v825 = vmax.f32 %v759, 0.0
        %v826 = vmax.f32 %v761, 0.0
        %v827 = vmax.f32 %v650, 0.0
        %v828 = vmax.f32 %v652, 0.0
        %v829 = vmax.f32 %v763, 0.0
        %v830 = vmax.f32 %v765, 0.0
        %v831 = vpack.c.bf16 %v771, %v767
        %v832 = vpack.c.bf16 %v772, %v768
        %v833 = vpack.c.bf16 %v773, %v769
        %v834 = vpack.c.bf16 %v774, %v770
        %v835 = vpack.c.bf16 %v779, %v775
        %v836 = vpack.c.bf16 %v780, %v776
        %v837 = vpack.c.bf16 %v781, %v777
        %v838 = vpack.c.bf16 %v782, %v778
        %v839 = vpack.c.bf16 %v787, %v783
        %v840 = vpack.c.bf16 %v788, %v784
        %v841 = vpack.c.bf16 %v789, %v785
        %v842 = vpack.c.bf16 %v790, %v786
        %v843 = vpack.c.bf16 %v795, %v791
        %v844 = vpack.c.bf16 %v796, %v792
        %v845 = vpack.c.bf16 %v797, %v793
        %v846 = vpack.c.bf16 %v798, %v794
        %v847 = vpack.c.bf16 %v803, %v799
        %v848 = vpack.c.bf16 %v804, %v800
        %v849 = vpack.c.bf16 %v805, %v801
        %v850 = vpack.c.bf16 %v806, %v802
        %v851 = vpack.c.bf16 %v811, %v807
        %v852 = vpack.c.bf16 %v812, %v808
        %v853 = vpack.c.bf16 %v813, %v809
        %v854 = vpack.c.bf16 %v814, %v810
        %v855 = vpack.c.bf16 %v819, %v815
        %v856 = vpack.c.bf16 %v820, %v816
        %v857 = vpack.c.bf16 %v821, %v817
        %v858 = vpack.c.bf16 %v822, %v818
        %v859 = vpack.c.bf16 %v827, %v823
        %v860 = vpack.c.bf16 %v828, %v824
        %v861 = vpack.c.bf16 %v829, %v825
        %v862 = vpack.c.bf16 %v830, %v826
        %v863 = vld [vmem:[#allocation3] sm:$0xff]
        %v864 = vld [vmem:[#allocation3 + $0x8] sm:$0xff]
        %v865 = vld [vmem:[#allocation3 + $0x10] sm:$0xff]
        %v866 = vld [vmem:[#allocation3 + $0x18] sm:$0xff]
        %v867 = vld [vmem:[#allocation3 + $0x20] sm:$0xff]
        %v868 = vld [vmem:[#allocation3 + $0x28] sm:$0xff]
        %v869 = vld [vmem:[#allocation3 + $0x30] sm:$0xff]
        %v870 = vld [vmem:[#allocation3 + $0x38] sm:$0xff]
        %v871 = vld [vmem:[#allocation3 + $0x40] sm:$0xff]
        %v872 = vld [vmem:[#allocation3 + $0x48] sm:$0xff]
        %v873 = vld [vmem:[#allocation3 + $0x50] sm:$0xff]
        %v874 = vld [vmem:[#allocation3 + $0x58] sm:$0xff]
        %v875 = vld [vmem:[#allocation3 + $0x60] sm:$0xff]
        %v876 = vld [vmem:[#allocation3 + $0x68] sm:$0xff]
        %v877 = vld [vmem:[#allocation3 + $0x70] sm:$0xff]
        %v878 = vld [vmem:[#allocation3 + $0x78] sm:$0xff]
        %v879 = vld [vmem:[#allocation3 + $0x80] sm:$0xff]
        %v880 = vld [vmem:[#allocation3 + $0x88] sm:$0xff]
        %v881 = vld [vmem:[#allocation3 + $0x90] sm:$0xff]
        %v882 = vld [vmem:[#allocation3 + $0x98] sm:$0xff]
        %v883 = vld [vmem:[#allocation3 + $0xa0] sm:$0xff]
        %v884 = vld [vmem:[#allocation3 + $0xa8] sm:$0xff]
        %v885 = vld [vmem:[#allocation3 + $0xb0] sm:$0xff]
        %v886 = vld [vmem:[#allocation3 + $0xb8] sm:$0xff]
        %v887 = vld [vmem:[#allocation3 + $0xc0] sm:$0xff]
        %v888 = vld [vmem:[#allocation3 + $0xc8] sm:$0xff]
        %v889 = vld [vmem:[#allocation3 + $0xd0] sm:$0xff]
        %v890 = vld [vmem:[#allocation3 + $0xd8] sm:$0xff]
        %v891 = vld [vmem:[#allocation3 + $0xe0] sm:$0xff]
        %v892 = vld [vmem:[#allocation3 + $0xe8] sm:$0xff]
        %v893 = vld [vmem:[#allocation3 + $0xf0] sm:$0xff]
        %v894 = vld [vmem:[#allocation3 + $0xf8] sm:$0xff]
        %v895 = vld [vmem:[#allocation3 + $0x100] sm:$0xff]
        %v896 = vld [vmem:[#allocation3 + $0x108] sm:$0xff]
        %v897 = vld [vmem:[#allocation3 + $0x110] sm:$0xff]
        %v898 = vld [vmem:[#allocation3 + $0x118] sm:$0xff]
        %v899 = vld [vmem:[#allocation3 + $0x120] sm:$0xff]
        %v900 = vld [vmem:[#allocation3 + $0x128] sm:$0xff]
        %v901 = vld [vmem:[#allocation3 + $0x130] sm:$0xff]
        %v902 = vld [vmem:[#allocation3 + $0x138] sm:$0xff]
        %v903 = vld [vmem:[#allocation3 + $0x140] sm:$0xff]
        %v904 = vld [vmem:[#allocation3 + $0x148] sm:$0xff]
        %v905 = vld [vmem:[#allocation3 + $0x150] sm:$0xff]
        %v906 = vld [vmem:[#allocation3 + $0x158] sm:$0xff]
        %v907 = vld [vmem:[#allocation3 + $0x160] sm:$0xff]
        %v908 = vld [vmem:[#allocation3 + $0x168] sm:$0xff]
        %v909 = vld [vmem:[#allocation3 + $0x170] sm:$0xff]
        %v910 = vld [vmem:[#allocation3 + $0x178] sm:$0xff]
        %v911 = vld [vmem:[#allocation3 + $0x180] sm:$0xff]
        %v912 = vld [vmem:[#allocation3 + $0x188] sm:$0xff]
        %v913 = vld [vmem:[#allocation3 + $0x190] sm:$0xff]
        %v914 = vld [vmem:[#allocation3 + $0x198] sm:$0xff]
        %v915 = vld [vmem:[#allocation3 + $0x1a0] sm:$0xff]
        %v916 = vld [vmem:[#allocation3 + $0x1a8] sm:$0xff]
        %v917 = vld [vmem:[#allocation3 + $0x1b0] sm:$0xff]
        %v918 = vld [vmem:[#allocation3 + $0x1b8] sm:$0xff]
        %v919 = vld [vmem:[#allocation3 + $0x1c0] sm:$0xff]
        %v920 = vld [vmem:[#allocation3 + $0x1c8] sm:$0xff]
        %v921 = vld [vmem:[#allocation3 + $0x1d0] sm:$0xff]
        %v922 = vld [vmem:[#allocation3 + $0x1d8] sm:$0xff]
        %v923 = vld [vmem:[#allocation3 + $0x1e0] sm:$0xff]
        %v924 = vld [vmem:[#allocation3 + $0x1e8] sm:$0xff]
        %v925 = vld [vmem:[#allocation3 + $0x1f0] sm:$0xff]
        %v926 = vld [vmem:[#allocation3 + $0x1f8] sm:$0xff]
        %v927 = vld [vmem:[#allocation3 + $0x200] sm:$0xff]
        %v928 = vld [vmem:[#allocation3 + $0x208] sm:$0xff]
        %v929 = vld [vmem:[#allocation3 + $0x210] sm:$0xff]
        %v930 = vld [vmem:[#allocation3 + $0x218] sm:$0xff]
        %v931 = vld [vmem:[#allocation3 + $0x220] sm:$0xff]
        %v932 = vld [vmem:[#allocation3 + $0x228] sm:$0xff]
        %v933 = vld [vmem:[#allocation3 + $0x230] sm:$0xff]
        %v934 = vld [vmem:[#allocation3 + $0x238] sm:$0xff]
        %v935 = vld [vmem:[#allocation3 + $0x240] sm:$0xff]
        %v936 = vld [vmem:[#allocation3 + $0x248] sm:$0xff]
        %v937 = vld [vmem:[#allocation3 + $0x250] sm:$0xff]
        %v938 = vld [vmem:[#allocation3 + $0x258] sm:$0xff]
        %v939 = vld [vmem:[#allocation3 + $0x260] sm:$0xff]
        %v940 = vld [vmem:[#allocation3 + $0x268] sm:$0xff]
        %v941 = vld [vmem:[#allocation3 + $0x270] sm:$0xff]
        %v942 = vld [vmem:[#allocation3 + $0x278] sm:$0xff]
        %v943 = vld [vmem:[#allocation3 + $0x280] sm:$0xff]
        %v944 = vld [vmem:[#allocation3 + $0x288] sm:$0xff]
        %v945 = vld [vmem:[#allocation3 + $0x290] sm:$0xff]
        %v946 = vld [vmem:[#allocation3 + $0x298] sm:$0xff]
        %v947 = vld [vmem:[#allocation3 + $0x2a0] sm:$0xff]
        %v948 = vld [vmem:[#allocation3 + $0x2a8] sm:$0xff]
        %v949 = vld [vmem:[#allocation3 + $0x2b0] sm:$0xff]
        %v950 = vld [vmem:[#allocation3 + $0x2b8] sm:$0xff]
        %v951 = vld [vmem:[#allocation3 + $0x2c0] sm:$0xff]
        %v952 = vld [vmem:[#allocation3 + $0x2c8] sm:$0xff]
        %v953 = vld [vmem:[#allocation3 + $0x2d0] sm:$0xff]
        %v954 = vld [vmem:[#allocation3 + $0x2d8] sm:$0xff]
        %v955 = vld [vmem:[#allocation3 + $0x2e0] sm:$0xff]
        %v956 = vld [vmem:[#allocation3 + $0x2e8] sm:$0xff]
        %v957 = vld [vmem:[#allocation3 + $0x2f0] sm:$0xff]
        %v958 = vld [vmem:[#allocation3 + $0x2f8] sm:$0xff]
        %v959 = vld [vmem:[#allocation3 + $0x300] sm:$0xff]
        %v960 = vld [vmem:[#allocation3 + $0x308] sm:$0xff]
        %v961 = vld [vmem:[#allocation3 + $0x310] sm:$0xff]
        %v962 = vld [vmem:[#allocation3 + $0x318] sm:$0xff]
        %v963 = vld [vmem:[#allocation3 + $0x320] sm:$0xff]
        %v964 = vld [vmem:[#allocation3 + $0x328] sm:$0xff]
        %v965 = vld [vmem:[#allocation3 + $0x330] sm:$0xff]
        %v966 = vld [vmem:[#allocation3 + $0x338] sm:$0xff]
        %v967 = vld [vmem:[#allocation3 + $0x340] sm:$0xff]
        %v968 = vld [vmem:[#allocation3 + $0x348] sm:$0xff]
        %v969 = vld [vmem:[#allocation3 + $0x350] sm:$0xff]
        %v970 = vld [vmem:[#allocation3 + $0x358] sm:$0xff]
        %v971 = vld [vmem:[#allocation3 + $0x360] sm:$0xff]
        %v972 = vld [vmem:[#allocation3 + $0x368] sm:$0xff]
        %v973 = vld [vmem:[#allocation3 + $0x370] sm:$0xff]
        %v974 = vld [vmem:[#allocation3 + $0x378] sm:$0xff]
        %v975 = vld [vmem:[#allocation3 + $0x380] sm:$0xff]
        %v976 = vld [vmem:[#allocation3 + $0x388] sm:$0xff]
        %v977 = vld [vmem:[#allocation3 + $0x390] sm:$0xff]
        %v978 = vld [vmem:[#allocation3 + $0x398] sm:$0xff]
        %v979 = vld [vmem:[#allocation3 + $0x3a0] sm:$0xff]
        %v980 = vld [vmem:[#allocation3 + $0x3a8] sm:$0xff]
        %v981 = vld [vmem:[#allocation3 + $0x3b0] sm:$0xff]
        %v982 = vld [vmem:[#allocation3 + $0x3b8] sm:$0xff]
        %v983 = vld [vmem:[#allocation3 + $0x3c0] sm:$0xff]
        %v984 = vld [vmem:[#allocation3 + $0x3c8] sm:$0xff]
        %v985 = vld [vmem:[#allocation3 + $0x3d0] sm:$0xff]
        %v986 = vld [vmem:[#allocation3 + $0x3d8] sm:$0xff]
        %v987 = vld [vmem:[#allocation3 + $0x3e0] sm:$0xff]
        %v988 = vld [vmem:[#allocation3 + $0x3e8] sm:$0xff]
        %v989 = vld [vmem:[#allocation3 + $0x3f0] sm:$0xff]
        %v990 = vld [vmem:[#allocation3 + $0x3f8] sm:$0xff]
        %v991 = vld [vmem:[%s4] sm:$0xf]
        %v993 = vlaneseq
        %v994 = vshrl.u32 %v993, 7
        %v995 = vsub.s32 0, %v994
        %v996 = vrot.slane %v991, %v995
        %v997 = vlaneseq
        %v998 = vshrl.u32 %v997, 7
        %v999 = vsub.s32 1, %v998
        %v1000 = vrot.slane %v991, %v999
        %v1001 = vlaneseq
        %v1002 = vshrl.u32 %v1001, 7
        %v1003 = vsub.s32 2, %v1002
        %v1004 = vrot.slane %v991, %v1003
        %v1005 = vlaneseq
        %v1006 = vshrl.u32 %v1005, 7
        %v1007 = vsub.s32 3, %v1006
        %v1008 = vrot.slane %v991, %v1007
        %v1141 = vunpack.c.l.b16 %v863
        %v1142 = vunpack.c.h.b16 %v863
        %v1143 = vunpack.c.l.b16 %v864
        %v1144 = vunpack.c.h.b16 %v864
        %v1145 = vunpack.c.l.b16 %v865
        %v1146 = vunpack.c.h.b16 %v865
        %v1147 = vunpack.c.l.b16 %v866
        %v1148 = vunpack.c.h.b16 %v866
        %v1149 = vunpack.c.l.b16 %v867
        %v1150 = vunpack.c.h.b16 %v867
        %v1151 = vunpack.c.l.b16 %v868
        %v1152 = vunpack.c.h.b16 %v868
        %v1153 = vunpack.c.l.b16 %v869
        %v1154 = vunpack.c.h.b16 %v869
        %v1155 = vunpack.c.l.b16 %v870
        %v1156 = vunpack.c.h.b16 %v870
        %v1157 = vunpack.c.l.b16 %v871
        %v1158 = vunpack.c.h.b16 %v871
        %v1159 = vunpack.c.l.b16 %v872
        %v1160 = vunpack.c.h.b16 %v872
        %v1161 = vunpack.c.l.b16 %v873
        %v1162 = vunpack.c.h.b16 %v873
        %v1163 = vunpack.c.l.b16 %v874
        %v1164 = vunpack.c.h.b16 %v874
        %v1165 = vunpack.c.l.b16 %v875
        %v1166 = vunpack.c.h.b16 %v875
        %v1167 = vunpack.c.l.b16 %v876
        %v1168 = vunpack.c.h.b16 %v876
        %v1169 = vunpack.c.l.b16 %v877
        %v1170 = vunpack.c.h.b16 %v877
        %v1171 = vunpack.c.l.b16 %v878
        %v1172 = vunpack.c.h.b16 %v878
        %v1173 = vunpack.c.l.b16 %v879
        %v1174 = vunpack.c.h.b16 %v879
        %v1175 = vunpack.c.l.b16 %v880
        %v1176 = vunpack.c.h.b16 %v880
        %v1177 = vunpack.c.l.b16 %v881
        %v1178 = vunpack.c.h.b16 %v881
        %v1179 = vunpack.c.l.b16 %v882
        %v1180 = vunpack.c.h.b16 %v882
        %v1181 = vunpack.c.l.b16 %v883
        %v1182 = vunpack.c.h.b16 %v883
        %v1183 = vunpack.c.l.b16 %v884
        %v1184 = vunpack.c.h.b16 %v884
        %v1185 = vunpack.c.l.b16 %v885
        %v1186 = vunpack.c.h.b16 %v885
        %v1187 = vunpack.c.l.b16 %v886
        %v1188 = vunpack.c.h.b16 %v886
        %v1189 = vunpack.c.l.b16 %v887
        %v1190 = vunpack.c.h.b16 %v887
        %v1191 = vunpack.c.l.b16 %v888
        %v1192 = vunpack.c.h.b16 %v888
        %v1193 = vunpack.c.l.b16 %v889
        %v1194 = vunpack.c.h.b16 %v889
        %v1195 = vunpack.c.l.b16 %v890
        %v1196 = vunpack.c.h.b16 %v890
        %v1197 = vunpack.c.l.b16 %v891
        %v1198 = vunpack.c.h.b16 %v891
        %v1199 = vunpack.c.l.b16 %v892
        %v1200 = vunpack.c.h.b16 %v892
        %v1201 = vunpack.c.l.b16 %v893
        %v1202 = vunpack.c.h.b16 %v893
        %v1203 = vunpack.c.l.b16 %v894
        %v1204 = vunpack.c.h.b16 %v894
        %v1205 = vunpack.c.l.b16 %v895
        %v1206 = vunpack.c.h.b16 %v895
        %v1207 = vunpack.c.l.b16 %v896
        %v1208 = vunpack.c.h.b16 %v896
        %v1209 = vunpack.c.l.b16 %v897
        %v1210 = vunpack.c.h.b16 %v897
        %v1211 = vunpack.c.l.b16 %v898
        %v1212 = vunpack.c.h.b16 %v898
        %v1213 = vunpack.c.l.b16 %v899
        %v1214 = vunpack.c.h.b16 %v899
        %v1215 = vunpack.c.l.b16 %v900
        %v1216 = vunpack.c.h.b16 %v900
        %v1217 = vunpack.c.l.b16 %v901
        %v1218 = vunpack.c.h.b16 %v901
        %v1219 = vunpack.c.l.b16 %v902
        %v1220 = vunpack.c.h.b16 %v902
        %v1221 = vunpack.c.l.b16 %v903
        %v1222 = vunpack.c.h.b16 %v903
        %v1223 = vunpack.c.l.b16 %v904
        %v1224 = vunpack.c.h.b16 %v904
        %v1225 = vunpack.c.l.b16 %v905
        %v1226 = vunpack.c.h.b16 %v905
        %v1227 = vunpack.c.l.b16 %v906
        %v1228 = vunpack.c.h.b16 %v906
        %v1229 = vunpack.c.l.b16 %v907
        %v1230 = vunpack.c.h.b16 %v907
        %v1231 = vunpack.c.l.b16 %v908
        %v1232 = vunpack.c.h.b16 %v908
        %v1233 = vunpack.c.l.b16 %v909
        %v1234 = vunpack.c.h.b16 %v909
        %v1235 = vunpack.c.l.b16 %v910
        %v1236 = vunpack.c.h.b16 %v910
        %v1237 = vunpack.c.l.b16 %v911
        %v1238 = vunpack.c.h.b16 %v911
        %v1239 = vunpack.c.l.b16 %v912
        %v1240 = vunpack.c.h.b16 %v912
        %v1241 = vunpack.c.l.b16 %v913
        %v1242 = vunpack.c.h.b16 %v913
        %v1243 = vunpack.c.l.b16 %v914
        %v1244 = vunpack.c.h.b16 %v914
        %v1245 = vunpack.c.l.b16 %v915
        %v1246 = vunpack.c.h.b16 %v915
        %v1247 = vunpack.c.l.b16 %v916
        %v1248 = vunpack.c.h.b16 %v916
        %v1249 = vunpack.c.l.b16 %v917
        %v1250 = vunpack.c.h.b16 %v917
        %v1251 = vunpack.c.l.b16 %v918
        %v1252 = vunpack.c.h.b16 %v918
        %v1253 = vunpack.c.l.b16 %v919
        %v1254 = vunpack.c.h.b16 %v919
        %v1255 = vunpack.c.l.b16 %v920
        %v1256 = vunpack.c.h.b16 %v920
        %v1257 = vunpack.c.l.b16 %v921
        %v1258 = vunpack.c.h.b16 %v921
        %v1259 = vunpack.c.l.b16 %v922
        %v1260 = vunpack.c.h.b16 %v922
        %v1261 = vunpack.c.l.b16 %v923
        %v1262 = vunpack.c.h.b16 %v923
        %v1263 = vunpack.c.l.b16 %v924
        %v1264 = vunpack.c.h.b16 %v924
        %v1265 = vunpack.c.l.b16 %v925
        %v1266 = vunpack.c.h.b16 %v925
        %v1267 = vunpack.c.l.b16 %v926
        %v1268 = vunpack.c.h.b16 %v926
        %v1269 = vunpack.c.l.b16 %v927
        %v1270 = vunpack.c.h.b16 %v927
        %v1271 = vunpack.c.l.b16 %v928
        %v1272 = vunpack.c.h.b16 %v928
        %v1273 = vunpack.c.l.b16 %v929
        %v1274 = vunpack.c.h.b16 %v929
        %v1275 = vunpack.c.l.b16 %v930
        %v1276 = vunpack.c.h.b16 %v930
        %v1277 = vunpack.c.l.b16 %v931
        %v1278 = vunpack.c.h.b16 %v931
        %v1279 = vunpack.c.l.b16 %v932
        %v1280 = vunpack.c.h.b16 %v932
        %v1281 = vunpack.c.l.b16 %v933
        %v1282 = vunpack.c.h.b16 %v933
        %v1283 = vunpack.c.l.b16 %v934
        %v1284 = vunpack.c.h.b16 %v934
        %v1285 = vunpack.c.l.b16 %v935
        %v1286 = vunpack.c.h.b16 %v935
        %v1287 = vunpack.c.l.b16 %v936
        %v1288 = vunpack.c.h.b16 %v936
        %v1289 = vunpack.c.l.b16 %v937
        %v1290 = vunpack.c.h.b16 %v937
        %v1291 = vunpack.c.l.b16 %v938
        %v1292 = vunpack.c.h.b16 %v938
        %v1293 = vunpack.c.l.b16 %v939
        %v1294 = vunpack.c.h.b16 %v939
        %v1295 = vunpack.c.l.b16 %v940
        %v1296 = vunpack.c.h.b16 %v940
        %v1297 = vunpack.c.l.b16 %v941
        %v1298 = vunpack.c.h.b16 %v941
        %v1299 = vunpack.c.l.b16 %v942
        %v1300 = vunpack.c.h.b16 %v942
        %v1301 = vunpack.c.l.b16 %v943
        %v1302 = vunpack.c.h.b16 %v943
        %v1303 = vunpack.c.l.b16 %v944
        %v1304 = vunpack.c.h.b16 %v944
        %v1305 = vunpack.c.l.b16 %v945
        %v1306 = vunpack.c.h.b16 %v945
        %v1307 = vunpack.c.l.b16 %v946
        %v1308 = vunpack.c.h.b16 %v946
        %v1309 = vunpack.c.l.b16 %v947
        %v1310 = vunpack.c.h.b16 %v947
        %v1311 = vunpack.c.l.b16 %v948
        %v1312 = vunpack.c.h.b16 %v948
        %v1313 = vunpack.c.l.b16 %v949
        %v1314 = vunpack.c.h.b16 %v949
        %v1315 = vunpack.c.l.b16 %v950
        %v1316 = vunpack.c.h.b16 %v950
        %v1317 = vunpack.c.l.b16 %v951
        %v1318 = vunpack.c.h.b16 %v951
        %v1319 = vunpack.c.l.b16 %v952
        %v1320 = vunpack.c.h.b16 %v952
        %v1321 = vunpack.c.l.b16 %v953
        %v1322 = vunpack.c.h.b16 %v953
        %v1323 = vunpack.c.l.b16 %v954
        %v1324 = vunpack.c.h.b16 %v954
        %v1325 = vunpack.c.l.b16 %v955
        %v1326 = vunpack.c.h.b16 %v955
        %v1327 = vunpack.c.l.b16 %v956
        %v1328 = vunpack.c.h.b16 %v956
        %v1329 = vunpack.c.l.b16 %v957
        %v1330 = vunpack.c.h.b16 %v957
        %v1331 = vunpack.c.l.b16 %v958
        %v1332 = vunpack.c.h.b16 %v958
        %v1333 = vunpack.c.l.b16 %v959
        %v1334 = vunpack.c.h.b16 %v959
        %v1335 = vunpack.c.l.b16 %v960
        %v1336 = vunpack.c.h.b16 %v960
        %v1337 = vunpack.c.l.b16 %v961
        %v1338 = vunpack.c.h.b16 %v961
        %v1339 = vunpack.c.l.b16 %v962
        %v1340 = vunpack.c.h.b16 %v962
        %v1341 = vunpack.c.l.b16 %v963
        %v1342 = vunpack.c.h.b16 %v963
        %v1343 = vunpack.c.l.b16 %v964
        %v1344 = vunpack.c.h.b16 %v964
        %v1345 = vunpack.c.l.b16 %v965
        %v1346 = vunpack.c.h.b16 %v965
        %v1347 = vunpack.c.l.b16 %v966
        %v1348 = vunpack.c.h.b16 %v966
        %v1349 = vunpack.c.l.b16 %v967
        %v1350 = vunpack.c.h.b16 %v967
        %v1351 = vunpack.c.l.b16 %v968
        %v1352 = vunpack.c.h.b16 %v968
        %v1353 = vunpack.c.l.b16 %v969
        %v1354 = vunpack.c.h.b16 %v969
        %v1355 = vunpack.c.l.b16 %v970
        %v1356 = vunpack.c.h.b16 %v970
        %v1357 = vunpack.c.l.b16 %v971
        %v1358 = vunpack.c.h.b16 %v971
        %v1359 = vunpack.c.l.b16 %v972
        %v1360 = vunpack.c.h.b16 %v972
        %v1361 = vunpack.c.l.b16 %v973
        %v1362 = vunpack.c.h.b16 %v973
        %v1363 = vunpack.c.l.b16 %v974
        %v1364 = vunpack.c.h.b16 %v974
        %v1365 = vunpack.c.l.b16 %v975
        %v1366 = vunpack.c.h.b16 %v975
        %v1367 = vunpack.c.l.b16 %v976
        %v1368 = vunpack.c.h.b16 %v976
        %v1369 = vunpack.c.l.b16 %v977
        %v1370 = vunpack.c.h.b16 %v977
        %v1371 = vunpack.c.l.b16 %v978
        %v1372 = vunpack.c.h.b16 %v978
        %v1373 = vunpack.c.l.b16 %v979
        %v1374 = vunpack.c.h.b16 %v979
        %v1375 = vunpack.c.l.b16 %v980
        %v1376 = vunpack.c.h.b16 %v980
        %v1377 = vunpack.c.l.b16 %v981
        %v1378 = vunpack.c.h.b16 %v981
        %v1379 = vunpack.c.l.b16 %v982
        %v1380 = vunpack.c.h.b16 %v982
        %v1381 = vunpack.c.l.b16 %v983
        %v1382 = vunpack.c.h.b16 %v983
        %v1383 = vunpack.c.l.b16 %v984
        %v1384 = vunpack.c.h.b16 %v984
        %v1385 = vunpack.c.l.b16 %v985
        %v1386 = vunpack.c.h.b16 %v985
        %v1387 = vunpack.c.l.b16 %v986
        %v1388 = vunpack.c.h.b16 %v986
        %v1389 = vunpack.c.l.b16 %v987
        %v1390 = vunpack.c.h.b16 %v987
        %v1391 = vunpack.c.l.b16 %v988
        %v1392 = vunpack.c.h.b16 %v988
        %v1393 = vunpack.c.l.b16 %v989
        %v1394 = vunpack.c.h.b16 %v989
        %v1395 = vunpack.c.l.b16 %v990
        %v1396 = vunpack.c.h.b16 %v990
        %v1397 = vpack.c.b16 %v1145, %v1141
        %v1398 = vpack.c.b16 %v1146, %v1142
        %v1399 = vpack.c.b16 %v1147, %v1143
        %v1400 = vpack.c.b16 %v1148, %v1144
        %v1401 = vpack.c.b16 %v1153, %v1149
        %v1402 = vpack.c.b16 %v1154, %v1150
        %v1403 = vpack.c.b16 %v1155, %v1151
        %v1404 = vpack.c.b16 %v1156, %v1152
        %v1405 = vpack.c.b16 %v1161, %v1157
        %v1406 = vpack.c.b16 %v1162, %v1158
        %v1407 = vpack.c.b16 %v1163, %v1159
        %v1408 = vpack.c.b16 %v1164, %v1160
        %v1409 = vpack.c.b16 %v1169, %v1165
        %v1410 = vpack.c.b16 %v1170, %v1166
        %v1411 = vpack.c.b16 %v1171, %v1167
        %v1412 = vpack.c.b16 %v1172, %v1168
        %v1413 = vpack.c.b16 %v1177, %v1173
        %v1414 = vpack.c.b16 %v1178, %v1174
        %v1415 = vpack.c.b16 %v1179, %v1175
        %v1416 = vpack.c.b16 %v1180, %v1176
        %v1417 = vpack.c.b16 %v1185, %v1181
        %v1418 = vpack.c.b16 %v1186, %v1182
        %v1419 = vpack.c.b16 %v1187, %v1183
        %v1420 = vpack.c.b16 %v1188, %v1184
        %v1421 = vpack.c.b16 %v1193, %v1189
        %v1422 = vpack.c.b16 %v1194, %v1190
        %v1423 = vpack.c.b16 %v1195, %v1191
        %v1424 = vpack.c.b16 %v1196, %v1192
        %v1425 = vpack.c.b16 %v1201, %v1197
        %v1426 = vpack.c.b16 %v1202, %v1198
        %v1427 = vpack.c.b16 %v1203, %v1199
        %v1428 = vpack.c.b16 %v1204, %v1200
        %v1429 = vpack.c.b16 %v1209, %v1205
        %v1430 = vpack.c.b16 %v1210, %v1206
        %v1431 = vpack.c.b16 %v1211, %v1207
        %v1432 = vpack.c.b16 %v1212, %v1208
        %v1433 = vpack.c.b16 %v1217, %v1213
        %v1434 = vpack.c.b16 %v1218, %v1214
        %v1435 = vpack.c.b16 %v1219, %v1215
        %v1436 = vpack.c.b16 %v1220, %v1216
        %v1437 = vpack.c.b16 %v1225, %v1221
        %v1438 = vpack.c.b16 %v1226, %v1222
        %v1439 = vpack.c.b16 %v1227, %v1223
        %v1440 = vpack.c.b16 %v1228, %v1224
        %v1441 = vpack.c.b16 %v1233, %v1229
        %v1442 = vpack.c.b16 %v1234, %v1230
        %v1443 = vpack.c.b16 %v1235, %v1231
        %v1444 = vpack.c.b16 %v1236, %v1232
        %v1445 = vpack.c.b16 %v1241, %v1237
        %v1446 = vpack.c.b16 %v1242, %v1238
        %v1447 = vpack.c.b16 %v1243, %v1239
        %v1448 = vpack.c.b16 %v1244, %v1240
        %v1449 = vpack.c.b16 %v1249, %v1245
        %v1450 = vpack.c.b16 %v1250, %v1246
        %v1451 = vpack.c.b16 %v1251, %v1247
        %v1452 = vpack.c.b16 %v1252, %v1248
        %v1453 = vpack.c.b16 %v1257, %v1253
        %v1454 = vpack.c.b16 %v1258, %v1254
        %v1455 = vpack.c.b16 %v1259, %v1255
        %v1456 = vpack.c.b16 %v1260, %v1256
        %v1457 = vpack.c.b16 %v1265, %v1261
        %v1458 = vpack.c.b16 %v1266, %v1262
        %v1459 = vpack.c.b16 %v1267, %v1263
        %v1460 = vpack.c.b16 %v1268, %v1264
        %v1461 = vpack.c.b16 %v1273, %v1269
        %v1462 = vpack.c.b16 %v1274, %v1270
        %v1463 = vpack.c.b16 %v1275, %v1271
        %v1464 = vpack.c.b16 %v1276, %v1272
        %v1465 = vpack.c.b16 %v1281, %v1277
        %v1466 = vpack.c.b16 %v1282, %v1278
        %v1467 = vpack.c.b16 %v1283, %v1279
        %v1468 = vpack.c.b16 %v1284, %v1280
        %v1469 = vpack.c.b16 %v1289, %v1285
        %v1470 = vpack.c.b16 %v1290, %v1286
        %v1471 = vpack.c.b16 %v1291, %v1287
        %v1472 = vpack.c.b16 %v1292, %v1288
        %v1473 = vpack.c.b16 %v1297, %v1293
        %v1474 = vpack.c.b16 %v1298, %v1294
        %v1475 = vpack.c.b16 %v1299, %v1295
        %v1476 = vpack.c.b16 %v1300, %v1296
        %v1477 = vpack.c.b16 %v1305, %v1301
        %v1478 = vpack.c.b16 %v1306, %v1302
        %v1479 = vpack.c.b16 %v1307, %v1303
        %v1480 = vpack.c.b16 %v1308, %v1304
        %v1481 = vpack.c.b16 %v1313, %v1309
        %v1482 = vpack.c.b16 %v1314, %v1310
        %v1483 = vpack.c.b16 %v1315, %v1311
        %v1484 = vpack.c.b16 %v1316, %v1312
        %v1485 = vpack.c.b16 %v1321, %v1317
        %v1486 = vpack.c.b16 %v1322, %v1318
        %v1487 = vpack.c.b16 %v1323, %v1319
        %v1488 = vpack.c.b16 %v1324, %v1320
        %v1489 = vpack.c.b16 %v1329, %v1325
        %v1490 = vpack.c.b16 %v1330, %v1326
        %v1491 = vpack.c.b16 %v1331, %v1327
        %v1492 = vpack.c.b16 %v1332, %v1328
        %v1493 = vpack.c.b16 %v1337, %v1333
        %v1494 = vpack.c.b16 %v1338, %v1334
        %v1495 = vpack.c.b16 %v1339, %v1335
        %v1496 = vpack.c.b16 %v1340, %v1336
        %v1497 = vpack.c.b16 %v1345, %v1341
        %v1498 = vpack.c.b16 %v1346, %v1342
        %v1499 = vpack.c.b16 %v1347, %v1343
        %v1500 = vpack.c.b16 %v1348, %v1344
        %v1501 = vpack.c.b16 %v1353, %v1349
        %v1502 = vpack.c.b16 %v1354, %v1350
        %v1503 = vpack.c.b16 %v1355, %v1351
        %v1504 = vpack.c.b16 %v1356, %v1352
        %v1505 = vpack.c.b16 %v1361, %v1357
        %v1506 = vpack.c.b16 %v1362, %v1358
        %v1507 = vpack.c.b16 %v1363, %v1359
        %v1508 = vpack.c.b16 %v1364, %v1360
        %v1509 = vpack.c.b16 %v1369, %v1365
        %v1510 = vpack.c.b16 %v1370, %v1366
        %v1511 = vpack.c.b16 %v1371, %v1367
        %v1512 = vpack.c.b16 %v1372, %v1368
        %v1513 = vpack.c.b16 %v1377, %v1373
        %v1514 = vpack.c.b16 %v1378, %v1374
        %v1515 = vpack.c.b16 %v1379, %v1375
        %v1516 = vpack.c.b16 %v1380, %v1376
        %v1517 = vpack.c.b16 %v1385, %v1381
        %v1518 = vpack.c.b16 %v1386, %v1382
        %v1519 = vpack.c.b16 %v1387, %v1383
        %v1520 = vpack.c.b16 %v1388, %v1384
        %v1521 = vpack.c.b16 %v1393, %v1389
        %v1522 = vpack.c.b16 %v1394, %v1390
        %v1523 = vpack.c.b16 %v1395, %v1391
        %v1524 = vpack.c.b16 %v1396, %v1392
        %1653 = vmatprep.subr.bf16.mxu0 %v1398
        %1654 = vmatpush1.bf16.msra.mxu0 %v1397
        %1655 = vmatprep.subr.bf16.mxu0 %v1402
        %1656 = vmatpush1.bf16.msra.mxu0 %v1401
        %1657 = vmatprep.subr.bf16.mxu0 %v1406
        %1658 = vmatpush1.bf16.msra.mxu0 %v1405
        %1659 = vmatprep.subr.bf16.mxu0 %v1410
        %1660 = vmatpush1.bf16.msra.mxu0 %v1409
        %1661 = vmatprep.subr.bf16.mxu0 %v1414
        %1662 = vmatpush1.bf16.msra.mxu0 %v1413
        %1663 = vmatprep.subr.bf16.mxu0 %v1418
        %1664 = vmatpush1.bf16.msra.mxu0 %v1417
        %1665 = vmatprep.subr.bf16.mxu0 %v1422
        %1666 = vmatpush1.bf16.msra.mxu0 %v1421
        %1667 = vmatprep.subr.bf16.mxu0 %v1426
        %1668 = vmatpush1.bf16.msra.mxu0 %v1425
        %1669 = vmatprep.subr.bf16.mxu0 %v1430
        %1670 = vmatpush1.bf16.msra.mxu0 %v1429
        %1671 = vmatprep.subr.bf16.mxu0 %v1434
        %1672 = vmatpush1.bf16.msra.mxu0 %v1433
        %1673 = vmatprep.subr.bf16.mxu0 %v1438
        %1674 = vmatpush1.bf16.msra.mxu0 %v1437
        %1675 = vmatprep.subr.bf16.mxu0 %v1442
        %1676 = vmatpush1.bf16.msra.mxu0 %v1441
        %1677 = vmatprep.subr.bf16.mxu0 %v1446
        %1678 = vmatpush1.bf16.msra.mxu0 %v1445
        %1679 = vmatprep.subr.bf16.mxu0 %v1450
        %1680 = vmatpush1.bf16.msra.mxu0 %v1449
        %1681 = vmatprep.subr.bf16.mxu0 %v1454
        %1682 = vmatpush1.bf16.msra.mxu0 %v1453
        %1683 = vmatprep.subr.bf16.mxu0 %v1458
        %1684 = vmatpush1.bf16.msra.mxu0 %v1457
        %1685 = vmatprep.mubr.bf16.mxu0 %v832
        %1686 = vmatmul.mubr.bf16.gmra.mrb[0].mxu0 %v831
        %v1687 = vpop.f32.mrb[0].mxu0
        %v1688 = vadd.f32 %v996, %v1687
        %v1689 = vpop.f32.mrb[0].mxu0
        %v1690 = vadd.f32 %v1000, %v1689
        %v1691 = vpop.f32.mrb[0].mxu0
        %v1692 = vadd.f32 %v996, %v1691
        %v1693 = vpop.f32.mrb[0].mxu0
        %v1694 = vadd.f32 %v1000, %v1693
        %1695 = vmatprep.mubr.bf16.mxu0 %v836
        %1696 = vmatmul.mubr.bf16.gmra.mrb[0].mxu0 %v835
        %v1697 = vpop.f32.mrb[0].mxu0
        %v1698 = vadd.f32 %v996, %v1697
        %v1699 = vpop.f32.mrb[0].mxu0
        %v1700 = vadd.f32 %v1000, %v1699
        %v1701 = vpop.f32.mrb[0].mxu0
        %v1702 = vadd.f32 %v996, %v1701
        %v1703 = vpop.f32.mrb[0].mxu0
        %v1704 = vadd.f32 %v1000, %v1703
        %1705 = vmatprep.mubr.bf16.mxu0 %v840
        %1706 = vmatmul.mubr.bf16.gmra.mrb[0].mxu0 %v839
        %v1707 = vpop.f32.mrb[0].mxu0
        %v1708 = vadd.f32 %v996, %v1707
        %v1709 = vpop.f32.mrb[0].mxu0
        %v1710 = vadd.f32 %v1000, %v1709
        %v1711 = vpop.f32.mrb[0].mxu0
        %v1712 = vadd.f32 %v996, %v1711
        %v1713 = vpop.f32.mrb[0].mxu0
        %v1714 = vadd.f32 %v1000, %v1713
        %1715 = vmatprep.mubr.bf16.mxu0 %v844
        %1716 = vmatmul.mubr.bf16.gmra.mrb[0].mxu0 %v843
        %v1717 = vpop.f32.mrb[0].mxu0
        %v1718 = vadd.f32 %v996, %v1717
        %v1719 = vpop.f32.mrb[0].mxu0
        %v1720 = vadd.f32 %v1000, %v1719
        %v1721 = vpop.f32.mrb[0].mxu0
        %v1722 = vadd.f32 %v996, %v1721
        %v1723 = vpop.f32.mrb[0].mxu0
        %v1724 = vadd.f32 %v1000, %v1723
        %1725 = vmatprep.mubr.bf16.mxu0 %v848
        %1726 = vmatmul.mubr.bf16.gmra.mrb[0].mxu0 %v847
        %v1727 = vpop.f32.mrb[0].mxu0
        %v1728 = vadd.f32 %v996, %v1727
        %v1729 = vpop.f32.mrb[0].mxu0
        %v1730 = vadd.f32 %v1000, %v1729
        %v1731 = vpop.f32.mrb[0].mxu0
        %v1732 = vadd.f32 %v996, %v1731
        %v1733 = vpop.f32.mrb[0].mxu0
        %v1734 = vadd.f32 %v1000, %v1733
        %1735 = vmatprep.mubr.bf16.mxu0 %v852
        %1736 = vmatmul.mubr.bf16.gmra.mrb[0].mxu0 %v851
        %v1737 = vpop.f32.mrb[0].mxu0
        %v1738 = vadd.f32 %v996, %v1737
        %v1739 = vpop.f32.mrb[0].mxu0
        %v1740 = vadd.f32 %v1000, %v1739
        %v1741 = vpop.f32.mrb[0].mxu0
        %v1742 = vadd.f32 %v996, %v1741
        %v1743 = vpop.f32.mrb[0].mxu0
        %v1744 = vadd.f32 %v1000, %v1743
        %1745 = vmatprep.mubr.bf16.mxu0 %v856
        %1746 = vmatmul.mubr.bf16.gmra.mrb[0].mxu0 %v855
        %v1747 = vpop.f32.mrb[0].mxu0
        %v1748 = vadd.f32 %v996, %v1747
        %v1749 = vpop.f32.mrb[0].mxu0
        %v1750 = vadd.f32 %v1000, %v1749
        %v1751 = vpop.f32.mrb[0].mxu0
        %v1752 = vadd.f32 %v996, %v1751
        %v1753 = vpop.f32.mrb[0].mxu0
        %v1754 = vadd.f32 %v1000, %v1753
        %1755 = vmatprep.mubr.bf16.mxu0 %v860
        %1756 = vmatmul.mubr.bf16.gmra.mrb[0].mxu0 %v859
        %v1757 = vpop.f32.mrb[0].mxu0
        %v1758 = vadd.f32 %v996, %v1757
        %v1759 = vpop.f32.mrb[0].mxu0
        %v1760 = vadd.f32 %v1000, %v1759
        %v1761 = vpop.f32.mrb[0].mxu0
        %v1762 = vadd.f32 %v996, %v1761
        %v1763 = vpop.f32.mrb[0].mxu0
        %v1764 = vadd.f32 %v1000, %v1763
        %1765 = vdwg.mxu0
        %1766 = vmatprep.subr.bf16.mxu0 %v1462
        %1767 = vmatpush1.bf16.msra.mxu0 %v1461
        %1768 = vmatprep.subr.bf16.mxu0 %v1466
        %1769 = vmatpush1.bf16.msra.mxu0 %v1465
        %1770 = vmatprep.subr.bf16.mxu0 %v1470
        %1771 = vmatpush1.bf16.msra.mxu0 %v1469
        %1772 = vmatprep.subr.bf16.mxu0 %v1474
        %1773 = vmatpush1.bf16.msra.mxu0 %v1473
        %1774 = vmatprep.subr.bf16.mxu0 %v1478
        %1775 = vmatpush1.bf16.msra.mxu0 %v1477
        %1776 = vmatprep.subr.bf16.mxu0 %v1482
        %1777 = vmatpush1.bf16.msra.mxu0 %v1481
        %1778 = vmatprep.subr.bf16.mxu0 %v1486
        %1779 = vmatpush1.bf16.msra.mxu0 %v1485
        %1780 = vmatprep.subr.bf16.mxu0 %v1490
        %1781 = vmatpush1.bf16.msra.mxu0 %v1489
        %1782 = vmatprep.subr.bf16.mxu0 %v1494
        %1783 = vmatpush1.bf16.msra.mxu0 %v1493
        %1784 = vmatprep.subr.bf16.mxu0 %v1498
        %1785 = vmatpush1.bf16.msra.mxu0 %v1497
        %1786 = vmatprep.subr.bf16.mxu0 %v1502
        %1787 = vmatpush1.bf16.msra.mxu0 %v1501
        %1788 = vmatprep.subr.bf16.mxu0 %v1506
        %1789 = vmatpush1.bf16.msra.mxu0 %v1505
        %1790 = vmatprep.subr.bf16.mxu0 %v1510
        %1791 = vmatpush1.bf16.msra.mxu0 %v1509
        %1792 = vmatprep.subr.bf16.mxu0 %v1514
        %1793 = vmatpush1.bf16.msra.mxu0 %v1513
        %1794 = vmatprep.subr.bf16.mxu0 %v1518
        %1795 = vmatpush1.bf16.msra.mxu0 %v1517
        %1796 = vmatprep.subr.bf16.mxu0 %v1522
        %1797 = vmatpush1.bf16.msra.mxu0 %v1521
        %1798 = vmatprep.mubr.bf16.mxu0 %v834
        %1799 = vmatmul.mubr.bf16.gmra.mrb[0].mxu0 %v833
        %v1800 = vpop.f32.mrb[0].mxu0
        %v1801 = vadd.f32 %v1688, %v1800
        %v1802 = vpop.f32.mrb[0].mxu0
        %v1803 = vadd.f32 %v1690, %v1802
        %v1804 = vpop.f32.mrb[0].mxu0
        %v1805 = vadd.f32 %v1692, %v1804
        %v1806 = vpop.f32.mrb[0].mxu0
        %v1807 = vadd.f32 %v1694, %v1806
        %1808 = vmatprep.mubr.bf16.mxu0 %v838
        %1809 = vmatmul.mubr.bf16.gmra.mrb[0].mxu0 %v837
        %v1810 = vpop.f32.mrb[0].mxu0
        %v1811 = vadd.f32 %v1698, %v1810
        %v1812 = vpop.f32.mrb[0].mxu0
        %v1813 = vadd.f32 %v1700, %v1812
        %v1814 = vpop.f32.mrb[0].mxu0
        %v1815 = vadd.f32 %v1702, %v1814
        %v1816 = vpop.f32.mrb[0].mxu0
        %v1817 = vadd.f32 %v1704, %v1816
        %1818 = vmatprep.mubr.bf16.mxu0 %v842
        %1819 = vmatmul.mubr.bf16.gmra.mrb[0].mxu0 %v841
        %v1820 = vpop.f32.mrb[0].mxu0
        %v1821 = vadd.f32 %v1708, %v1820
        %v1822 = vpop.f32.mrb[0].mxu0
        %v1823 = vadd.f32 %v1710, %v1822
        %v1824 = vpop.f32.mrb[0].mxu0
        %v1825 = vadd.f32 %v1712, %v1824
        %v1826 = vpop.f32.mrb[0].mxu0
        %v1827 = vadd.f32 %v1714, %v1826
        %1828 = vmatprep.mubr.bf16.mxu0 %v846
        %1829 = vmatmul.mubr.bf16.gmra.mrb[0].mxu0 %v845
        %v1830 = vpop.f32.mrb[0].mxu0
        %v1831 = vadd.f32 %v1718, %v1830
        %v1832 = vpop.f32.mrb[0].mxu0
        %v1833 = vadd.f32 %v1720, %v1832
        %v1834 = vpop.f32.mrb[0].mxu0
        %v1835 = vadd.f32 %v1722, %v1834
        %v1836 = vpop.f32.mrb[0].mxu0
        %v1837 = vadd.f32 %v1724, %v1836
        %1838 = vmatprep.mubr.bf16.mxu0 %v850
        %1839 = vmatmul.mubr.bf16.gmra.mrb[0].mxu0 %v849
        %v1840 = vpop.f32.mrb[0].mxu0
        %v1841 = vadd.f32 %v1728, %v1840
        %v1842 = vpop.f32.mrb[0].mxu0
        %v1843 = vadd.f32 %v1730, %v1842
        %v1844 = vpop.f32.mrb[0].mxu0
        %v1845 = vadd.f32 %v1732, %v1844
        %v1846 = vpop.f32.mrb[0].mxu0
        %v1847 = vadd.f32 %v1734, %v1846
        %1848 = vmatprep.mubr.bf16.mxu0 %v854
        %1849 = vmatmul.mubr.bf16.gmra.mrb[0].mxu0 %v853
        %v1850 = vpop.f32.mrb[0].mxu0
        %v1851 = vadd.f32 %v1738, %v1850
        %v1852 = vpop.f32.mrb[0].mxu0
        %v1853 = vadd.f32 %v1740, %v1852
        %v1854 = vpop.f32.mrb[0].mxu0
        %v1855 = vadd.f32 %v1742, %v1854
        %v1856 = vpop.f32.mrb[0].mxu0
        %v1857 = vadd.f32 %v1744, %v1856
        %1858 = vmatprep.mubr.bf16.mxu0 %v858
        %1859 = vmatmul.mubr.bf16.gmra.mrb[0].mxu0 %v857
        %v1860 = vpop.f32.mrb[0].mxu0
        %v1861 = vadd.f32 %v1748, %v1860
        %v1862 = vpop.f32.mrb[0].mxu0
        %v1863 = vadd.f32 %v1750, %v1862
        %v1864 = vpop.f32.mrb[0].mxu0
        %v1865 = vadd.f32 %v1752, %v1864
        %v1866 = vpop.f32.mrb[0].mxu0
        %v1867 = vadd.f32 %v1754, %v1866
        %1868 = vmatprep.mubr.bf16.mxu0 %v862
        %1869 = vmatmul.mubr.bf16.gmra.mrb[0].mxu0 %v861
        %v1870 = vpop.f32.mrb[0].mxu0
        %v1871 = vadd.f32 %v1758, %v1870
        %v1872 = vpop.f32.mrb[0].mxu0
        %v1873 = vadd.f32 %v1760, %v1872
        %v1874 = vpop.f32.mrb[0].mxu0
        %v1875 = vadd.f32 %v1762, %v1874
        %v1876 = vpop.f32.mrb[0].mxu0
        %v1877 = vadd.f32 %v1764, %v1876
        %1878 = vdwg.mxu0
        %1879 = vmatprep.subr.bf16.mxu0 %v1400
        %1880 = vmatpush1.bf16.msra.mxu0 %v1399
        %1881 = vmatprep.subr.bf16.mxu0 %v1404
        %1882 = vmatpush1.bf16.msra.mxu0 %v1403
        %1883 = vmatprep.subr.bf16.mxu0 %v1408
        %1884 = vmatpush1.bf16.msra.mxu0 %v1407
        %1885 = vmatprep.subr.bf16.mxu0 %v1412
        %1886 = vmatpush1.bf16.msra.mxu0 %v1411
        %1887 = vmatprep.subr.bf16.mxu0 %v1416
        %1888 = vmatpush1.bf16.msra.mxu0 %v1415
        %1889 = vmatprep.subr.bf16.mxu0 %v1420
        %1890 = vmatpush1.bf16.msra.mxu0 %v1419
        %1891 = vmatprep.subr.bf16.mxu0 %v1424
        %1892 = vmatpush1.bf16.msra.mxu0 %v1423
        %1893 = vmatprep.subr.bf16.mxu0 %v1428
        %1894 = vmatpush1.bf16.msra.mxu0 %v1427
        %1895 = vmatprep.subr.bf16.mxu0 %v1432
        %1896 = vmatpush1.bf16.msra.mxu0 %v1431
        %1897 = vmatprep.subr.bf16.mxu0 %v1436
        %1898 = vmatpush1.bf16.msra.mxu0 %v1435
        %1899 = vmatprep.subr.bf16.mxu0 %v1440
        %1900 = vmatpush1.bf16.msra.mxu0 %v1439
        %1901 = vmatprep.subr.bf16.mxu0 %v1444
        %1902 = vmatpush1.bf16.msra.mxu0 %v1443
        %1903 = vmatprep.subr.bf16.mxu0 %v1448
        %1904 = vmatpush1.bf16.msra.mxu0 %v1447
        %1905 = vmatprep.subr.bf16.mxu0 %v1452
        %1906 = vmatpush1.bf16.msra.mxu0 %v1451
        %1907 = vmatprep.subr.bf16.mxu0 %v1456
        %1908 = vmatpush1.bf16.msra.mxu0 %v1455
        %1909 = vmatprep.subr.bf16.mxu0 %v1460
        %1910 = vmatpush1.bf16.msra.mxu0 %v1459
        %1911 = vmatprep.mubr.bf16.mxu0 %v832
        %1912 = vmatmul.mubr.bf16.gmra.mrb[0].mxu0 %v831
        %v1913 = vpop.f32.mrb[0].mxu0
        %v1914 = vadd.f32 %v1004, %v1913
        %v1915 = vpop.f32.mrb[0].mxu0
        %v1916 = vadd.f32 %v1008, %v1915
        %v1917 = vpop.f32.mrb[0].mxu0
        %v1918 = vadd.f32 %v1004, %v1917
        %v1919 = vpop.f32.mrb[0].mxu0
        %v1920 = vadd.f32 %v1008, %v1919
        %1921 = vmatprep.mubr.bf16.mxu0 %v836
        %1922 = vmatmul.mubr.bf16.gmra.mrb[0].mxu0 %v835
        %v1923 = vpop.f32.mrb[0].mxu0
        %v1924 = vadd.f32 %v1004, %v1923
        %v1925 = vpop.f32.mrb[0].mxu0
        %v1926 = vadd.f32 %v1008, %v1925
        %v1927 = vpop.f32.mrb[0].mxu0
        %v1928 = vadd.f32 %v1004, %v1927
        %v1929 = vpop.f32.mrb[0].mxu0
        %v1930 = vadd.f32 %v1008, %v1929
        %1931 = vmatprep.mubr.bf16.mxu0 %v840
        %1932 = vmatmul.mubr.bf16.gmra.mrb[0].mxu0 %v839
        %v1933 = vpop.f32.mrb[0].mxu0
        %v1934 = vadd.f32 %v1004, %v1933
        %v1935 = vpop.f32.mrb[0].mxu0
        %v1936 = vadd.f32 %v1008, %v1935
        %v1937 = vpop.f32.mrb[0].mxu0
        %v1938 = vadd.f32 %v1004, %v1937
        %v1939 = vpop.f32.mrb[0].mxu0
        %v1940 = vadd.f32 %v1008, %v1939
        %1941 = vmatprep.mubr.bf16.mxu0 %v844
        %1942 = vmatmul.mubr.bf16.gmra.mrb[0].mxu0 %v843
        %v1943 = vpop.f32.mrb[0].mxu0
        %v1944 = vadd.f32 %v1004, %v1943
        %v1945 = vpop.f32.mrb[0].mxu0
        %v1946 = vadd.f32 %v1008, %v1945
        %v1947 = vpop.f32.mrb[0].mxu0
        %v1948 = vadd.f32 %v1004, %v1947
        %v1949 = vpop.f32.mrb[0].mxu0
        %v1950 = vadd.f32 %v1008, %v1949
        %1951 = vmatprep.mubr.bf16.mxu0 %v848
        %1952 = vmatmul.mubr.bf16.gmra.mrb[0].mxu0 %v847
        %v1953 = vpop.f32.mrb[0].mxu0
        %v1954 = vadd.f32 %v1004, %v1953
        %v1955 = vpop.f32.mrb[0].mxu0
        %v1956 = vadd.f32 %v1008, %v1955
        %v1957 = vpop.f32.mrb[0].mxu0
        %v1958 = vadd.f32 %v1004, %v1957
        %v1959 = vpop.f32.mrb[0].mxu0
        %v1960 = vadd.f32 %v1008, %v1959
        %1961 = vmatprep.mubr.bf16.mxu0 %v852
        %1962 = vmatmul.mubr.bf16.gmra.mrb[0].mxu0 %v851
        %v1963 = vpop.f32.mrb[0].mxu0
        %v1964 = vadd.f32 %v1004, %v1963
        %v1965 = vpop.f32.mrb[0].mxu0
        %v1966 = vadd.f32 %v1008, %v1965
        %v1967 = vpop.f32.mrb[0].mxu0
        %v1968 = vadd.f32 %v1004, %v1967
        %v1969 = vpop.f32.mrb[0].mxu0
        %v1970 = vadd.f32 %v1008, %v1969
        %1971 = vmatprep.mubr.bf16.mxu0 %v856
        %1972 = vmatmul.mubr.bf16.gmra.mrb[0].mxu0 %v855
        %v1973 = vpop.f32.mrb[0].mxu0
        %v1974 = vadd.f32 %v1004, %v1973
        %v1975 = vpop.f32.mrb[0].mxu0
        %v1976 = vadd.f32 %v1008, %v1975
        %v1977 = vpop.f32.mrb[0].mxu0
        %v1978 = vadd.f32 %v1004, %v1977
        %v1979 = vpop.f32.mrb[0].mxu0
        %v1980 = vadd.f32 %v1008, %v1979
        %1981 = vmatprep.mubr.bf16.mxu0 %v860
        %1982 = vmatmul.mubr.bf16.gmra.mrb[0].mxu0 %v859
        %v1983 = vpop.f32.mrb[0].mxu0
        %v1984 = vadd.f32 %v1004, %v1983
        %v1985 = vpop.f32.mrb[0].mxu0
        %v1986 = vadd.f32 %v1008, %v1985
        %v1987 = vpop.f32.mrb[0].mxu0
        %v1988 = vadd.f32 %v1004, %v1987
        %v1989 = vpop.f32.mrb[0].mxu0
        %v1990 = vadd.f32 %v1008, %v1989
        %1991 = vdwg.mxu0
        %1992 = vmatprep.subr.bf16.mxu0 %v1464
        %1993 = vmatpush1.bf16.msra.mxu0 %v1463
        %1994 = vmatprep.subr.bf16.mxu0 %v1468
        %1995 = vmatpush1.bf16.msra.mxu0 %v1467
        %1996 = vmatprep.subr.bf16.mxu0 %v1472
        %1997 = vmatpush1.bf16.msra.mxu0 %v1471
        %1998 = vmatprep.subr.bf16.mxu0 %v1476
        %1999 = vmatpush1.bf16.msra.mxu0 %v1475
        %2000 = vmatprep.subr.bf16.mxu0 %v1480
        %2001 = vmatpush1.bf16.msra.mxu0 %v1479
        %2002 = vmatprep.subr.bf16.mxu0 %v1484
        %2003 = vmatpush1.bf16.msra.mxu0 %v1483
        %2004 = vmatprep.subr.bf16.mxu0 %v1488
        %2005 = vmatpush1.bf16.msra.mxu0 %v1487
        %2006 = vmatprep.subr.bf16.mxu0 %v1492
        %2007 = vmatpush1.bf16.msra.mxu0 %v1491
        %2008 = vmatprep.subr.bf16.mxu0 %v1496
        %2009 = vmatpush1.bf16.msra.mxu0 %v1495
        %2010 = vmatprep.subr.bf16.mxu0 %v1500
        %2011 = vmatpush1.bf16.msra.mxu0 %v1499
        %2012 = vmatprep.subr.bf16.mxu0 %v1504
        %2013 = vmatpush1.bf16.msra.mxu0 %v1503
        %2014 = vmatprep.subr.bf16.mxu0 %v1508
        %2015 = vmatpush1.bf16.msra.mxu0 %v1507
        %2016 = vmatprep.subr.bf16.mxu0 %v1512
        %2017 = vmatpush1.bf16.msra.mxu0 %v1511
        %2018 = vmatprep.subr.bf16.mxu0 %v1516
        %2019 = vmatpush1.bf16.msra.mxu0 %v1515
        %2020 = vmatprep.subr.bf16.mxu0 %v1520
        %2021 = vmatpush1.bf16.msra.mxu0 %v1519
        %2022 = vmatprep.subr.bf16.mxu0 %v1524
        %2023 = vmatpush1.bf16.msra.mxu0 %v1523
        %2024 = vmatprep.mubr.bf16.mxu0 %v834
        %2025 = vmatmul.mubr.bf16.gmra.mrb[0].mxu0 %v833
        %v2026 = vpop.f32.mrb[0].mxu0
        %v2027 = vadd.f32 %v1914, %v2026
        %v2028 = vpop.f32.mrb[0].mxu0
        %v2029 = vadd.f32 %v1916, %v2028
        %v2030 = vpop.f32.mrb[0].mxu0
        %v2031 = vadd.f32 %v1918, %v2030
        %v2032 = vpop.f32.mrb[0].mxu0
        %v2033 = vadd.f32 %v1920, %v2032
        %2034 = vmatprep.mubr.bf16.mxu0 %v838
        %2035 = vmatmul.mubr.bf16.gmra.mrb[0].mxu0 %v837
        %v2036 = vpop.f32.mrb[0].mxu0
        %v2037 = vadd.f32 %v1924, %v2036
        %v2038 = vpop.f32.mrb[0].mxu0
        %v2039 = vadd.f32 %v1926, %v2038
        %v2040 = vpop.f32.mrb[0].mxu0
        %v2041 = vadd.f32 %v1928, %v2040
        %v2042 = vpop.f32.mrb[0].mxu0
        %v2043 = vadd.f32 %v1930, %v2042
        %2044 = vmatprep.mubr.bf16.mxu0 %v842
        %2045 = vmatmul.mubr.bf16.gmra.mrb[0].mxu0 %v841
        %v2046 = vpop.f32.mrb[0].mxu0
        %v2047 = vadd.f32 %v1934, %v2046
        %v2048 = vpop.f32.mrb[0].mxu0
        %v2049 = vadd.f32 %v1936, %v2048
        %v2050 = vpop.f32.mrb[0].mxu0
        %v2051 = vadd.f32 %v1938, %v2050
        %v2052 = vpop.f32.mrb[0].mxu0
        %v2053 = vadd.f32 %v1940, %v2052
        %2054 = vmatprep.mubr.bf16.mxu0 %v846
        %2055 = vmatmul.mubr.bf16.gmra.mrb[0].mxu0 %v845
        %v2056 = vpop.f32.mrb[0].mxu0
        %v2057 = vadd.f32 %v1944, %v2056
        %v2058 = vpop.f32.mrb[0].mxu0
        %v2059 = vadd.f32 %v1946, %v2058
        %v2060 = vpop.f32.mrb[0].mxu0
        %v2061 = vadd.f32 %v1948, %v2060
        %v2062 = vpop.f32.mrb[0].mxu0
        %v2063 = vadd.f32 %v1950, %v2062
        %2064 = vmatprep.mubr.bf16.mxu0 %v850
        %2065 = vmatmul.mubr.bf16.gmra.mrb[0].mxu0 %v849
        %v2066 = vpop.f32.mrb[0].mxu0
        %v2067 = vadd.f32 %v1954, %v2066
        %v2068 = vpop.f32.mrb[0].mxu0
        %v2069 = vadd.f32 %v1956, %v2068
        %v2070 = vpop.f32.mrb[0].mxu0
        %v2071 = vadd.f32 %v1958, %v2070
        %v2072 = vpop.f32.mrb[0].mxu0
        %v2073 = vadd.f32 %v1960, %v2072
        %2074 = vmatprep.mubr.bf16.mxu0 %v854
        %2075 = vmatmul.mubr.bf16.gmra.mrb[0].mxu0 %v853
        %v2076 = vpop.f32.mrb[0].mxu0
        %v2077 = vadd.f32 %v1964, %v2076
        %v2078 = vpop.f32.mrb[0].mxu0
        %v2079 = vadd.f32 %v1966, %v2078
        %v2080 = vpop.f32.mrb[0].mxu0
        %v2081 = vadd.f32 %v1968, %v2080
        %v2082 = vpop.f32.mrb[0].mxu0
        %v2083 = vadd.f32 %v1970, %v2082
        %2084 = vmatprep.mubr.bf16.mxu0 %v858
        %2085 = vmatmul.mubr.bf16.gmra.mrb[0].mxu0 %v857
        %v2086 = vpop.f32.mrb[0].mxu0
        %v2087 = vadd.f32 %v1974, %v2086
        %v2088 = vpop.f32.mrb[0].mxu0
        %v2089 = vadd.f32 %v1976, %v2088
        %v2090 = vpop.f32.mrb[0].mxu0
        %v2091 = vadd.f32 %v1978, %v2090
        %v2092 = vpop.f32.mrb[0].mxu0
        %v2093 = vadd.f32 %v1980, %v2092
        %2094 = vmatprep.mubr.bf16.mxu0 %v862
        %2095 = vmatmul.mubr.bf16.gmra.mrb[0].mxu0 %v861
        %v2096 = vpop.f32.mrb[0].mxu0
        %v2097 = vadd.f32 %v1984, %v2096
        %v2098 = vpop.f32.mrb[0].mxu0
        %v2099 = vadd.f32 %v1986, %v2098
        %v2100 = vpop.f32.mrb[0].mxu0
        %v2101 = vadd.f32 %v1988, %v2100
        %v2102 = vpop.f32.mrb[0].mxu0
        %v2103 = vadd.f32 %v1990, %v2102
        %2104 = vdwg.mxu0
        %v2105 = vmax.f32 %v1801, 0.0
        %v2106 = vmax.f32 %v1803, 0.0
        %v2107 = vmax.f32 %v2027, 0.0
        %v2108 = vmax.f32 %v2029, 0.0
        %v2109 = vmax.f32 %v1805, 0.0
        %v2110 = vmax.f32 %v1807, 0.0
        %v2111 = vmax.f32 %v2031, 0.0
        %v2112 = vmax.f32 %v2033, 0.0
        %v2113 = vmax.f32 %v1811, 0.0
        %v2114 = vmax.f32 %v1813, 0.0
        %v2115 = vmax.f32 %v2037, 0.0
        %v2116 = vmax.f32 %v2039, 0.0
        %v2117 = vmax.f32 %v1815, 0.0
        %v2118 = vmax.f32 %v1817, 0.0
        %v2119 = vmax.f32 %v2041, 0.0
        %v2120 = vmax.f32 %v2043, 0.0
        %v2121 = vmax.f32 %v1821, 0.0
        %v2122 = vmax.f32 %v1823, 0.0
        %v2123 = vmax.f32 %v2047, 0.0
        %v2124 = vmax.f32 %v2049, 0.0
        %v2125 = vmax.f32 %v1825, 0.0
        %v2126 = vmax.f32 %v1827, 0.0
        %v2127 = vmax.f32 %v2051, 0.0
        %v2128 = vmax.f32 %v2053, 0.0
        %v2129 = vmax.f32 %v1831, 0.0
        %v2130 = vmax.f32 %v1833, 0.0
        %v2131 = vmax.f32 %v2057, 0.0
        %v2132 = vmax.f32 %v2059, 0.0
        %v2133 = vmax.f32 %v1835, 0.0
        %v2134 = vmax.f32 %v1837, 0.0
        %v2135 = vmax.f32 %v2061, 0.0
        %v2136 = vmax.f32 %v2063, 0.0
        %v2137 = vmax.f32 %v1841, 0.0
        %v2138 = vmax.f32 %v1843, 0.0
        %v2139 = vmax.f32 %v2067, 0.0
        %v2140 = vmax.f32 %v2069, 0.0
        %v2141 = vmax.f32 %v1845, 0.0
        %v2142 = vmax.f32 %v1847, 0.0
        %v2143 = vmax.f32 %v2071, 0.0
        %v2144 = vmax.f32 %v2073, 0.0
        %v2145 = vmax.f32 %v1851, 0.0
        %v2146 = vmax.f32 %v1853, 0.0
        %v2147 = vmax.f32 %v2077, 0.0
        %v2148 = vmax.f32 %v2079, 0.0
        %v2149 = vmax.f32 %v1855, 0.0
        %v2150 = vmax.f32 %v1857, 0.0
        %v2151 = vmax.f32 %v2081, 0.0
        %v2152 = vmax.f32 %v2083, 0.0
        %v2153 = vmax.f32 %v1861, 0.0
        %v2154 = vmax.f32 %v1863, 0.0
        %v2155 = vmax.f32 %v2087, 0.0
        %v2156 = vmax.f32 %v2089, 0.0
        %v2157 = vmax.f32 %v1865, 0.0
        %v2158 = vmax.f32 %v1867, 0.0
        %v2159 = vmax.f32 %v2091, 0.0
        %v2160 = vmax.f32 %v2093, 0.0
        %v2161 = vmax.f32 %v1871, 0.0
        %v2162 = vmax.f32 %v1873, 0.0
        %v2163 = vmax.f32 %v2097, 0.0
        %v2164 = vmax.f32 %v2099, 0.0
        %v2165 = vmax.f32 %v1875, 0.0
        %v2166 = vmax.f32 %v1877, 0.0
        %v2167 = vmax.f32 %v2101, 0.0
        %v2168 = vmax.f32 %v2103, 0.0
        %v2169 = vpack.c.bf16 %v2109, %v2105
        %v2170 = vpack.c.bf16 %v2110, %v2106
        %v2171 = vpack.c.bf16 %v2111, %v2107
        %v2172 = vpack.c.bf16 %v2112, %v2108
        %v2173 = vpack.c.bf16 %v2117, %v2113
        %v2174 = vpack.c.bf16 %v2118, %v2114
        %v2175 = vpack.c.bf16 %v2119, %v2115
        %v2176 = vpack.c.bf16 %v2120, %v2116
        %v2177 = vpack.c.bf16 %v2125, %v2121
        %v2178 = vpack.c.bf16 %v2126, %v2122
        %v2179 = vpack.c.bf16 %v2127, %v2123
        %v2180 = vpack.c.bf16 %v2128, %v2124
        %v2181 = vpack.c.bf16 %v2133, %v2129
        %v2182 = vpack.c.bf16 %v2134, %v2130
        %v2183 = vpack.c.bf16 %v2135, %v2131
        %v2184 = vpack.c.bf16 %v2136, %v2132
        %v2185 = vpack.c.bf16 %v2141, %v2137
        %v2186 = vpack.c.bf16 %v2142, %v2138
        %v2187 = vpack.c.bf16 %v2143, %v2139
        %v2188 = vpack.c.bf16 %v2144, %v2140
        %v2189 = vpack.c.bf16 %v2149, %v2145
        %v2190 = vpack.c.bf16 %v2150, %v2146
        %v2191 = vpack.c.bf16 %v2151, %v2147
        %v2192 = vpack.c.bf16 %v2152, %v2148
        %v2193 = vpack.c.bf16 %v2157, %v2153
        %v2194 = vpack.c.bf16 %v2158, %v2154
        %v2195 = vpack.c.bf16 %v2159, %v2155
        %v2196 = vpack.c.bf16 %v2160, %v2156
        %v2197 = vpack.c.bf16 %v2165, %v2161
        %v2198 = vpack.c.bf16 %v2166, %v2162
        %v2199 = vpack.c.bf16 %v2167, %v2163
        %v2200 = vpack.c.bf16 %v2168, %v2164
        %v2201 = vld [vmem:[#allocation5] sm:$0xff]
        %v2202 = vld [vmem:[#allocation5 + $0x8] sm:$0xff]
        %v2203 = vld [vmem:[#allocation5 + $0x10] sm:$0xff]
        %v2204 = vld [vmem:[#allocation5 + $0x18] sm:$0xff]
        %v2205 = vld [vmem:[#allocation5 + $0x20] sm:$0xff]
        %v2206 = vld [vmem:[#allocation5 + $0x28] sm:$0xff]
        %v2207 = vld [vmem:[#allocation5 + $0x30] sm:$0xff]
        %v2208 = vld [vmem:[#allocation5 + $0x38] sm:$0xff]
        %v2209 = vld [vmem:[#allocation5 + $0x40] sm:$0xff]
        %v2210 = vld [vmem:[#allocation5 + $0x48] sm:$0xff]
        %v2211 = vld [vmem:[#allocation5 + $0x50] sm:$0xff]
        %v2212 = vld [vmem:[#allocation5 + $0x58] sm:$0xff]
        %v2213 = vld [vmem:[#allocation5 + $0x60] sm:$0xff]
        %v2214 = vld [vmem:[#allocation5 + $0x68] sm:$0xff]
        %v2215 = vld [vmem:[#allocation5 + $0x70] sm:$0xff]
        %v2216 = vld [vmem:[#allocation5 + $0x78] sm:$0xff]
        %v2217 = vld [vmem:[#allocation5 + $0x80] sm:$0xff]
        %v2218 = vld [vmem:[#allocation5 + $0x88] sm:$0xff]
        %v2219 = vld [vmem:[#allocation5 + $0x90] sm:$0xff]
        %v2220 = vld [vmem:[#allocation5 + $0x98] sm:$0xff]
        %v2221 = vld [vmem:[#allocation5 + $0xa0] sm:$0xff]
        %v2222 = vld [vmem:[#allocation5 + $0xa8] sm:$0xff]
        %v2223 = vld [vmem:[#allocation5 + $0xb0] sm:$0xff]
        %v2224 = vld [vmem:[#allocation5 + $0xb8] sm:$0xff]
        %v2225 = vld [vmem:[#allocation5 + $0xc0] sm:$0xff]
        %v2226 = vld [vmem:[#allocation5 + $0xc8] sm:$0xff]
        %v2227 = vld [vmem:[#allocation5 + $0xd0] sm:$0xff]
        %v2228 = vld [vmem:[#allocation5 + $0xd8] sm:$0xff]
        %v2229 = vld [vmem:[#allocation5 + $0xe0] sm:$0xff]
        %v2230 = vld [vmem:[#allocation5 + $0xe8] sm:$0xff]
        %v2231 = vld [vmem:[#allocation5 + $0xf0] sm:$0xff]
        %v2232 = vld [vmem:[#allocation5 + $0xf8] sm:$0xff]
        %v2233 = vld [vmem:[#allocation5 + $0x100] sm:$0xff]
        %v2234 = vld [vmem:[#allocation5 + $0x108] sm:$0xff]
        %v2235 = vld [vmem:[#allocation5 + $0x110] sm:$0xff]
        %v2236 = vld [vmem:[#allocation5 + $0x118] sm:$0xff]
        %v2237 = vld [vmem:[#allocation5 + $0x120] sm:$0xff]
        %v2238 = vld [vmem:[#allocation5 + $0x128] sm:$0xff]
        %v2239 = vld [vmem:[#allocation5 + $0x130] sm:$0xff]
        %v2240 = vld [vmem:[#allocation5 + $0x138] sm:$0xff]
        %v2241 = vld [vmem:[#allocation5 + $0x140] sm:$0xff]
        %v2242 = vld [vmem:[#allocation5 + $0x148] sm:$0xff]
        %v2243 = vld [vmem:[#allocation5 + $0x150] sm:$0xff]
        %v2244 = vld [vmem:[#allocation5 + $0x158] sm:$0xff]
        %v2245 = vld [vmem:[#allocation5 + $0x160] sm:$0xff]
        %v2246 = vld [vmem:[#allocation5 + $0x168] sm:$0xff]
        %v2247 = vld [vmem:[#allocation5 + $0x170] sm:$0xff]
        %v2248 = vld [vmem:[#allocation5 + $0x178] sm:$0xff]
        %v2249 = vld [vmem:[#allocation5 + $0x180] sm:$0xff]
        %v2250 = vld [vmem:[#allocation5 + $0x188] sm:$0xff]
        %v2251 = vld [vmem:[#allocation5 + $0x190] sm:$0xff]
        %v2252 = vld [vmem:[#allocation5 + $0x198] sm:$0xff]
        %v2253 = vld [vmem:[#allocation5 + $0x1a0] sm:$0xff]
        %v2254 = vld [vmem:[#allocation5 + $0x1a8] sm:$0xff]
        %v2255 = vld [vmem:[#allocation5 + $0x1b0] sm:$0xff]
        %v2256 = vld [vmem:[#allocation5 + $0x1b8] sm:$0xff]
        %v2257 = vld [vmem:[#allocation5 + $0x1c0] sm:$0xff]
        %v2258 = vld [vmem:[#allocation5 + $0x1c8] sm:$0xff]
        %v2259 = vld [vmem:[#allocation5 + $0x1d0] sm:$0xff]
        %v2260 = vld [vmem:[#allocation5 + $0x1d8] sm:$0xff]
        %v2261 = vld [vmem:[#allocation5 + $0x1e0] sm:$0xff]
        %v2262 = vld [vmem:[#allocation5 + $0x1e8] sm:$0xff]
        %v2263 = vld [vmem:[#allocation5 + $0x1f0] sm:$0xff]
        %v2264 = vld [vmem:[#allocation5 + $0x1f8] sm:$0xff]
        %v2265 = vld [vmem:[#allocation5 + $0x200] sm:$0xff]
        %v2266 = vld [vmem:[#allocation5 + $0x208] sm:$0xff]
        %v2267 = vld [vmem:[#allocation5 + $0x210] sm:$0xff]
        %v2268 = vld [vmem:[#allocation5 + $0x218] sm:$0xff]
        %v2269 = vld [vmem:[#allocation5 + $0x220] sm:$0xff]
        %v2270 = vld [vmem:[#allocation5 + $0x228] sm:$0xff]
        %v2271 = vld [vmem:[#allocation5 + $0x230] sm:$0xff]
        %v2272 = vld [vmem:[#allocation5 + $0x238] sm:$0xff]
        %v2273 = vld [vmem:[#allocation5 + $0x240] sm:$0xff]
        %v2274 = vld [vmem:[#allocation5 + $0x248] sm:$0xff]
        %v2275 = vld [vmem:[#allocation5 + $0x250] sm:$0xff]
        %v2276 = vld [vmem:[#allocation5 + $0x258] sm:$0xff]
        %v2277 = vld [vmem:[#allocation5 + $0x260] sm:$0xff]
        %v2278 = vld [vmem:[#allocation5 + $0x268] sm:$0xff]
        %v2279 = vld [vmem:[#allocation5 + $0x270] sm:$0xff]
        %v2280 = vld [vmem:[#allocation5 + $0x278] sm:$0xff]
        %v2281 = vld [vmem:[#allocation5 + $0x280] sm:$0xff]
        %v2282 = vld [vmem:[#allocation5 + $0x288] sm:$0xff]
        %v2283 = vld [vmem:[#allocation5 + $0x290] sm:$0xff]
        %v2284 = vld [vmem:[#allocation5 + $0x298] sm:$0xff]
        %v2285 = vld [vmem:[#allocation5 + $0x2a0] sm:$0xff]
        %v2286 = vld [vmem:[#allocation5 + $0x2a8] sm:$0xff]
        %v2287 = vld [vmem:[#allocation5 + $0x2b0] sm:$0xff]
        %v2288 = vld [vmem:[#allocation5 + $0x2b8] sm:$0xff]
        %v2289 = vld [vmem:[#allocation5 + $0x2c0] sm:$0xff]
        %v2290 = vld [vmem:[#allocation5 + $0x2c8] sm:$0xff]
        %v2291 = vld [vmem:[#allocation5 + $0x2d0] sm:$0xff]
        %v2292 = vld [vmem:[#allocation5 + $0x2d8] sm:$0xff]
        %v2293 = vld [vmem:[#allocation5 + $0x2e0] sm:$0xff]
        %v2294 = vld [vmem:[#allocation5 + $0x2e8] sm:$0xff]
        %v2295 = vld [vmem:[#allocation5 + $0x2f0] sm:$0xff]
        %v2296 = vld [vmem:[#allocation5 + $0x2f8] sm:$0xff]
        %v2297 = vld [vmem:[#allocation5 + $0x300] sm:$0xff]
        %v2298 = vld [vmem:[#allocation5 + $0x308] sm:$0xff]
        %v2299 = vld [vmem:[#allocation5 + $0x310] sm:$0xff]
        %v2300 = vld [vmem:[#allocation5 + $0x318] sm:$0xff]
        %v2301 = vld [vmem:[#allocation5 + $0x320] sm:$0xff]
        %v2302 = vld [vmem:[#allocation5 + $0x328] sm:$0xff]
        %v2303 = vld [vmem:[#allocation5 + $0x330] sm:$0xff]
        %v2304 = vld [vmem:[#allocation5 + $0x338] sm:$0xff]
        %v2305 = vld [vmem:[#allocation5 + $0x340] sm:$0xff]
        %v2306 = vld [vmem:[#allocation5 + $0x348] sm:$0xff]
        %v2307 = vld [vmem:[#allocation5 + $0x350] sm:$0xff]
        %v2308 = vld [vmem:[#allocation5 + $0x358] sm:$0xff]
        %v2309 = vld [vmem:[#allocation5 + $0x360] sm:$0xff]
        %v2310 = vld [vmem:[#allocation5 + $0x368] sm:$0xff]
        %v2311 = vld [vmem:[#allocation5 + $0x370] sm:$0xff]
        %v2312 = vld [vmem:[#allocation5 + $0x378] sm:$0xff]
        %v2313 = vld [vmem:[#allocation5 + $0x380] sm:$0xff]
        %v2314 = vld [vmem:[#allocation5 + $0x388] sm:$0xff]
        %v2315 = vld [vmem:[#allocation5 + $0x390] sm:$0xff]
        %v2316 = vld [vmem:[#allocation5 + $0x398] sm:$0xff]
        %v2317 = vld [vmem:[#allocation5 + $0x3a0] sm:$0xff]
        %v2318 = vld [vmem:[#allocation5 + $0x3a8] sm:$0xff]
        %v2319 = vld [vmem:[#allocation5 + $0x3b0] sm:$0xff]
        %v2320 = vld [vmem:[#allocation5 + $0x3b8] sm:$0xff]
        %v2321 = vld [vmem:[#allocation5 + $0x3c0] sm:$0xff]
        %v2322 = vld [vmem:[#allocation5 + $0x3c8] sm:$0xff]
        %v2323 = vld [vmem:[#allocation5 + $0x3d0] sm:$0xff]
        %v2324 = vld [vmem:[#allocation5 + $0x3d8] sm:$0xff]
        %v2325 = vld [vmem:[#allocation5 + $0x3e0] sm:$0xff]
        %v2326 = vld [vmem:[#allocation5 + $0x3e8] sm:$0xff]
        %v2327 = vld [vmem:[#allocation5 + $0x3f0] sm:$0xff]
        %v2328 = vld [vmem:[#allocation5 + $0x3f8] sm:$0xff]
        %v2329 = vld [vmem:[%s6] sm:$0xf]
        %v2331 = vlaneseq
        %v2332 = vshrl.u32 %v2331, 7
        %v2333 = vsub.s32 0, %v2332
        %v2334 = vrot.slane %v2329, %v2333
        %v2335 = vlaneseq
        %v2336 = vshrl.u32 %v2335, 7
        %v2337 = vsub.s32 1, %v2336
        %v2338 = vrot.slane %v2329, %v2337
        %v2339 = vlaneseq
        %v2340 = vshrl.u32 %v2339, 7
        %v2341 = vsub.s32 2, %v2340
        %v2342 = vrot.slane %v2329, %v2341
        %v2343 = vlaneseq
        %v2344 = vshrl.u32 %v2343, 7
        %v2345 = vsub.s32 3, %v2344
        %v2346 = vrot.slane %v2329, %v2345
        %v2479 = vunpack.c.l.b16 %v2201
        %v2480 = vunpack.c.h.b16 %v2201
        %v2481 = vunpack.c.l.b16 %v2202
        %v2482 = vunpack.c.h.b16 %v2202
        %v2483 = vunpack.c.l.b16 %v2203
        %v2484 = vunpack.c.h.b16 %v2203
        %v2485 = vunpack.c.l.b16 %v2204
        %v2486 = vunpack.c.h.b16 %v2204
        %v2487 = vunpack.c.l.b16 %v2205
        %v2488 = vunpack.c.h.b16 %v2205
        %v2489 = vunpack.c.l.b16 %v2206
        %v2490 = vunpack.c.h.b16 %v2206
        %v2491 = vunpack.c.l.b16 %v2207
        %v2492 = vunpack.c.h.b16 %v2207
        %v2493 = vunpack.c.l.b16 %v2208
        %v2494 = vunpack.c.h.b16 %v2208
        %v2495 = vunpack.c.l.b16 %v2209
        %v2496 = vunpack.c.h.b16 %v2209
        %v2497 = vunpack.c.l.b16 %v2210
        %v2498 = vunpack.c.h.b16 %v2210
        %v2499 = vunpack.c.l.b16 %v2211
        %v2500 = vunpack.c.h.b16 %v2211
        %v2501 = vunpack.c.l.b16 %v2212
        %v2502 = vunpack.c.h.b16 %v2212
        %v2503 = vunpack.c.l.b16 %v2213
        %v2504 = vunpack.c.h.b16 %v2213
        %v2505 = vunpack.c.l.b16 %v2214
        %v2506 = vunpack.c.h.b16 %v2214
        %v2507 = vunpack.c.l.b16 %v2215
        %v2508 = vunpack.c.h.b16 %v2215
        %v2509 = vunpack.c.l.b16 %v2216
        %v2510 = vunpack.c.h.b16 %v2216
        %v2511 = vunpack.c.l.b16 %v2217
        %v2512 = vunpack.c.h.b16 %v2217
        %v2513 = vunpack.c.l.b16 %v2218
        %v2514 = vunpack.c.h.b16 %v2218
        %v2515 = vunpack.c.l.b16 %v2219
        %v2516 = vunpack.c.h.b16 %v2219
        %v2517 = vunpack.c.l.b16 %v2220
        %v2518 = vunpack.c.h.b16 %v2220
        %v2519 = vunpack.c.l.b16 %v2221
        %v2520 = vunpack.c.h.b16 %v2221
        %v2521 = vunpack.c.l.b16 %v2222
        %v2522 = vunpack.c.h.b16 %v2222
        %v2523 = vunpack.c.l.b16 %v2223
        %v2524 = vunpack.c.h.b16 %v2223
        %v2525 = vunpack.c.l.b16 %v2224
        %v2526 = vunpack.c.h.b16 %v2224
        %v2527 = vunpack.c.l.b16 %v2225
        %v2528 = vunpack.c.h.b16 %v2225
        %v2529 = vunpack.c.l.b16 %v2226
        %v2530 = vunpack.c.h.b16 %v2226
        %v2531 = vunpack.c.l.b16 %v2227
        %v2532 = vunpack.c.h.b16 %v2227
        %v2533 = vunpack.c.l.b16 %v2228
        %v2534 = vunpack.c.h.b16 %v2228
        %v2535 = vunpack.c.l.b16 %v2229
        %v2536 = vunpack.c.h.b16 %v2229
        %v2537 = vunpack.c.l.b16 %v2230
        %v2538 = vunpack.c.h.b16 %v2230
        %v2539 = vunpack.c.l.b16 %v2231
        %v2540 = vunpack.c.h.b16 %v2231
        %v2541 = vunpack.c.l.b16 %v2232
        %v2542 = vunpack.c.h.b16 %v2232
        %v2543 = vunpack.c.l.b16 %v2233
        %v2544 = vunpack.c.h.b16 %v2233
        %v2545 = vunpack.c.l.b16 %v2234
        %v2546 = vunpack.c.h.b16 %v2234
        %v2547 = vunpack.c.l.b16 %v2235
        %v2548 = vunpack.c.h.b16 %v2235
        %v2549 = vunpack.c.l.b16 %v2236
        %v2550 = vunpack.c.h.b16 %v2236
        %v2551 = vunpack.c.l.b16 %v2237
        %v2552 = vunpack.c.h.b16 %v2237
        %v2553 = vunpack.c.l.b16 %v2238
        %v2554 = vunpack.c.h.b16 %v2238
        %v2555 = vunpack.c.l.b16 %v2239
        %v2556 = vunpack.c.h.b16 %v2239
        %v2557 = vunpack.c.l.b16 %v2240
        %v2558 = vunpack.c.h.b16 %v2240
        %v2559 = vunpack.c.l.b16 %v2241
        %v2560 = vunpack.c.h.b16 %v2241
        %v2561 = vunpack.c.l.b16 %v2242
        %v2562 = vunpack.c.h.b16 %v2242
        %v2563 = vunpack.c.l.b16 %v2243
        %v2564 = vunpack.c.h.b16 %v2243
        %v2565 = vunpack.c.l.b16 %v2244
        %v2566 = vunpack.c.h.b16 %v2244
        %v2567 = vunpack.c.l.b16 %v2245
        %v2568 = vunpack.c.h.b16 %v2245
        %v2569 = vunpack.c.l.b16 %v2246
        %v2570 = vunpack.c.h.b16 %v2246
        %v2571 = vunpack.c.l.b16 %v2247
        %v2572 = vunpack.c.h.b16 %v2247
        %v2573 = vunpack.c.l.b16 %v2248
        %v2574 = vunpack.c.h.b16 %v2248
        %v2575 = vunpack.c.l.b16 %v2249
        %v2576 = vunpack.c.h.b16 %v2249
        %v2577 = vunpack.c.l.b16 %v2250
        %v2578 = vunpack.c.h.b16 %v2250
        %v2579 = vunpack.c.l.b16 %v2251
        %v2580 = vunpack.c.h.b16 %v2251
        %v2581 = vunpack.c.l.b16 %v2252
        %v2582 = vunpack.c.h.b16 %v2252
        %v2583 = vunpack.c.l.b16 %v2253
        %v2584 = vunpack.c.h.b16 %v2253
        %v2585 = vunpack.c.l.b16 %v2254
        %v2586 = vunpack.c.h.b16 %v2254
        %v2587 = vunpack.c.l.b16 %v2255
        %v2588 = vunpack.c.h.b16 %v2255
        %v2589 = vunpack.c.l.b16 %v2256
        %v2590 = vunpack.c.h.b16 %v2256
        %v2591 = vunpack.c.l.b16 %v2257
        %v2592 = vunpack.c.h.b16 %v2257
        %v2593 = vunpack.c.l.b16 %v2258
        %v2594 = vunpack.c.h.b16 %v2258
        %v2595 = vunpack.c.l.b16 %v2259
        %v2596 = vunpack.c.h.b16 %v2259
        %v2597 = vunpack.c.l.b16 %v2260
        %v2598 = vunpack.c.h.b16 %v2260
        %v2599 = vunpack.c.l.b16 %v2261
        %v2600 = vunpack.c.h.b16 %v2261
        %v2601 = vunpack.c.l.b16 %v2262
        %v2602 = vunpack.c.h.b16 %v2262
        %v2603 = vunpack.c.l.b16 %v2263
        %v2604 = vunpack.c.h.b16 %v2263
        %v2605 = vunpack.c.l.b16 %v2264
        %v2606 = vunpack.c.h.b16 %v2264
        %v2607 = vunpack.c.l.b16 %v2265
        %v2608 = vunpack.c.h.b16 %v2265
        %v2609 = vunpack.c.l.b16 %v2266
        %v2610 = vunpack.c.h.b16 %v2266
        %v2611 = vunpack.c.l.b16 %v2267
        %v2612 = vunpack.c.h.b16 %v2267
        %v2613 = vunpack.c.l.b16 %v2268
        %v2614 = vunpack.c.h.b16 %v2268
        %v2615 = vunpack.c.l.b16 %v2269
        %v2616 = vunpack.c.h.b16 %v2269
        %v2617 = vunpack.c.l.b16 %v2270
        %v2618 = vunpack.c.h.b16 %v2270
        %v2619 = vunpack.c.l.b16 %v2271
        %v2620 = vunpack.c.h.b16 %v2271
        %v2621 = vunpack.c.l.b16 %v2272
        %v2622 = vunpack.c.h.b16 %v2272
        %v2623 = vunpack.c.l.b16 %v2273
        %v2624 = vunpack.c.h.b16 %v2273
        %v2625 = vunpack.c.l.b16 %v2274
        %v2626 = vunpack.c.h.b16 %v2274
        %v2627 = vunpack.c.l.b16 %v2275
        %v2628 = vunpack.c.h.b16 %v2275
        %v2629 = vunpack.c.l.b16 %v2276
        %v2630 = vunpack.c.h.b16 %v2276
        %v2631 = vunpack.c.l.b16 %v2277
        %v2632 = vunpack.c.h.b16 %v2277
        %v2633 = vunpack.c.l.b16 %v2278
        %v2634 = vunpack.c.h.b16 %v2278
        %v2635 = vunpack.c.l.b16 %v2279
        %v2636 = vunpack.c.h.b16 %v2279
        %v2637 = vunpack.c.l.b16 %v2280
        %v2638 = vunpack.c.h.b16 %v2280
        %v2639 = vunpack.c.l.b16 %v2281
        %v2640 = vunpack.c.h.b16 %v2281
        %v2641 = vunpack.c.l.b16 %v2282
        %v2642 = vunpack.c.h.b16 %v2282
        %v2643 = vunpack.c.l.b16 %v2283
        %v2644 = vunpack.c.h.b16 %v2283
        %v2645 = vunpack.c.l.b16 %v2284
        %v2646 = vunpack.c.h.b16 %v2284
        %v2647 = vunpack.c.l.b16 %v2285
        %v2648 = vunpack.c.h.b16 %v2285
        %v2649 = vunpack.c.l.b16 %v2286
        %v2650 = vunpack.c.h.b16 %v2286
        %v2651 = vunpack.c.l.b16 %v2287
        %v2652 = vunpack.c.h.b16 %v2287
        %v2653 = vunpack.c.l.b16 %v2288
        %v2654 = vunpack.c.h.b16 %v2288
        %v2655 = vunpack.c.l.b16 %v2289
        %v2656 = vunpack.c.h.b16 %v2289
        %v2657 = vunpack.c.l.b16 %v2290
        %v2658 = vunpack.c.h.b16 %v2290
        %v2659 = vunpack.c.l.b16 %v2291
        %v2660 = vunpack.c.h.b16 %v2291
        %v2661 = vunpack.c.l.b16 %v2292
        %v2662 = vunpack.c.h.b16 %v2292
        %v2663 = vunpack.c.l.b16 %v2293
        %v2664 = vunpack.c.h.b16 %v2293
        %v2665 = vunpack.c.l.b16 %v2294
        %v2666 = vunpack.c.h.b16 %v2294
        %v2667 = vunpack.c.l.b16 %v2295
        %v2668 = vunpack.c.h.b16 %v2295
        %v2669 = vunpack.c.l.b16 %v2296
        %v2670 = vunpack.c.h.b16 %v2296
        %v2671 = vunpack.c.l.b16 %v2297
        %v2672 = vunpack.c.h.b16 %v2297
        %v2673 = vunpack.c.l.b16 %v2298
        %v2674 = vunpack.c.h.b16 %v2298
        %v2675 = vunpack.c.l.b16 %v2299
        %v2676 = vunpack.c.h.b16 %v2299
        %v2677 = vunpack.c.l.b16 %v2300
        %v2678 = vunpack.c.h.b16 %v2300
        %v2679 = vunpack.c.l.b16 %v2301
        %v2680 = vunpack.c.h.b16 %v2301
        %v2681 = vunpack.c.l.b16 %v2302
        %v2682 = vunpack.c.h.b16 %v2302
        %v2683 = vunpack.c.l.b16 %v2303
        %v2684 = vunpack.c.h.b16 %v2303
        %v2685 = vunpack.c.l.b16 %v2304
        %v2686 = vunpack.c.h.b16 %v2304
        %v2687 = vunpack.c.l.b16 %v2305
        %v2688 = vunpack.c.h.b16 %v2305
        %v2689 = vunpack.c.l.b16 %v2306
        %v2690 = vunpack.c.h.b16 %v2306
        %v2691 = vunpack.c.l.b16 %v2307
        %v2692 = vunpack.c.h.b16 %v2307
        %v2693 = vunpack.c.l.b16 %v2308
        %v2694 = vunpack.c.h.b16 %v2308
        %v2695 = vunpack.c.l.b16 %v2309
        %v2696 = vunpack.c.h.b16 %v2309
        %v2697 = vunpack.c.l.b16 %v2310
        %v2698 = vunpack.c.h.b16 %v2310
        %v2699 = vunpack.c.l.b16 %v2311
        %v2700 = vunpack.c.h.b16 %v2311
        %v2701 = vunpack.c.l.b16 %v2312
        %v2702 = vunpack.c.h.b16 %v2312
        %v2703 = vunpack.c.l.b16 %v2313
        %v2704 = vunpack.c.h.b16 %v2313
        %v2705 = vunpack.c.l.b16 %v2314
        %v2706 = vunpack.c.h.b16 %v2314
        %v2707 = vunpack.c.l.b16 %v2315
        %v2708 = vunpack.c.h.b16 %v2315
        %v2709 = vunpack.c.l.b16 %v2316
        %v2710 = vunpack.c.h.b16 %v2316
        %v2711 = vunpack.c.l.b16 %v2317
        %v2712 = vunpack.c.h.b16 %v2317
        %v2713 = vunpack.c.l.b16 %v2318
        %v2714 = vunpack.c.h.b16 %v2318
        %v2715 = vunpack.c.l.b16 %v2319
        %v2716 = vunpack.c.h.b16 %v2319
        %v2717 = vunpack.c.l.b16 %v2320
        %v2718 = vunpack.c.h.b16 %v2320
        %v2719 = vunpack.c.l.b16 %v2321
        %v2720 = vunpack.c.h.b16 %v2321
        %v2721 = vunpack.c.l.b16 %v2322
        %v2722 = vunpack.c.h.b16 %v2322
        %v2723 = vunpack.c.l.b16 %v2323
        %v2724 = vunpack.c.h.b16 %v2323
        %v2725 = vunpack.c.l.b16 %v2324
        %v2726 = vunpack.c.h.b16 %v2324
        %v2727 = vunpack.c.l.b16 %v2325
        %v2728 = vunpack.c.h.b16 %v2325
        %v2729 = vunpack.c.l.b16 %v2326
        %v2730 = vunpack.c.h.b16 %v2326
        %v2731 = vunpack.c.l.b16 %v2327
        %v2732 = vunpack.c.h.b16 %v2327
        %v2733 = vunpack.c.l.b16 %v2328
        %v2734 = vunpack.c.h.b16 %v2328
        %v2735 = vpack.c.b16 %v2483, %v2479
        %v2736 = vpack.c.b16 %v2484, %v2480
        %v2737 = vpack.c.b16 %v2485, %v2481
        %v2738 = vpack.c.b16 %v2486, %v2482
        %v2739 = vpack.c.b16 %v2491, %v2487
        %v2740 = vpack.c.b16 %v2492, %v2488
        %v2741 = vpack.c.b16 %v2493, %v2489
        %v2742 = vpack.c.b16 %v2494, %v2490
        %v2743 = vpack.c.b16 %v2499, %v2495
        %v2744 = vpack.c.b16 %v2500, %v2496
        %v2745 = vpack.c.b16 %v2501, %v2497
        %v2746 = vpack.c.b16 %v2502, %v2498
        %v2747 = vpack.c.b16 %v2507, %v2503
        %v2748 = vpack.c.b16 %v2508, %v2504
        %v2749 = vpack.c.b16 %v2509, %v2505
        %v2750 = vpack.c.b16 %v2510, %v2506
        %v2751 = vpack.c.b16 %v2515, %v2511
        %v2752 = vpack.c.b16 %v2516, %v2512
        %v2753 = vpack.c.b16 %v2517, %v2513
        %v2754 = vpack.c.b16 %v2518, %v2514
        %v2755 = vpack.c.b16 %v2523, %v2519
        %v2756 = vpack.c.b16 %v2524, %v2520
        %v2757 = vpack.c.b16 %v2525, %v2521
        %v2758 = vpack.c.b16 %v2526, %v2522
        %v2759 = vpack.c.b16 %v2531, %v2527
        %v2760 = vpack.c.b16 %v2532, %v2528
        %v2761 = vpack.c.b16 %v2533, %v2529
        %v2762 = vpack.c.b16 %v2534, %v2530
        %v2763 = vpack.c.b16 %v2539, %v2535
        %v2764 = vpack.c.b16 %v2540, %v2536
        %v2765 = vpack.c.b16 %v2541, %v2537
        %v2766 = vpack.c.b16 %v2542, %v2538
        %v2767 = vpack.c.b16 %v2547, %v2543
        %v2768 = vpack.c.b16 %v2548, %v2544
        %v2769 = vpack.c.b16 %v2549, %v2545
        %v2770 = vpack.c.b16 %v2550, %v2546
        %v2771 = vpack.c.b16 %v2555, %v2551
        %v2772 = vpack.c.b16 %v2556, %v2552
        %v2773 = vpack.c.b16 %v2557, %v2553
        %v2774 = vpack.c.b16 %v2558, %v2554
        %v2775 = vpack.c.b16 %v2563, %v2559
        %v2776 = vpack.c.b16 %v2564, %v2560
        %v2777 = vpack.c.b16 %v2565, %v2561
        %v2778 = vpack.c.b16 %v2566, %v2562
        %v2779 = vpack.c.b16 %v2571, %v2567
        %v2780 = vpack.c.b16 %v2572, %v2568
        %v2781 = vpack.c.b16 %v2573, %v2569
        %v2782 = vpack.c.b16 %v2574, %v2570
        %v2783 = vpack.c.b16 %v2579, %v2575
        %v2784 = vpack.c.b16 %v2580, %v2576
        %v2785 = vpack.c.b16 %v2581, %v2577
        %v2786 = vpack.c.b16 %v2582, %v2578
        %v2787 = vpack.c.b16 %v2587, %v2583
        %v2788 = vpack.c.b16 %v2588, %v2584
        %v2789 = vpack.c.b16 %v2589, %v2585
        %v2790 = vpack.c.b16 %v2590, %v2586
        %v2791 = vpack.c.b16 %v2595, %v2591
        %v2792 = vpack.c.b16 %v2596, %v2592
        %v2793 = vpack.c.b16 %v2597, %v2593
        %v2794 = vpack.c.b16 %v2598, %v2594
        %v2795 = vpack.c.b16 %v2603, %v2599
        %v2796 = vpack.c.b16 %v2604, %v2600
        %v2797 = vpack.c.b16 %v2605, %v2601
        %v2798 = vpack.c.b16 %v2606, %v2602
        %v2799 = vpack.c.b16 %v2611, %v2607
        %v2800 = vpack.c.b16 %v2612, %v2608
        %v2801 = vpack.c.b16 %v2613, %v2609
        %v2802 = vpack.c.b16 %v2614, %v2610
        %v2803 = vpack.c.b16 %v2619, %v2615
        %v2804 = vpack.c.b16 %v2620, %v2616
        %v2805 = vpack.c.b16 %v2621, %v2617
        %v2806 = vpack.c.b16 %v2622, %v2618
        %v2807 = vpack.c.b16 %v2627, %v2623
        %v2808 = vpack.c.b16 %v2628, %v2624
        %v2809 = vpack.c.b16 %v2629, %v2625
        %v2810 = vpack.c.b16 %v2630, %v2626
        %v2811 = vpack.c.b16 %v2635, %v2631
        %v2812 = vpack.c.b16 %v2636, %v2632
        %v2813 = vpack.c.b16 %v2637, %v2633
        %v2814 = vpack.c.b16 %v2638, %v2634
        %v2815 = vpack.c.b16 %v2643, %v2639
        %v2816 = vpack.c.b16 %v2644, %v2640
        %v2817 = vpack.c.b16 %v2645, %v2641
        %v2818 = vpack.c.b16 %v2646, %v2642
        %v2819 = vpack.c.b16 %v2651, %v2647
        %v2820 = vpack.c.b16 %v2652, %v2648
        %v2821 = vpack.c.b16 %v2653, %v2649
        %v2822 = vpack.c.b16 %v2654, %v2650
        %v2823 = vpack.c.b16 %v2659, %v2655
        %v2824 = vpack.c.b16 %v2660, %v2656
        %v2825 = vpack.c.b16 %v2661, %v2657
        %v2826 = vpack.c.b16 %v2662, %v2658
        %v2827 = vpack.c.b16 %v2667, %v2663
        %v2828 = vpack.c.b16 %v2668, %v2664
        %v2829 = vpack.c.b16 %v2669, %v2665
        %v2830 = vpack.c.b16 %v2670, %v2666
        %v2831 = vpack.c.b16 %v2675, %v2671
        %v2832 = vpack.c.b16 %v2676, %v2672
        %v2833 = vpack.c.b16 %v2677, %v2673
        %v2834 = vpack.c.b16 %v2678, %v2674
        %v2835 = vpack.c.b16 %v2683, %v2679
        %v2836 = vpack.c.b16 %v2684, %v2680
        %v2837 = vpack.c.b16 %v2685, %v2681
        %v2838 = vpack.c.b16 %v2686, %v2682
        %v2839 = vpack.c.b16 %v2691, %v2687
        %v2840 = vpack.c.b16 %v2692, %v2688
        %v2841 = vpack.c.b16 %v2693, %v2689
        %v2842 = vpack.c.b16 %v2694, %v2690
        %v2843 = vpack.c.b16 %v2699, %v2695
        %v2844 = vpack.c.b16 %v2700, %v2696
        %v2845 = vpack.c.b16 %v2701, %v2697
        %v2846 = vpack.c.b16 %v2702, %v2698
        %v2847 = vpack.c.b16 %v2707, %v2703
        %v2848 = vpack.c.b16 %v2708, %v2704
        %v2849 = vpack.c.b16 %v2709, %v2705
        %v2850 = vpack.c.b16 %v2710, %v2706
        %v2851 = vpack.c.b16 %v2715, %v2711
        %v2852 = vpack.c.b16 %v2716, %v2712
        %v2853 = vpack.c.b16 %v2717, %v2713
        %v2854 = vpack.c.b16 %v2718, %v2714
        %v2855 = vpack.c.b16 %v2723, %v2719
        %v2856 = vpack.c.b16 %v2724, %v2720
        %v2857 = vpack.c.b16 %v2725, %v2721
        %v2858 = vpack.c.b16 %v2726, %v2722
        %v2859 = vpack.c.b16 %v2731, %v2727
        %v2860 = vpack.c.b16 %v2732, %v2728
        %v2861 = vpack.c.b16 %v2733, %v2729
        %v2862 = vpack.c.b16 %v2734, %v2730
        %2991 = vmatprep.subr.bf16.mxu0 %v2736
        %2992 = vmatpush1.bf16.msra.mxu0 %v2735
        %2993 = vmatprep.subr.bf16.mxu0 %v2740
        %2994 = vmatpush1.bf16.msra.mxu0 %v2739
        %2995 = vmatprep.subr.bf16.mxu0 %v2744
        %2996 = vmatpush1.bf16.msra.mxu0 %v2743
        %2997 = vmatprep.subr.bf16.mxu0 %v2748
        %2998 = vmatpush1.bf16.msra.mxu0 %v2747
        %2999 = vmatprep.subr.bf16.mxu0 %v2752
        %3000 = vmatpush1.bf16.msra.mxu0 %v2751
        %3001 = vmatprep.subr.bf16.mxu0 %v2756
        %3002 = vmatpush1.bf16.msra.mxu0 %v2755
        %3003 = vmatprep.subr.bf16.mxu0 %v2760
        %3004 = vmatpush1.bf16.msra.mxu0 %v2759
        %3005 = vmatprep.subr.bf16.mxu0 %v2764
        %3006 = vmatpush1.bf16.msra.mxu0 %v2763
        %3007 = vmatprep.subr.bf16.mxu0 %v2768
        %3008 = vmatpush1.bf16.msra.mxu0 %v2767
        %3009 = vmatprep.subr.bf16.mxu0 %v2772
        %3010 = vmatpush1.bf16.msra.mxu0 %v2771
        %3011 = vmatprep.subr.bf16.mxu0 %v2776
        %3012 = vmatpush1.bf16.msra.mxu0 %v2775
        %3013 = vmatprep.subr.bf16.mxu0 %v2780
        %3014 = vmatpush1.bf16.msra.mxu0 %v2779
        %3015 = vmatprep.subr.bf16.mxu0 %v2784
        %3016 = vmatpush1.bf16.msra.mxu0 %v2783
        %3017 = vmatprep.subr.bf16.mxu0 %v2788
        %3018 = vmatpush1.bf16.msra.mxu0 %v2787
        %3019 = vmatprep.subr.bf16.mxu0 %v2792
        %3020 = vmatpush1.bf16.msra.mxu0 %v2791
        %3021 = vmatprep.subr.bf16.mxu0 %v2796
        %3022 = vmatpush1.bf16.msra.mxu0 %v2795
        %3023 = vmatprep.mubr.bf16.mxu0 %v2170
        %3024 = vmatmul.mubr.bf16.gmra.mrb[0].mxu0 %v2169
        %v3025 = vpop.f32.mrb[0].mxu0
        %v3026 = vadd.f32 %v2334, %v3025
        %v3027 = vpop.f32.mrb[0].mxu0
        %v3028 = vadd.f32 %v2338, %v3027
        %v3029 = vpop.f32.mrb[0].mxu0
        %v3030 = vadd.f32 %v2334, %v3029
        %v3031 = vpop.f32.mrb[0].mxu0
        %v3032 = vadd.f32 %v2338, %v3031
        %3033 = vmatprep.mubr.bf16.mxu0 %v2174
        %3034 = vmatmul.mubr.bf16.gmra.mrb[0].mxu0 %v2173
        %v3035 = vpop.f32.mrb[0].mxu0
        %v3036 = vadd.f32 %v2334, %v3035
        %v3037 = vpop.f32.mrb[0].mxu0
        %v3038 = vadd.f32 %v2338, %v3037
        %v3039 = vpop.f32.mrb[0].mxu0
        %v3040 = vadd.f32 %v2334, %v3039
        %v3041 = vpop.f32.mrb[0].mxu0
        %v3042 = vadd.f32 %v2338, %v3041
        %3043 = vmatprep.mubr.bf16.mxu0 %v2178
        %3044 = vmatmul.mubr.bf16.gmra.mrb[0].mxu0 %v2177
        %v3045 = vpop.f32.mrb[0].mxu0
        %v3046 = vadd.f32 %v2334, %v3045
        %v3047 = vpop.f32.mrb[0].mxu0
        %v3048 = vadd.f32 %v2338, %v3047
        %v3049 = vpop.f32.mrb[0].mxu0
        %v3050 = vadd.f32 %v2334, %v3049
        %v3051 = vpop.f32.mrb[0].mxu0
        %v3052 = vadd.f32 %v2338, %v3051
        %3053 = vmatprep.mubr.bf16.mxu0 %v2182
        %3054 = vmatmul.mubr.bf16.gmra.mrb[0].mxu0 %v2181
        %v3055 = vpop.f32.mrb[0].mxu0
        %v3056 = vadd.f32 %v2334, %v3055
        %v3057 = vpop.f32.mrb[0].mxu0
        %v3058 = vadd.f32 %v2338, %v3057
        %v3059 = vpop.f32.mrb[0].mxu0
        %v3060 = vadd.f32 %v2334, %v3059
        %v3061 = vpop.f32.mrb[0].mxu0
        %v3062 = vadd.f32 %v2338, %v3061
        %3063 = vmatprep.mubr.bf16.mxu0 %v2186
        %3064 = vmatmul.mubr.bf16.gmra.mrb[0].mxu0 %v2185
        %v3065 = vpop.f32.mrb[0].mxu0
        %v3066 = vadd.f32 %v2334, %v3065
        %v3067 = vpop.f32.mrb[0].mxu0
        %v3068 = vadd.f32 %v2338, %v3067
        %v3069 = vpop.f32.mrb[0].mxu0
        %v3070 = vadd.f32 %v2334, %v3069
        %v3071 = vpop.f32.mrb[0].mxu0
        %v3072 = vadd.f32 %v2338, %v3071
        %3073 = vmatprep.mubr.bf16.mxu0 %v2190
        %3074 = vmatmul.mubr.bf16.gmra.mrb[0].mxu0 %v2189
        %v3075 = vpop.f32.mrb[0].mxu0
        %v3076 = vadd.f32 %v2334, %v3075
        %v3077 = vpop.f32.mrb[0].mxu0
        %v3078 = vadd.f32 %v2338, %v3077
        %v3079 = vpop.f32.mrb[0].mxu0
        %v3080 = vadd.f32 %v2334, %v3079
        %v3081 = vpop.f32.mrb[0].mxu0
        %v3082 = vadd.f32 %v2338, %v3081
        %3083 = vmatprep.mubr.bf16.mxu0 %v2194
        %3084 = vmatmul.mubr.bf16.gmra.mrb[0].mxu0 %v2193
        %v3085 = vpop.f32.mrb[0].mxu0
        %v3086 = vadd.f32 %v2334, %v3085
        %v3087 = vpop.f32.mrb[0].mxu0
        %v3088 = vadd.f32 %v2338, %v3087
        %v3089 = vpop.f32.mrb[0].mxu0
        %v3090 = vadd.f32 %v2334, %v3089
        %v3091 = vpop.f32.mrb[0].mxu0
        %v3092 = vadd.f32 %v2338, %v3091
        %3093 = vmatprep.mubr.bf16.mxu0 %v2198
        %3094 = vmatmul.mubr.bf16.gmra.mrb[0].mxu0 %v2197
        %v3095 = vpop.f32.mrb[0].mxu0
        %v3096 = vadd.f32 %v2334, %v3095
        %v3097 = vpop.f32.mrb[0].mxu0
        %v3098 = vadd.f32 %v2338, %v3097
        %v3099 = vpop.f32.mrb[0].mxu0
        %v3100 = vadd.f32 %v2334, %v3099
        %v3101 = vpop.f32.mrb[0].mxu0
        %v3102 = vadd.f32 %v2338, %v3101
        %3103 = vdwg.mxu0
        %3104 = vmatprep.subr.bf16.mxu0 %v2800
        %3105 = vmatpush1.bf16.msra.mxu0 %v2799
        %3106 = vmatprep.subr.bf16.mxu0 %v2804
        %3107 = vmatpush1.bf16.msra.mxu0 %v2803
        %3108 = vmatprep.subr.bf16.mxu0 %v2808
        %3109 = vmatpush1.bf16.msra.mxu0 %v2807
        %3110 = vmatprep.subr.bf16.mxu0 %v2812
        %3111 = vmatpush1.bf16.msra.mxu0 %v2811
        %3112 = vmatprep.subr.bf16.mxu0 %v2816
        %3113 = vmatpush1.bf16.msra.mxu0 %v2815
        %3114 = vmatprep.subr.bf16.mxu0 %v2820
        %3115 = vmatpush1.bf16.msra.mxu0 %v2819
        %3116 = vmatprep.subr.bf16.mxu0 %v2824
        %3117 = vmatpush1.bf16.msra.mxu0 %v2823
        %3118 = vmatprep.subr.bf16.mxu0 %v2828
        %3119 = vmatpush1.bf16.msra.mxu0 %v2827
        %3120 = vmatprep.subr.bf16.mxu0 %v2832
        %3121 = vmatpush1.bf16.msra.mxu0 %v2831
        %3122 = vmatprep.subr.bf16.mxu0 %v2836
        %3123 = vmatpush1.bf16.msra.mxu0 %v2835
        %3124 = vmatprep.subr.bf16.mxu0 %v2840
        %3125 = vmatpush1.bf16.msra.mxu0 %v2839
        %3126 = vmatprep.subr.bf16.mxu0 %v2844
        %3127 = vmatpush1.bf16.msra.mxu0 %v2843
        %3128 = vmatprep.subr.bf16.mxu0 %v2848
        %3129 = vmatpush1.bf16.msra.mxu0 %v2847
        %3130 = vmatprep.subr.bf16.mxu0 %v2852
        %3131 = vmatpush1.bf16.msra.mxu0 %v2851
        %3132 = vmatprep.subr.bf16.mxu0 %v2856
        %3133 = vmatpush1.bf16.msra.mxu0 %v2855
        %3134 = vmatprep.subr.bf16.mxu0 %v2860
        %3135 = vmatpush1.bf16.msra.mxu0 %v2859
        %3136 = vmatprep.mubr.bf16.mxu0 %v2172
        %3137 = vmatmul.mubr.bf16.gmra.mrb[0].mxu0 %v2171
        %v3138 = vpop.f32.mrb[0].mxu0
        %v3139 = vadd.f32 %v3026, %v3138
        %v3140 = vpop.f32.mrb[0].mxu0
        %v3141 = vadd.f32 %v3028, %v3140
        %v3142 = vpop.f32.mrb[0].mxu0
        %v3143 = vadd.f32 %v3030, %v3142
        %v3144 = vpop.f32.mrb[0].mxu0
        %v3145 = vadd.f32 %v3032, %v3144
        %3146 = vmatprep.mubr.bf16.mxu0 %v2176
        %3147 = vmatmul.mubr.bf16.gmra.mrb[0].mxu0 %v2175
        %v3148 = vpop.f32.mrb[0].mxu0
        %v3149 = vadd.f32 %v3036, %v3148
        %v3150 = vpop.f32.mrb[0].mxu0
        %v3151 = vadd.f32 %v3038, %v3150
        %v3152 = vpop.f32.mrb[0].mxu0
        %v3153 = vadd.f32 %v3040, %v3152
        %v3154 = vpop.f32.mrb[0].mxu0
        %v3155 = vadd.f32 %v3042, %v3154
        %3156 = vmatprep.mubr.bf16.mxu0 %v2180
        %3157 = vmatmul.mubr.bf16.gmra.mrb[0].mxu0 %v2179
        %v3158 = vpop.f32.mrb[0].mxu0
        %v3159 = vadd.f32 %v3046, %v3158
        %v3160 = vpop.f32.mrb[0].mxu0
        %v3161 = vadd.f32 %v3048, %v3160
        %v3162 = vpop.f32.mrb[0].mxu0
        %v3163 = vadd.f32 %v3050, %v3162
        %v3164 = vpop.f32.mrb[0].mxu0
        %v3165 = vadd.f32 %v3052, %v3164
        %3166 = vmatprep.mubr.bf16.mxu0 %v2184
        %3167 = vmatmul.mubr.bf16.gmra.mrb[0].mxu0 %v2183
        %v3168 = vpop.f32.mrb[0].mxu0
        %v3169 = vadd.f32 %v3056, %v3168
        %v3170 = vpop.f32.mrb[0].mxu0
        %v3171 = vadd.f32 %v3058, %v3170
        %v3172 = vpop.f32.mrb[0].mxu0
        %v3173 = vadd.f32 %v3060, %v3172
        %v3174 = vpop.f32.mrb[0].mxu0
        %v3175 = vadd.f32 %v3062, %v3174
        %3176 = vmatprep.mubr.bf16.mxu0 %v2188
        %3177 = vmatmul.mubr.bf16.gmra.mrb[0].mxu0 %v2187
        %v3178 = vpop.f32.mrb[0].mxu0
        %v3179 = vadd.f32 %v3066, %v3178
        %v3180 = vpop.f32.mrb[0].mxu0
        %v3181 = vadd.f32 %v3068, %v3180
        %v3182 = vpop.f32.mrb[0].mxu0
        %v3183 = vadd.f32 %v3070, %v3182
        %v3184 = vpop.f32.mrb[0].mxu0
        %v3185 = vadd.f32 %v3072, %v3184
        %3186 = vmatprep.mubr.bf16.mxu0 %v2192
        %3187 = vmatmul.mubr.bf16.gmra.mrb[0].mxu0 %v2191
        %v3188 = vpop.f32.mrb[0].mxu0
        %v3189 = vadd.f32 %v3076, %v3188
        %v3190 = vpop.f32.mrb[0].mxu0
        %v3191 = vadd.f32 %v3078, %v3190
        %v3192 = vpop.f32.mrb[0].mxu0
        %v3193 = vadd.f32 %v3080, %v3192
        %v3194 = vpop.f32.mrb[0].mxu0
        %v3195 = vadd.f32 %v3082, %v3194
        %3196 = vmatprep.mubr.bf16.mxu0 %v2196
        %3197 = vmatmul.mubr.bf16.gmra.mrb[0].mxu0 %v2195
        %v3198 = vpop.f32.mrb[0].mxu0
        %v3199 = vadd.f32 %v3086, %v3198
        %v3200 = vpop.f32.mrb[0].mxu0
        %v3201 = vadd.f32 %v3088, %v3200
        %v3202 = vpop.f32.mrb[0].mxu0
        %v3203 = vadd.f32 %v3090, %v3202
        %v3204 = vpop.f32.mrb[0].mxu0
        %v3205 = vadd.f32 %v3092, %v3204
        %3206 = vmatprep.mubr.bf16.mxu0 %v2200
        %3207 = vmatmul.mubr.bf16.gmra.mrb[0].mxu0 %v2199
        %v3208 = vpop.f32.mrb[0].mxu0
        %v3209 = vadd.f32 %v3096, %v3208
        %v3210 = vpop.f32.mrb[0].mxu0
        %v3211 = vadd.f32 %v3098, %v3210
        %v3212 = vpop.f32.mrb[0].mxu0
        %v3213 = vadd.f32 %v3100, %v3212
        %v3214 = vpop.f32.mrb[0].mxu0
        %v3215 = vadd.f32 %v3102, %v3214
        %3216 = vdwg.mxu0
        %3217 = vmatprep.subr.bf16.mxu0 %v2738
        %3218 = vmatpush1.bf16.msra.mxu0 %v2737
        %3219 = vmatprep.subr.bf16.mxu0 %v2742
        %3220 = vmatpush1.bf16.msra.mxu0 %v2741
        %3221 = vmatprep.subr.bf16.mxu0 %v2746
        %3222 = vmatpush1.bf16.msra.mxu0 %v2745
        %3223 = vmatprep.subr.bf16.mxu0 %v2750
        %3224 = vmatpush1.bf16.msra.mxu0 %v2749
        %3225 = vmatprep.subr.bf16.mxu0 %v2754
        %3226 = vmatpush1.bf16.msra.mxu0 %v2753
        %3227 = vmatprep.subr.bf16.mxu0 %v2758
        %3228 = vmatpush1.bf16.msra.mxu0 %v2757
        %3229 = vmatprep.subr.bf16.mxu0 %v2762
        %3230 = vmatpush1.bf16.msra.mxu0 %v2761
        %3231 = vmatprep.subr.bf16.mxu0 %v2766
        %3232 = vmatpush1.bf16.msra.mxu0 %v2765
        %3233 = vmatprep.subr.bf16.mxu0 %v2770
        %3234 = vmatpush1.bf16.msra.mxu0 %v2769
        %3235 = vmatprep.subr.bf16.mxu0 %v2774
        %3236 = vmatpush1.bf16.msra.mxu0 %v2773
        %3237 = vmatprep.subr.bf16.mxu0 %v2778
        %3238 = vmatpush1.bf16.msra.mxu0 %v2777
        %3239 = vmatprep.subr.bf16.mxu0 %v2782
        %3240 = vmatpush1.bf16.msra.mxu0 %v2781
        %3241 = vmatprep.subr.bf16.mxu0 %v2786
        %3242 = vmatpush1.bf16.msra.mxu0 %v2785
        %3243 = vmatprep.subr.bf16.mxu0 %v2790
        %3244 = vmatpush1.bf16.msra.mxu0 %v2789
        %3245 = vmatprep.subr.bf16.mxu0 %v2794
        %3246 = vmatpush1.bf16.msra.mxu0 %v2793
        %3247 = vmatprep.subr.bf16.mxu0 %v2798
        %3248 = vmatpush1.bf16.msra.mxu0 %v2797
        %3249 = vmatprep.mubr.bf16.mxu0 %v2170
        %3250 = vmatmul.mubr.bf16.gmra.mrb[0].mxu0 %v2169
        %v3251 = vpop.f32.mrb[0].mxu0
        %v3252 = vadd.f32 %v2342, %v3251
        %v3253 = vpop.f32.mrb[0].mxu0
        %v3254 = vadd.f32 %v2346, %v3253
        %v3255 = vpop.f32.mrb[0].mxu0
        %v3256 = vadd.f32 %v2342, %v3255
        %v3257 = vpop.f32.mrb[0].mxu0
        %v3258 = vadd.f32 %v2346, %v3257
        %3259 = vmatprep.mubr.bf16.mxu0 %v2174
        %3260 = vmatmul.mubr.bf16.gmra.mrb[0].mxu0 %v2173
        %v3261 = vpop.f32.mrb[0].mxu0
        %v3262 = vadd.f32 %v2342, %v3261
        %v3263 = vpop.f32.mrb[0].mxu0
        %v3264 = vadd.f32 %v2346, %v3263
        %v3265 = vpop.f32.mrb[0].mxu0
        %v3266 = vadd.f32 %v2342, %v3265
        %v3267 = vpop.f32.mrb[0].mxu0
        %v3268 = vadd.f32 %v2346, %v3267
        %3269 = vmatprep.mubr.bf16.mxu0 %v2178
        %3270 = vmatmul.mubr.bf16.gmra.mrb[0].mxu0 %v2177
        %v3271 = vpop.f32.mrb[0].mxu0
        %v3272 = vadd.f32 %v2342, %v3271
        %v3273 = vpop.f32.mrb[0].mxu0
        %v3274 = vadd.f32 %v2346, %v3273
        %v3275 = vpop.f32.mrb[0].mxu0
        %v3276 = vadd.f32 %v2342, %v3275
        %v3277 = vpop.f32.mrb[0].mxu0
        %v3278 = vadd.f32 %v2346, %v3277
        %3279 = vmatprep.mubr.bf16.mxu0 %v2182
        %3280 = vmatmul.mubr.bf16.gmra.mrb[0].mxu0 %v2181
        %v3281 = vpop.f32.mrb[0].mxu0
        %v3282 = vadd.f32 %v2342, %v3281
        %v3283 = vpop.f32.mrb[0].mxu0
        %v3284 = vadd.f32 %v2346, %v3283
        %v3285 = vpop.f32.mrb[0].mxu0
        %v3286 = vadd.f32 %v2342, %v3285
        %v3287 = vpop.f32.mrb[0].mxu0
        %v3288 = vadd.f32 %v2346, %v3287
        %3289 = vmatprep.mubr.bf16.mxu0 %v2186
        %3290 = vmatmul.mubr.bf16.gmra.mrb[0].mxu0 %v2185
        %v3291 = vpop.f32.mrb[0].mxu0
        %v3292 = vadd.f32 %v2342, %v3291
        %v3293 = vpop.f32.mrb[0].mxu0
        %v3294 = vadd.f32 %v2346, %v3293
        %v3295 = vpop.f32.mrb[0].mxu0
        %v3296 = vadd.f32 %v2342, %v3295
        %v3297 = vpop.f32.mrb[0].mxu0
        %v3298 = vadd.f32 %v2346, %v3297
        %3299 = vmatprep.mubr.bf16.mxu0 %v2190
        %3300 = vmatmul.mubr.bf16.gmra.mrb[0].mxu0 %v2189
        %v3301 = vpop.f32.mrb[0].mxu0
        %v3302 = vadd.f32 %v2342, %v3301
        %v3303 = vpop.f32.mrb[0].mxu0
        %v3304 = vadd.f32 %v2346, %v3303
        %v3305 = vpop.f32.mrb[0].mxu0
        %v3306 = vadd.f32 %v2342, %v3305
        %v3307 = vpop.f32.mrb[0].mxu0
        %v3308 = vadd.f32 %v2346, %v3307
        %3309 = vmatprep.mubr.bf16.mxu0 %v2194
        %3310 = vmatmul.mubr.bf16.gmra.mrb[0].mxu0 %v2193
        %v3311 = vpop.f32.mrb[0].mxu0
        %v3312 = vadd.f32 %v2342, %v3311
        %v3313 = vpop.f32.mrb[0].mxu0
        %v3314 = vadd.f32 %v2346, %v3313
        %v3315 = vpop.f32.mrb[0].mxu0
        %v3316 = vadd.f32 %v2342, %v3315
        %v3317 = vpop.f32.mrb[0].mxu0
        %v3318 = vadd.f32 %v2346, %v3317
        %3319 = vmatprep.mubr.bf16.mxu0 %v2198
        %3320 = vmatmul.mubr.bf16.gmra.mrb[0].mxu0 %v2197
        %v3321 = vpop.f32.mrb[0].mxu0
        %v3322 = vadd.f32 %v2342, %v3321
        %v3323 = vpop.f32.mrb[0].mxu0
        %v3324 = vadd.f32 %v2346, %v3323
        %v3325 = vpop.f32.mrb[0].mxu0
        %v3326 = vadd.f32 %v2342, %v3325
        %v3327 = vpop.f32.mrb[0].mxu0
        %v3328 = vadd.f32 %v2346, %v3327
        %3329 = vdwg.mxu0
        %3330 = vmatprep.subr.bf16.mxu0 %v2802
        %3331 = vmatpush1.bf16.msra.mxu0 %v2801
        %3332 = vmatprep.subr.bf16.mxu0 %v2806
        %3333 = vmatpush1.bf16.msra.mxu0 %v2805
        %3334 = vmatprep.subr.bf16.mxu0 %v2810
        %3335 = vmatpush1.bf16.msra.mxu0 %v2809
        %3336 = vmatprep.subr.bf16.mxu0 %v2814
        %3337 = vmatpush1.bf16.msra.mxu0 %v2813
        %3338 = vmatprep.subr.bf16.mxu0 %v2818
        %3339 = vmatpush1.bf16.msra.mxu0 %v2817
        %3340 = vmatprep.subr.bf16.mxu0 %v2822
        %3341 = vmatpush1.bf16.msra.mxu0 %v2821
        %3342 = vmatprep.subr.bf16.mxu0 %v2826
        %3343 = vmatpush1.bf16.msra.mxu0 %v2825
        %3344 = vmatprep.subr.bf16.mxu0 %v2830
        %3345 = vmatpush1.bf16.msra.mxu0 %v2829
        %3346 = vmatprep.subr.bf16.mxu0 %v2834
        %3347 = vmatpush1.bf16.msra.mxu0 %v2833
        %3348 = vmatprep.subr.bf16.mxu0 %v2838
        %3349 = vmatpush1.bf16.msra.mxu0 %v2837
        %3350 = vmatprep.subr.bf16.mxu0 %v2842
        %3351 = vmatpush1.bf16.msra.mxu0 %v2841
        %3352 = vmatprep.subr.bf16.mxu0 %v2846
        %3353 = vmatpush1.bf16.msra.mxu0 %v2845
        %3354 = vmatprep.subr.bf16.mxu0 %v2850
        %3355 = vmatpush1.bf16.msra.mxu0 %v2849
        %3356 = vmatprep.subr.bf16.mxu0 %v2854
        %3357 = vmatpush1.bf16.msra.mxu0 %v2853
        %3358 = vmatprep.subr.bf16.mxu0 %v2858
        %3359 = vmatpush1.bf16.msra.mxu0 %v2857
        %3360 = vmatprep.subr.bf16.mxu0 %v2862
        %3361 = vmatpush1.bf16.msra.mxu0 %v2861
        %3362 = vmatprep.mubr.bf16.mxu0 %v2172
        %3363 = vmatmul.mubr.bf16.gmra.mrb[0].mxu0 %v2171
        %v3364 = vpop.f32.mrb[0].mxu0
        %v3365 = vadd.f32 %v3252, %v3364
        %v3366 = vpop.f32.mrb[0].mxu0
        %v3367 = vadd.f32 %v3254, %v3366
        %v3368 = vpop.f32.mrb[0].mxu0
        %v3369 = vadd.f32 %v3256, %v3368
        %v3370 = vpop.f32.mrb[0].mxu0
        %v3371 = vadd.f32 %v3258, %v3370
        %3372 = vmatprep.mubr.bf16.mxu0 %v2176
        %3373 = vmatmul.mubr.bf16.gmra.mrb[0].mxu0 %v2175
        %v3374 = vpop.f32.mrb[0].mxu0
        %v3375 = vadd.f32 %v3262, %v3374
        %v3376 = vpop.f32.mrb[0].mxu0
        %v3377 = vadd.f32 %v3264, %v3376
        %v3378 = vpop.f32.mrb[0].mxu0
        %v3379 = vadd.f32 %v3266, %v3378
        %v3380 = vpop.f32.mrb[0].mxu0
        %v3381 = vadd.f32 %v3268, %v3380
        %3382 = vmatprep.mubr.bf16.mxu0 %v2180
        %3383 = vmatmul.mubr.bf16.gmra.mrb[0].mxu0 %v2179
        %v3384 = vpop.f32.mrb[0].mxu0
        %v3385 = vadd.f32 %v3272, %v3384
        %v3386 = vpop.f32.mrb[0].mxu0
        %v3387 = vadd.f32 %v3274, %v3386
        %v3388 = vpop.f32.mrb[0].mxu0
        %v3389 = vadd.f32 %v3276, %v3388
        %v3390 = vpop.f32.mrb[0].mxu0
        %v3391 = vadd.f32 %v3278, %v3390
        %3392 = vmatprep.mubr.bf16.mxu0 %v2184
        %3393 = vmatmul.mubr.bf16.gmra.mrb[0].mxu0 %v2183
        %v3394 = vpop.f32.mrb[0].mxu0
        %v3395 = vadd.f32 %v3282, %v3394
        %v3396 = vpop.f32.mrb[0].mxu0
        %v3397 = vadd.f32 %v3284, %v3396
        %v3398 = vpop.f32.mrb[0].mxu0
        %v3399 = vadd.f32 %v3286, %v3398
        %v3400 = vpop.f32.mrb[0].mxu0
        %v3401 = vadd.f32 %v3288, %v3400
        %3402 = vmatprep.mubr.bf16.mxu0 %v2188
        %3403 = vmatmul.mubr.bf16.gmra.mrb[0].mxu0 %v2187
        %v3404 = vpop.f32.mrb[0].mxu0
        %v3405 = vadd.f32 %v3292, %v3404
        %v3406 = vpop.f32.mrb[0].mxu0
        %v3407 = vadd.f32 %v3294, %v3406
        %v3408 = vpop.f32.mrb[0].mxu0
        %v3409 = vadd.f32 %v3296, %v3408
        %v3410 = vpop.f32.mrb[0].mxu0
        %v3411 = vadd.f32 %v3298, %v3410
        %3412 = vmatprep.mubr.bf16.mxu0 %v2192
        %3413 = vmatmul.mubr.bf16.gmra.mrb[0].mxu0 %v2191
        %v3414 = vpop.f32.mrb[0].mxu0
        %v3415 = vadd.f32 %v3302, %v3414
        %v3416 = vpop.f32.mrb[0].mxu0
        %v3417 = vadd.f32 %v3304, %v3416
        %v3418 = vpop.f32.mrb[0].mxu0
        %v3419 = vadd.f32 %v3306, %v3418
        %v3420 = vpop.f32.mrb[0].mxu0
        %v3421 = vadd.f32 %v3308, %v3420
        %3422 = vmatprep.mubr.bf16.mxu0 %v2196
        %3423 = vmatmul.mubr.bf16.gmra.mrb[0].mxu0 %v2195
        %v3424 = vpop.f32.mrb[0].mxu0
        %v3425 = vadd.f32 %v3312, %v3424
        %v3426 = vpop.f32.mrb[0].mxu0
        %v3427 = vadd.f32 %v3314, %v3426
        %v3428 = vpop.f32.mrb[0].mxu0
        %v3429 = vadd.f32 %v3316, %v3428
        %v3430 = vpop.f32.mrb[0].mxu0
        %v3431 = vadd.f32 %v3318, %v3430
        %3432 = vmatprep.mubr.bf16.mxu0 %v2200
        %3433 = vmatmul.mubr.bf16.gmra.mrb[0].mxu0 %v2199
        %v3434 = vpop.f32.mrb[0].mxu0
        %v3435 = vadd.f32 %v3322, %v3434
        %v3436 = vpop.f32.mrb[0].mxu0
        %v3437 = vadd.f32 %v3324, %v3436
        %v3438 = vpop.f32.mrb[0].mxu0
        %v3439 = vadd.f32 %v3326, %v3438
        %v3440 = vpop.f32.mrb[0].mxu0
        %v3441 = vadd.f32 %v3328, %v3440
        %3442 = vdwg.mxu0
        %v3443 = vmax.f32 %v3139, 0.0
        %v3444 = vmax.f32 %v3141, 0.0
        %v3445 = vmax.f32 %v3365, 0.0
        %v3446 = vmax.f32 %v3367, 0.0
        %v3447 = vmax.f32 %v3143, 0.0
        %v3448 = vmax.f32 %v3145, 0.0
        %v3449 = vmax.f32 %v3369, 0.0
        %v3450 = vmax.f32 %v3371, 0.0
        %v3451 = vmax.f32 %v3149, 0.0
        %v3452 = vmax.f32 %v3151, 0.0
        %v3453 = vmax.f32 %v3375, 0.0
        %v3454 = vmax.f32 %v3377, 0.0
        %v3455 = vmax.f32 %v3153, 0.0
        %v3456 = vmax.f32 %v3155, 0.0
        %v3457 = vmax.f32 %v3379, 0.0
        %v3458 = vmax.f32 %v3381, 0.0
        %v3459 = vmax.f32 %v3159, 0.0
        %v3460 = vmax.f32 %v3161, 0.0
        %v3461 = vmax.f32 %v3385, 0.0
        %v3462 = vmax.f32 %v3387, 0.0
        %v3463 = vmax.f32 %v3163, 0.0
        %v3464 = vmax.f32 %v3165, 0.0
        %v3465 = vmax.f32 %v3389, 0.0
        %v3466 = vmax.f32 %v3391, 0.0
        %v3467 = vmax.f32 %v3169, 0.0
        %v3468 = vmax.f32 %v3171, 0.0
        %v3469 = vmax.f32 %v3395, 0.0
        %v3470 = vmax.f32 %v3397, 0.0
        %v3471 = vmax.f32 %v3173, 0.0
        %v3472 = vmax.f32 %v3175, 0.0
        %v3473 = vmax.f32 %v3399, 0.0
        %v3474 = vmax.f32 %v3401, 0.0
        %v3475 = vmax.f32 %v3179, 0.0
        %v3476 = vmax.f32 %v3181, 0.0
        %v3477 = vmax.f32 %v3405, 0.0
        %v3478 = vmax.f32 %v3407, 0.0
        %v3479 = vmax.f32 %v3183, 0.0
        %v3480 = vmax.f32 %v3185, 0.0
        %v3481 = vmax.f32 %v3409, 0.0
        %v3482 = vmax.f32 %v3411, 0.0
        %v3483 = vmax.f32 %v3189, 0.0
        %v3484 = vmax.f32 %v3191, 0.0
        %v3485 = vmax.f32 %v3415, 0.0
        %v3486 = vmax.f32 %v3417, 0.0
        %v3487 = vmax.f32 %v3193, 0.0
        %v3488 = vmax.f32 %v3195, 0.0
        %v3489 = vmax.f32 %v3419, 0.0
        %v3490 = vmax.f32 %v3421, 0.0
        %v3491 = vmax.f32 %v3199, 0.0
        %v3492 = vmax.f32 %v3201, 0.0
        %v3493 = vmax.f32 %v3425, 0.0
        %v3494 = vmax.f32 %v3427, 0.0
        %v3495 = vmax.f32 %v3203, 0.0
        %v3496 = vmax.f32 %v3205, 0.0
        %v3497 = vmax.f32 %v3429, 0.0
        %v3498 = vmax.f32 %v3431, 0.0
        %v3499 = vmax.f32 %v3209, 0.0
        %v3500 = vmax.f32 %v3211, 0.0
        %v3501 = vmax.f32 %v3435, 0.0
        %v3502 = vmax.f32 %v3437, 0.0
        %v3503 = vmax.f32 %v3213, 0.0
        %v3504 = vmax.f32 %v3215, 0.0
        %v3505 = vmax.f32 %v3439, 0.0
        %v3506 = vmax.f32 %v3441, 0.0
        %v3507 = vpack.c.bf16 %v3447, %v3443
        %v3508 = vpack.c.bf16 %v3448, %v3444
        %v3509 = vpack.c.bf16 %v3449, %v3445
        %v3510 = vpack.c.bf16 %v3450, %v3446
        %v3511 = vpack.c.bf16 %v3455, %v3451
        %v3512 = vpack.c.bf16 %v3456, %v3452
        %v3513 = vpack.c.bf16 %v3457, %v3453
        %v3514 = vpack.c.bf16 %v3458, %v3454
        %v3515 = vpack.c.bf16 %v3463, %v3459
        %v3516 = vpack.c.bf16 %v3464, %v3460
        %v3517 = vpack.c.bf16 %v3465, %v3461
        %v3518 = vpack.c.bf16 %v3466, %v3462
        %v3519 = vpack.c.bf16 %v3471, %v3467
        %v3520 = vpack.c.bf16 %v3472, %v3468
        %v3521 = vpack.c.bf16 %v3473, %v3469
        %v3522 = vpack.c.bf16 %v3474, %v3470
        %v3523 = vpack.c.bf16 %v3479, %v3475
        %v3524 = vpack.c.bf16 %v3480, %v3476
        %v3525 = vpack.c.bf16 %v3481, %v3477
        %v3526 = vpack.c.bf16 %v3482, %v3478
        %v3527 = vpack.c.bf16 %v3487, %v3483
        %v3528 = vpack.c.bf16 %v3488, %v3484
        %v3529 = vpack.c.bf16 %v3489, %v3485
        %v3530 = vpack.c.bf16 %v3490, %v3486
        %v3531 = vpack.c.bf16 %v3495, %v3491
        %v3532 = vpack.c.bf16 %v3496, %v3492
        %v3533 = vpack.c.bf16 %v3497, %v3493
        %v3534 = vpack.c.bf16 %v3498, %v3494
        %v3535 = vpack.c.bf16 %v3503, %v3499
        %v3536 = vpack.c.bf16 %v3504, %v3500
        %v3537 = vpack.c.bf16 %v3505, %v3501
        %v3538 = vpack.c.bf16 %v3506, %v3502
        %v3539 = vld [vmem:[#allocation7] sm:$0xff]
        %v3540 = vld [vmem:[#allocation7 + $0x8] sm:$0xff]
        %v3541 = vld [vmem:[#allocation7 + $0x10] sm:$0xff]
        %v3542 = vld [vmem:[#allocation7 + $0x18] sm:$0xff]
        %v3543 = vld [vmem:[#allocation7 + $0x20] sm:$0xff]
        %v3544 = vld [vmem:[#allocation7 + $0x28] sm:$0xff]
        %v3545 = vld [vmem:[#allocation7 + $0x30] sm:$0xff]
        %v3546 = vld [vmem:[#allocation7 + $0x38] sm:$0xff]
        %v3547 = vld [vmem:[#allocation7 + $0x40] sm:$0xff]
        %v3548 = vld [vmem:[#allocation7 + $0x48] sm:$0xff]
        %v3549 = vld [vmem:[#allocation7 + $0x50] sm:$0xff]
        %v3550 = vld [vmem:[#allocation7 + $0x58] sm:$0xff]
        %v3551 = vld [vmem:[#allocation7 + $0x60] sm:$0xff]
        %v3552 = vld [vmem:[#allocation7 + $0x68] sm:$0xff]
        %v3553 = vld [vmem:[#allocation7 + $0x70] sm:$0xff]
        %v3554 = vld [vmem:[#allocation7 + $0x78] sm:$0xff]
        %v3555 = vld [vmem:[#allocation7 + $0x80] sm:$0xff]
        %v3556 = vld [vmem:[#allocation7 + $0x88] sm:$0xff]
        %v3557 = vld [vmem:[#allocation7 + $0x90] sm:$0xff]
        %v3558 = vld [vmem:[#allocation7 + $0x98] sm:$0xff]
        %v3559 = vld [vmem:[#allocation7 + $0xa0] sm:$0xff]
        %v3560 = vld [vmem:[#allocation7 + $0xa8] sm:$0xff]
        %v3561 = vld [vmem:[#allocation7 + $0xb0] sm:$0xff]
        %v3562 = vld [vmem:[#allocation7 + $0xb8] sm:$0xff]
        %v3563 = vld [vmem:[#allocation7 + $0xc0] sm:$0xff]
        %v3564 = vld [vmem:[#allocation7 + $0xc8] sm:$0xff]
        %v3565 = vld [vmem:[#allocation7 + $0xd0] sm:$0xff]
        %v3566 = vld [vmem:[#allocation7 + $0xd8] sm:$0xff]
        %v3567 = vld [vmem:[#allocation7 + $0xe0] sm:$0xff]
        %v3568 = vld [vmem:[#allocation7 + $0xe8] sm:$0xff]
        %v3569 = vld [vmem:[#allocation7 + $0xf0] sm:$0xff]
        %v3570 = vld [vmem:[#allocation7 + $0xf8] sm:$0xff]
        %v3571 = vld [vmem:[#allocation7 + $0x100] sm:$0xff]
        %v3572 = vld [vmem:[#allocation7 + $0x108] sm:$0xff]
        %v3573 = vld [vmem:[#allocation7 + $0x110] sm:$0xff]
        %v3574 = vld [vmem:[#allocation7 + $0x118] sm:$0xff]
        %v3575 = vld [vmem:[#allocation7 + $0x120] sm:$0xff]
        %v3576 = vld [vmem:[#allocation7 + $0x128] sm:$0xff]
        %v3577 = vld [vmem:[#allocation7 + $0x130] sm:$0xff]
        %v3578 = vld [vmem:[#allocation7 + $0x138] sm:$0xff]
        %v3579 = vld [vmem:[#allocation7 + $0x140] sm:$0xff]
        %v3580 = vld [vmem:[#allocation7 + $0x148] sm:$0xff]
        %v3581 = vld [vmem:[#allocation7 + $0x150] sm:$0xff]
        %v3582 = vld [vmem:[#allocation7 + $0x158] sm:$0xff]
        %v3583 = vld [vmem:[#allocation7 + $0x160] sm:$0xff]
        %v3584 = vld [vmem:[#allocation7 + $0x168] sm:$0xff]
        %v3585 = vld [vmem:[#allocation7 + $0x170] sm:$0xff]
        %v3586 = vld [vmem:[#allocation7 + $0x178] sm:$0xff]
        %v3587 = vld [vmem:[#allocation7 + $0x180] sm:$0xff]
        %v3588 = vld [vmem:[#allocation7 + $0x188] sm:$0xff]
        %v3589 = vld [vmem:[#allocation7 + $0x190] sm:$0xff]
        %v3590 = vld [vmem:[#allocation7 + $0x198] sm:$0xff]
        %v3591 = vld [vmem:[#allocation7 + $0x1a0] sm:$0xff]
        %v3592 = vld [vmem:[#allocation7 + $0x1a8] sm:$0xff]
        %v3593 = vld [vmem:[#allocation7 + $0x1b0] sm:$0xff]
        %v3594 = vld [vmem:[#allocation7 + $0x1b8] sm:$0xff]
        %v3595 = vld [vmem:[#allocation7 + $0x1c0] sm:$0xff]
        %v3596 = vld [vmem:[#allocation7 + $0x1c8] sm:$0xff]
        %v3597 = vld [vmem:[#allocation7 + $0x1d0] sm:$0xff]
        %v3598 = vld [vmem:[#allocation7 + $0x1d8] sm:$0xff]
        %v3599 = vld [vmem:[#allocation7 + $0x1e0] sm:$0xff]
        %v3600 = vld [vmem:[#allocation7 + $0x1e8] sm:$0xff]
        %v3601 = vld [vmem:[#allocation7 + $0x1f0] sm:$0xff]
        %v3602 = vld [vmem:[#allocation7 + $0x1f8] sm:$0xff]
        %v3603 = vld [vmem:[#allocation7 + $0x200] sm:$0xff]
        %v3604 = vld [vmem:[#allocation7 + $0x208] sm:$0xff]
        %v3605 = vld [vmem:[#allocation7 + $0x210] sm:$0xff]
        %v3606 = vld [vmem:[#allocation7 + $0x218] sm:$0xff]
        %v3607 = vld [vmem:[#allocation7 + $0x220] sm:$0xff]
        %v3608 = vld [vmem:[#allocation7 + $0x228] sm:$0xff]
        %v3609 = vld [vmem:[#allocation7 + $0x230] sm:$0xff]
        %v3610 = vld [vmem:[#allocation7 + $0x238] sm:$0xff]
        %v3611 = vld [vmem:[#allocation7 + $0x240] sm:$0xff]
        %v3612 = vld [vmem:[#allocation7 + $0x248] sm:$0xff]
        %v3613 = vld [vmem:[#allocation7 + $0x250] sm:$0xff]
        %v3614 = vld [vmem:[#allocation7 + $0x258] sm:$0xff]
        %v3615 = vld [vmem:[#allocation7 + $0x260] sm:$0xff]
        %v3616 = vld [vmem:[#allocation7 + $0x268] sm:$0xff]
        %v3617 = vld [vmem:[#allocation7 + $0x270] sm:$0xff]
        %v3618 = vld [vmem:[#allocation7 + $0x278] sm:$0xff]
        %v3619 = vld [vmem:[#allocation7 + $0x280] sm:$0xff]
        %v3620 = vld [vmem:[#allocation7 + $0x288] sm:$0xff]
        %v3621 = vld [vmem:[#allocation7 + $0x290] sm:$0xff]
        %v3622 = vld [vmem:[#allocation7 + $0x298] sm:$0xff]
        %v3623 = vld [vmem:[#allocation7 + $0x2a0] sm:$0xff]
        %v3624 = vld [vmem:[#allocation7 + $0x2a8] sm:$0xff]
        %v3625 = vld [vmem:[#allocation7 + $0x2b0] sm:$0xff]
        %v3626 = vld [vmem:[#allocation7 + $0x2b8] sm:$0xff]
        %v3627 = vld [vmem:[#allocation7 + $0x2c0] sm:$0xff]
        %v3628 = vld [vmem:[#allocation7 + $0x2c8] sm:$0xff]
        %v3629 = vld [vmem:[#allocation7 + $0x2d0] sm:$0xff]
        %v3630 = vld [vmem:[#allocation7 + $0x2d8] sm:$0xff]
        %v3631 = vld [vmem:[#allocation7 + $0x2e0] sm:$0xff]
        %v3632 = vld [vmem:[#allocation7 + $0x2e8] sm:$0xff]
        %v3633 = vld [vmem:[#allocation7 + $0x2f0] sm:$0xff]
        %v3634 = vld [vmem:[#allocation7 + $0x2f8] sm:$0xff]
        %v3635 = vld [vmem:[#allocation7 + $0x300] sm:$0xff]
        %v3636 = vld [vmem:[#allocation7 + $0x308] sm:$0xff]
        %v3637 = vld [vmem:[#allocation7 + $0x310] sm:$0xff]
        %v3638 = vld [vmem:[#allocation7 + $0x318] sm:$0xff]
        %v3639 = vld [vmem:[#allocation7 + $0x320] sm:$0xff]
        %v3640 = vld [vmem:[#allocation7 + $0x328] sm:$0xff]
        %v3641 = vld [vmem:[#allocation7 + $0x330] sm:$0xff]
        %v3642 = vld [vmem:[#allocation7 + $0x338] sm:$0xff]
        %v3643 = vld [vmem:[#allocation7 + $0x340] sm:$0xff]
        %v3644 = vld [vmem:[#allocation7 + $0x348] sm:$0xff]
        %v3645 = vld [vmem:[#allocation7 + $0x350] sm:$0xff]
        %v3646 = vld [vmem:[#allocation7 + $0x358] sm:$0xff]
        %v3647 = vld [vmem:[#allocation7 + $0x360] sm:$0xff]
        %v3648 = vld [vmem:[#allocation7 + $0x368] sm:$0xff]
        %v3649 = vld [vmem:[#allocation7 + $0x370] sm:$0xff]
        %v3650 = vld [vmem:[#allocation7 + $0x378] sm:$0xff]
        %v3651 = vld [vmem:[#allocation7 + $0x380] sm:$0xff]
        %v3652 = vld [vmem:[#allocation7 + $0x388] sm:$0xff]
        %v3653 = vld [vmem:[#allocation7 + $0x390] sm:$0xff]
        %v3654 = vld [vmem:[#allocation7 + $0x398] sm:$0xff]
        %v3655 = vld [vmem:[#allocation7 + $0x3a0] sm:$0xff]
        %v3656 = vld [vmem:[#allocation7 + $0x3a8] sm:$0xff]
        %v3657 = vld [vmem:[#allocation7 + $0x3b0] sm:$0xff]
        %v3658 = vld [vmem:[#allocation7 + $0x3b8] sm:$0xff]
        %v3659 = vld [vmem:[#allocation7 + $0x3c0] sm:$0xff]
        %v3660 = vld [vmem:[#allocation7 + $0x3c8] sm:$0xff]
        %v3661 = vld [vmem:[#allocation7 + $0x3d0] sm:$0xff]
        %v3662 = vld [vmem:[#allocation7 + $0x3d8] sm:$0xff]
        %v3663 = vld [vmem:[#allocation7 + $0x3e0] sm:$0xff]
        %v3664 = vld [vmem:[#allocation7 + $0x3e8] sm:$0xff]
        %v3665 = vld [vmem:[#allocation7 + $0x3f0] sm:$0xff]
        %v3666 = vld [vmem:[#allocation7 + $0x3f8] sm:$0xff]
        %v3667 = vld [vmem:[%s8] sm:$0xf]
        %v3669 = vlaneseq
        %v3670 = vshrl.u32 %v3669, 7
        %v3671 = vsub.s32 0, %v3670
        %v3672 = vrot.slane %v3667, %v3671
        %v3673 = vlaneseq
        %v3674 = vshrl.u32 %v3673, 7
        %v3675 = vsub.s32 1, %v3674
        %v3676 = vrot.slane %v3667, %v3675
        %v3677 = vlaneseq
        %v3678 = vshrl.u32 %v3677, 7
        %v3679 = vsub.s32 2, %v3678
        %v3680 = vrot.slane %v3667, %v3679
        %v3681 = vlaneseq
        %v3682 = vshrl.u32 %v3681, 7
        %v3683 = vsub.s32 3, %v3682
        %v3684 = vrot.slane %v3667, %v3683
        %v3817 = vunpack.c.l.b16 %v3539
        %v3818 = vunpack.c.h.b16 %v3539
        %v3819 = vunpack.c.l.b16 %v3540
        %v3820 = vunpack.c.h.b16 %v3540
        %v3821 = vunpack.c.l.b16 %v3541
        %v3822 = vunpack.c.h.b16 %v3541
        %v3823 = vunpack.c.l.b16 %v3542
        %v3824 = vunpack.c.h.b16 %v3542
        %v3825 = vunpack.c.l.b16 %v3543
        %v3826 = vunpack.c.h.b16 %v3543
        %v3827 = vunpack.c.l.b16 %v3544
        %v3828 = vunpack.c.h.b16 %v3544
        %v3829 = vunpack.c.l.b16 %v3545
        %v3830 = vunpack.c.h.b16 %v3545
        %v3831 = vunpack.c.l.b16 %v3546
        %v3832 = vunpack.c.h.b16 %v3546
        %v3833 = vunpack.c.l.b16 %v3547
        %v3834 = vunpack.c.h.b16 %v3547
        %v3835 = vunpack.c.l.b16 %v3548
        %v3836 = vunpack.c.h.b16 %v3548
        %v3837 = vunpack.c.l.b16 %v3549
        %v3838 = vunpack.c.h.b16 %v3549
        %v3839 = vunpack.c.l.b16 %v3550
        %v3840 = vunpack.c.h.b16 %v3550
        %v3841 = vunpack.c.l.b16 %v3551
        %v3842 = vunpack.c.h.b16 %v3551
        %v3843 = vunpack.c.l.b16 %v3552
        %v3844 = vunpack.c.h.b16 %v3552
        %v3845 = vunpack.c.l.b16 %v3553
        %v3846 = vunpack.c.h.b16 %v3553
        %v3847 = vunpack.c.l.b16 %v3554
        %v3848 = vunpack.c.h.b16 %v3554
        %v3849 = vunpack.c.l.b16 %v3555
        %v3850 = vunpack.c.h.b16 %v3555
        %v3851 = vunpack.c.l.b16 %v3556
        %v3852 = vunpack.c.h.b16 %v3556
        %v3853 = vunpack.c.l.b16 %v3557
        %v3854 = vunpack.c.h.b16 %v3557
        %v3855 = vunpack.c.l.b16 %v3558
        %v3856 = vunpack.c.h.b16 %v3558
        %v3857 = vunpack.c.l.b16 %v3559
        %v3858 = vunpack.c.h.b16 %v3559
        %v3859 = vunpack.c.l.b16 %v3560
        %v3860 = vunpack.c.h.b16 %v3560
        %v3861 = vunpack.c.l.b16 %v3561
        %v3862 = vunpack.c.h.b16 %v3561
        %v3863 = vunpack.c.l.b16 %v3562
        %v3864 = vunpack.c.h.b16 %v3562
        %v3865 = vunpack.c.l.b16 %v3563
        %v3866 = vunpack.c.h.b16 %v3563
        %v3867 = vunpack.c.l.b16 %v3564
        %v3868 = vunpack.c.h.b16 %v3564
        %v3869 = vunpack.c.l.b16 %v3565
        %v3870 = vunpack.c.h.b16 %v3565
        %v3871 = vunpack.c.l.b16 %v3566
        %v3872 = vunpack.c.h.b16 %v3566
        %v3873 = vunpack.c.l.b16 %v3567
        %v3874 = vunpack.c.h.b16 %v3567
        %v3875 = vunpack.c.l.b16 %v3568
        %v3876 = vunpack.c.h.b16 %v3568
        %v3877 = vunpack.c.l.b16 %v3569
        %v3878 = vunpack.c.h.b16 %v3569
        %v3879 = vunpack.c.l.b16 %v3570
        %v3880 = vunpack.c.h.b16 %v3570
        %v3881 = vunpack.c.l.b16 %v3571
        %v3882 = vunpack.c.h.b16 %v3571
        %v3883 = vunpack.c.l.b16 %v3572
        %v3884 = vunpack.c.h.b16 %v3572
        %v3885 = vunpack.c.l.b16 %v3573
        %v3886 = vunpack.c.h.b16 %v3573
        %v3887 = vunpack.c.l.b16 %v3574
        %v3888 = vunpack.c.h.b16 %v3574
        %v3889 = vunpack.c.l.b16 %v3575
        %v3890 = vunpack.c.h.b16 %v3575
        %v3891 = vunpack.c.l.b16 %v3576
        %v3892 = vunpack.c.h.b16 %v3576
        %v3893 = vunpack.c.l.b16 %v3577
        %v3894 = vunpack.c.h.b16 %v3577
        %v3895 = vunpack.c.l.b16 %v3578
        %v3896 = vunpack.c.h.b16 %v3578
        %v3897 = vunpack.c.l.b16 %v3579
        %v3898 = vunpack.c.h.b16 %v3579
        %v3899 = vunpack.c.l.b16 %v3580
        %v3900 = vunpack.c.h.b16 %v3580
        %v3901 = vunpack.c.l.b16 %v3581
        %v3902 = vunpack.c.h.b16 %v3581
        %v3903 = vunpack.c.l.b16 %v3582
        %v3904 = vunpack.c.h.b16 %v3582
        %v3905 = vunpack.c.l.b16 %v3583
        %v3906 = vunpack.c.h.b16 %v3583
        %v3907 = vunpack.c.l.b16 %v3584
        %v3908 = vunpack.c.h.b16 %v3584
        %v3909 = vunpack.c.l.b16 %v3585
        %v3910 = vunpack.c.h.b16 %v3585
        %v3911 = vunpack.c.l.b16 %v3586
        %v3912 = vunpack.c.h.b16 %v3586
        %v3913 = vunpack.c.l.b16 %v3587
        %v3914 = vunpack.c.h.b16 %v3587
        %v3915 = vunpack.c.l.b16 %v3588
        %v3916 = vunpack.c.h.b16 %v3588
        %v3917 = vunpack.c.l.b16 %v3589
        %v3918 = vunpack.c.h.b16 %v3589
        %v3919 = vunpack.c.l.b16 %v3590
        %v3920 = vunpack.c.h.b16 %v3590
        %v3921 = vunpack.c.l.b16 %v3591
        %v3922 = vunpack.c.h.b16 %v3591
        %v3923 = vunpack.c.l.b16 %v3592
        %v3924 = vunpack.c.h.b16 %v3592
        %v3925 = vunpack.c.l.b16 %v3593
        %v3926 = vunpack.c.h.b16 %v3593
        %v3927 = vunpack.c.l.b16 %v3594
        %v3928 = vunpack.c.h.b16 %v3594
        %v3929 = vunpack.c.l.b16 %v3595
        %v3930 = vunpack.c.h.b16 %v3595
        %v3931 = vunpack.c.l.b16 %v3596
        %v3932 = vunpack.c.h.b16 %v3596
        %v3933 = vunpack.c.l.b16 %v3597
        %v3934 = vunpack.c.h.b16 %v3597
        %v3935 = vunpack.c.l.b16 %v3598
        %v3936 = vunpack.c.h.b16 %v3598
        %v3937 = vunpack.c.l.b16 %v3599
        %v3938 = vunpack.c.h.b16 %v3599
        %v3939 = vunpack.c.l.b16 %v3600
        %v3940 = vunpack.c.h.b16 %v3600
        %v3941 = vunpack.c.l.b16 %v3601
        %v3942 = vunpack.c.h.b16 %v3601
        %v3943 = vunpack.c.l.b16 %v3602
        %v3944 = vunpack.c.h.b16 %v3602
        %v3945 = vunpack.c.l.b16 %v3603
        %v3946 = vunpack.c.h.b16 %v3603
        %v3947 = vunpack.c.l.b16 %v3604
        %v3948 = vunpack.c.h.b16 %v3604
        %v3949 = vunpack.c.l.b16 %v3605
        %v3950 = vunpack.c.h.b16 %v3605
        %v3951 = vunpack.c.l.b16 %v3606
        %v3952 = vunpack.c.h.b16 %v3606
        %v3953 = vunpack.c.l.b16 %v3607
        %v3954 = vunpack.c.h.b16 %v3607
        %v3955 = vunpack.c.l.b16 %v3608
        %v3956 = vunpack.c.h.b16 %v3608
        %v3957 = vunpack.c.l.b16 %v3609
        %v3958 = vunpack.c.h.b16 %v3609
        %v3959 = vunpack.c.l.b16 %v3610
        %v3960 = vunpack.c.h.b16 %v3610
        %v3961 = vunpack.c.l.b16 %v3611
        %v3962 = vunpack.c.h.b16 %v3611
        %v3963 = vunpack.c.l.b16 %v3612
        %v3964 = vunpack.c.h.b16 %v3612
        %v3965 = vunpack.c.l.b16 %v3613
        %v3966 = vunpack.c.h.b16 %v3613
        %v3967 = vunpack.c.l.b16 %v3614
        %v3968 = vunpack.c.h.b16 %v3614
        %v3969 = vunpack.c.l.b16 %v3615
        %v3970 = vunpack.c.h.b16 %v3615
        %v3971 = vunpack.c.l.b16 %v3616
        %v3972 = vunpack.c.h.b16 %v3616
        %v3973 = vunpack.c.l.b16 %v3617
        %v3974 = vunpack.c.h.b16 %v3617
        %v3975 = vunpack.c.l.b16 %v3618
        %v3976 = vunpack.c.h.b16 %v3618
        %v3977 = vunpack.c.l.b16 %v3619
        %v3978 = vunpack.c.h.b16 %v3619
        %v3979 = vunpack.c.l.b16 %v3620
        %v3980 = vunpack.c.h.b16 %v3620
        %v3981 = vunpack.c.l.b16 %v3621
        %v3982 = vunpack.c.h.b16 %v3621
        %v3983 = vunpack.c.l.b16 %v3622
        %v3984 = vunpack.c.h.b16 %v3622
        %v3985 = vunpack.c.l.b16 %v3623
        %v3986 = vunpack.c.h.b16 %v3623
        %v3987 = vunpack.c.l.b16 %v3624
        %v3988 = vunpack.c.h.b16 %v3624
        %v3989 = vunpack.c.l.b16 %v3625
        %v3990 = vunpack.c.h.b16 %v3625
        %v3991 = vunpack.c.l.b16 %v3626
        %v3992 = vunpack.c.h.b16 %v3626
        %v3993 = vunpack.c.l.b16 %v3627
        %v3994 = vunpack.c.h.b16 %v3627
        %v3995 = vunpack.c.l.b16 %v3628
        %v3996 = vunpack.c.h.b16 %v3628
        %v3997 = vunpack.c.l.b16 %v3629
        %v3998 = vunpack.c.h.b16 %v3629
        %v3999 = vunpack.c.l.b16 %v3630
        %v4000 = vunpack.c.h.b16 %v3630
        %v4001 = vunpack.c.l.b16 %v3631
        %v4002 = vunpack.c.h.b16 %v3631
        %v4003 = vunpack.c.l.b16 %v3632
        %v4004 = vunpack.c.h.b16 %v3632
        %v4005 = vunpack.c.l.b16 %v3633
        %v4006 = vunpack.c.h.b16 %v3633
        %v4007 = vunpack.c.l.b16 %v3634
        %v4008 = vunpack.c.h.b16 %v3634
        %v4009 = vunpack.c.l.b16 %v3635
        %v4010 = vunpack.c.h.b16 %v3635
        %v4011 = vunpack.c.l.b16 %v3636
        %v4012 = vunpack.c.h.b16 %v3636
        %v4013 = vunpack.c.l.b16 %v3637
        %v4014 = vunpack.c.h.b16 %v3637
        %v4015 = vunpack.c.l.b16 %v3638
        %v4016 = vunpack.c.h.b16 %v3638
        %v4017 = vunpack.c.l.b16 %v3639
        %v4018 = vunpack.c.h.b16 %v3639
        %v4019 = vunpack.c.l.b16 %v3640
        %v4020 = vunpack.c.h.b16 %v3640
        %v4021 = vunpack.c.l.b16 %v3641
        %v4022 = vunpack.c.h.b16 %v3641
        %v4023 = vunpack.c.l.b16 %v3642
        %v4024 = vunpack.c.h.b16 %v3642
        %v4025 = vunpack.c.l.b16 %v3643
        %v4026 = vunpack.c.h.b16 %v3643
        %v4027 = vunpack.c.l.b16 %v3644
        %v4028 = vunpack.c.h.b16 %v3644
        %v4029 = vunpack.c.l.b16 %v3645
        %v4030 = vunpack.c.h.b16 %v3645
        %v4031 = vunpack.c.l.b16 %v3646
        %v4032 = vunpack.c.h.b16 %v3646
        %v4033 = vunpack.c.l.b16 %v3647
        %v4034 = vunpack.c.h.b16 %v3647
        %v4035 = vunpack.c.l.b16 %v3648
        %v4036 = vunpack.c.h.b16 %v3648
        %v4037 = vunpack.c.l.b16 %v3649
        %v4038 = vunpack.c.h.b16 %v3649
        %v4039 = vunpack.c.l.b16 %v3650
        %v4040 = vunpack.c.h.b16 %v3650
        %v4041 = vunpack.c.l.b16 %v3651
        %v4042 = vunpack.c.h.b16 %v3651
        %v4043 = vunpack.c.l.b16 %v3652
        %v4044 = vunpack.c.h.b16 %v3652
        %v4045 = vunpack.c.l.b16 %v3653
        %v4046 = vunpack.c.h.b16 %v3653
        %v4047 = vunpack.c.l.b16 %v3654
        %v4048 = vunpack.c.h.b16 %v3654
        %v4049 = vunpack.c.l.b16 %v3655
        %v4050 = vunpack.c.h.b16 %v3655
        %v4051 = vunpack.c.l.b16 %v3656
        %v4052 = vunpack.c.h.b16 %v3656
        %v4053 = vunpack.c.l.b16 %v3657
        %v4054 = vunpack.c.h.b16 %v3657
        %v4055 = vunpack.c.l.b16 %v3658
        %v4056 = vunpack.c.h.b16 %v3658
        %v4057 = vunpack.c.l.b16 %v3659
        %v4058 = vunpack.c.h.b16 %v3659
        %v4059 = vunpack.c.l.b16 %v3660
        %v4060 = vunpack.c.h.b16 %v3660
        %v4061 = vunpack.c.l.b16 %v3661
        %v4062 = vunpack.c.h.b16 %v3661
        %v4063 = vunpack.c.l.b16 %v3662
        %v4064 = vunpack.c.h.b16 %v3662
        %v4065 = vunpack.c.l.b16 %v3663
        %v4066 = vunpack.c.h.b16 %v3663
        %v4067 = vunpack.c.l.b16 %v3664
        %v4068 = vunpack.c.h.b16 %v3664
        %v4069 = vunpack.c.l.b16 %v3665
        %v4070 = vunpack.c.h.b16 %v3665
        %v4071 = vunpack.c.l.b16 %v3666
        %v4072 = vunpack.c.h.b16 %v3666
        %v4073 = vpack.c.b16 %v3821, %v3817
        %v4074 = vpack.c.b16 %v3822, %v3818
        %v4075 = vpack.c.b16 %v3823, %v3819
        %v4076 = vpack.c.b16 %v3824, %v3820
        %v4077 = vpack.c.b16 %v3829, %v3825
        %v4078 = vpack.c.b16 %v3830, %v3826
        %v4079 = vpack.c.b16 %v3831, %v3827
        %v4080 = vpack.c.b16 %v3832, %v3828
        %v4081 = vpack.c.b16 %v3837, %v3833
        %v4082 = vpack.c.b16 %v3838, %v3834
        %v4083 = vpack.c.b16 %v3839, %v3835
        %v4084 = vpack.c.b16 %v3840, %v3836
        %v4085 = vpack.c.b16 %v3845, %v3841
        %v4086 = vpack.c.b16 %v3846, %v3842
        %v4087 = vpack.c.b16 %v3847, %v3843
        %v4088 = vpack.c.b16 %v3848, %v3844
        %v4089 = vpack.c.b16 %v3853, %v3849
        %v4090 = vpack.c.b16 %v3854, %v3850
        %v4091 = vpack.c.b16 %v3855, %v3851
        %v4092 = vpack.c.b16 %v3856, %v3852
        %v4093 = vpack.c.b16 %v3861, %v3857
        %v4094 = vpack.c.b16 %v3862, %v3858
        %v4095 = vpack.c.b16 %v3863, %v3859
        %v4096 = vpack.c.b16 %v3864, %v3860
        %v4097 = vpack.c.b16 %v3869, %v3865
        %v4098 = vpack.c.b16 %v3870, %v3866
        %v4099 = vpack.c.b16 %v3871, %v3867
        %v4100 = vpack.c.b16 %v3872, %v3868
        %v4101 = vpack.c.b16 %v3877, %v3873
        %v4102 = vpack.c.b16 %v3878, %v3874
        %v4103 = vpack.c.b16 %v3879, %v3875
        %v4104 = vpack.c.b16 %v3880, %v3876
        %v4105 = vpack.c.b16 %v3885, %v3881
        %v4106 = vpack.c.b16 %v3886, %v3882
        %v4107 = vpack.c.b16 %v3887, %v3883
        %v4108 = vpack.c.b16 %v3888, %v3884
        %v4109 = vpack.c.b16 %v3893, %v3889
        %v4110 = vpack.c.b16 %v3894, %v3890
        %v4111 = vpack.c.b16 %v3895, %v3891
        %v4112 = vpack.c.b16 %v3896, %v3892
        %v4113 = vpack.c.b16 %v3901, %v3897
        %v4114 = vpack.c.b16 %v3902, %v3898
        %v4115 = vpack.c.b16 %v3903, %v3899
        %v4116 = vpack.c.b16 %v3904, %v3900
        %v4117 = vpack.c.b16 %v3909, %v3905
        %v4118 = vpack.c.b16 %v3910, %v3906
        %v4119 = vpack.c.b16 %v3911, %v3907
        %v4120 = vpack.c.b16 %v3912, %v3908
        %v4121 = vpack.c.b16 %v3917, %v3913
        %v4122 = vpack.c.b16 %v3918, %v3914
        %v4123 = vpack.c.b16 %v3919, %v3915
        %v4124 = vpack.c.b16 %v3920, %v3916
        %v4125 = vpack.c.b16 %v3925, %v3921
        %v4126 = vpack.c.b16 %v3926, %v3922
        %v4127 = vpack.c.b16 %v3927, %v3923
        %v4128 = vpack.c.b16 %v3928, %v3924
        %v4129 = vpack.c.b16 %v3933, %v3929
        %v4130 = vpack.c.b16 %v3934, %v3930
        %v4131 = vpack.c.b16 %v3935, %v3931
        %v4132 = vpack.c.b16 %v3936, %v3932
        %v4133 = vpack.c.b16 %v3941, %v3937
        %v4134 = vpack.c.b16 %v3942, %v3938
        %v4135 = vpack.c.b16 %v3943, %v3939
        %v4136 = vpack.c.b16 %v3944, %v3940
        %v4137 = vpack.c.b16 %v3949, %v3945
        %v4138 = vpack.c.b16 %v3950, %v3946
        %v4139 = vpack.c.b16 %v3951, %v3947
        %v4140 = vpack.c.b16 %v3952, %v3948
        %v4141 = vpack.c.b16 %v3957, %v3953
        %v4142 = vpack.c.b16 %v3958, %v3954
        %v4143 = vpack.c.b16 %v3959, %v3955
        %v4144 = vpack.c.b16 %v3960, %v3956
        %v4145 = vpack.c.b16 %v3965, %v3961
        %v4146 = vpack.c.b16 %v3966, %v3962
        %v4147 = vpack.c.b16 %v3967, %v3963
        %v4148 = vpack.c.b16 %v3968, %v3964
        %v4149 = vpack.c.b16 %v3973, %v3969
        %v4150 = vpack.c.b16 %v3974, %v3970
        %v4151 = vpack.c.b16 %v3975, %v3971
        %v4152 = vpack.c.b16 %v3976, %v3972
        %v4153 = vpack.c.b16 %v3981, %v3977
        %v4154 = vpack.c.b16 %v3982, %v3978
        %v4155 = vpack.c.b16 %v3983, %v3979
        %v4156 = vpack.c.b16 %v3984, %v3980
        %v4157 = vpack.c.b16 %v3989, %v3985
        %v4158 = vpack.c.b16 %v3990, %v3986
        %v4159 = vpack.c.b16 %v3991, %v3987
        %v4160 = vpack.c.b16 %v3992, %v3988
        %v4161 = vpack.c.b16 %v3997, %v3993
        %v4162 = vpack.c.b16 %v3998, %v3994
        %v4163 = vpack.c.b16 %v3999, %v3995
        %v4164 = vpack.c.b16 %v4000, %v3996
        %v4165 = vpack.c.b16 %v4005, %v4001
        %v4166 = vpack.c.b16 %v4006, %v4002
        %v4167 = vpack.c.b16 %v4007, %v4003
        %v4168 = vpack.c.b16 %v4008, %v4004
        %v4169 = vpack.c.b16 %v4013, %v4009
        %v4170 = vpack.c.b16 %v4014, %v4010
        %v4171 = vpack.c.b16 %v4015, %v4011
        %v4172 = vpack.c.b16 %v4016, %v4012
        %v4173 = vpack.c.b16 %v4021, %v4017
        %v4174 = vpack.c.b16 %v4022, %v4018
        %v4175 = vpack.c.b16 %v4023, %v4019
        %v4176 = vpack.c.b16 %v4024, %v4020
        %v4177 = vpack.c.b16 %v4029, %v4025
        %v4178 = vpack.c.b16 %v4030, %v4026
        %v4179 = vpack.c.b16 %v4031, %v4027
        %v4180 = vpack.c.b16 %v4032, %v4028
        %v4181 = vpack.c.b16 %v4037, %v4033
        %v4182 = vpack.c.b16 %v4038, %v4034
        %v4183 = vpack.c.b16 %v4039, %v4035
        %v4184 = vpack.c.b16 %v4040, %v4036
        %v4185 = vpack.c.b16 %v4045, %v4041
        %v4186 = vpack.c.b16 %v4046, %v4042
        %v4187 = vpack.c.b16 %v4047, %v4043
        %v4188 = vpack.c.b16 %v4048, %v4044
        %v4189 = vpack.c.b16 %v4053, %v4049
        %v4190 = vpack.c.b16 %v4054, %v4050
        %v4191 = vpack.c.b16 %v4055, %v4051
        %v4192 = vpack.c.b16 %v4056, %v4052
        %v4193 = vpack.c.b16 %v4061, %v4057
        %v4194 = vpack.c.b16 %v4062, %v4058
        %v4195 = vpack.c.b16 %v4063, %v4059
        %v4196 = vpack.c.b16 %v4064, %v4060
        %v4197 = vpack.c.b16 %v4069, %v4065
        %v4198 = vpack.c.b16 %v4070, %v4066
        %v4199 = vpack.c.b16 %v4071, %v4067
        %v4200 = vpack.c.b16 %v4072, %v4068
        %4329 = vmatprep.subr.bf16.mxu0 %v4074
        %4330 = vmatpush1.bf16.msra.mxu0 %v4073
        %4331 = vmatprep.subr.bf16.mxu0 %v4078
        %4332 = vmatpush1.bf16.msra.mxu0 %v4077
        %4333 = vmatprep.subr.bf16.mxu0 %v4082
        %4334 = vmatpush1.bf16.msra.mxu0 %v4081
        %4335 = vmatprep.subr.bf16.mxu0 %v4086
        %4336 = vmatpush1.bf16.msra.mxu0 %v4085
        %4337 = vmatprep.subr.bf16.mxu0 %v4090
        %4338 = vmatpush1.bf16.msra.mxu0 %v4089
        %4339 = vmatprep.subr.bf16.mxu0 %v4094
        %4340 = vmatpush1.bf16.msra.mxu0 %v4093
        %4341 = vmatprep.subr.bf16.mxu0 %v4098
        %4342 = vmatpush1.bf16.msra.mxu0 %v4097
        %4343 = vmatprep.subr.bf16.mxu0 %v4102
        %4344 = vmatpush1.bf16.msra.mxu0 %v4101
        %4345 = vmatprep.subr.bf16.mxu0 %v4106
        %4346 = vmatpush1.bf16.msra.mxu0 %v4105
        %4347 = vmatprep.subr.bf16.mxu0 %v4110
        %4348 = vmatpush1.bf16.msra.mxu0 %v4109
        %4349 = vmatprep.subr.bf16.mxu0 %v4114
        %4350 = vmatpush1.bf16.msra.mxu0 %v4113
        %4351 = vmatprep.subr.bf16.mxu0 %v4118
        %4352 = vmatpush1.bf16.msra.mxu0 %v4117
        %4353 = vmatprep.subr.bf16.mxu0 %v4122
        %4354 = vmatpush1.bf16.msra.mxu0 %v4121
        %4355 = vmatprep.subr.bf16.mxu0 %v4126
        %4356 = vmatpush1.bf16.msra.mxu0 %v4125
        %4357 = vmatprep.subr.bf16.mxu0 %v4130
        %4358 = vmatpush1.bf16.msra.mxu0 %v4129
        %4359 = vmatprep.subr.bf16.mxu0 %v4134
        %4360 = vmatpush1.bf16.msra.mxu0 %v4133
        %4361 = vmatprep.mubr.bf16.mxu0 %v3508
        %4362 = vmatmul.mubr.bf16.gmra.mrb[0].mxu0 %v3507
        %v4363 = vpop.f32.mrb[0].mxu0
        %v4364 = vadd.f32 %v3672, %v4363
        %v4365 = vpop.f32.mrb[0].mxu0
        %v4366 = vadd.f32 %v3676, %v4365
        %v4367 = vpop.f32.mrb[0].mxu0
        %v4368 = vadd.f32 %v3672, %v4367
        %v4369 = vpop.f32.mrb[0].mxu0
        %v4370 = vadd.f32 %v3676, %v4369
        %4371 = vmatprep.mubr.bf16.mxu0 %v3512
        %4372 = vmatmul.mubr.bf16.gmra.mrb[0].mxu0 %v3511
        %v4373 = vpop.f32.mrb[0].mxu0
        %v4374 = vadd.f32 %v3672, %v4373
        %v4375 = vpop.f32.mrb[0].mxu0
        %v4376 = vadd.f32 %v3676, %v4375
        %v4377 = vpop.f32.mrb[0].mxu0
        %v4378 = vadd.f32 %v3672, %v4377
        %v4379 = vpop.f32.mrb[0].mxu0
        %v4380 = vadd.f32 %v3676, %v4379
        %4381 = vmatprep.mubr.bf16.mxu0 %v3516
        %4382 = vmatmul.mubr.bf16.gmra.mrb[0].mxu0 %v3515
        %v4383 = vpop.f32.mrb[0].mxu0
        %v4384 = vadd.f32 %v3672, %v4383
        %v4385 = vpop.f32.mrb[0].mxu0
        %v4386 = vadd.f32 %v3676, %v4385
        %v4387 = vpop.f32.mrb[0].mxu0
        %v4388 = vadd.f32 %v3672, %v4387
        %v4389 = vpop.f32.mrb[0].mxu0
        %v4390 = vadd.f32 %v3676, %v4389
        %4391 = vmatprep.mubr.bf16.mxu0 %v3520
        %4392 = vmatmul.mubr.bf16.gmra.mrb[0].mxu0 %v3519
        %v4393 = vpop.f32.mrb[0].mxu0
        %v4394 = vadd.f32 %v3672, %v4393
        %v4395 = vpop.f32.mrb[0].mxu0
        %v4396 = vadd.f32 %v3676, %v4395
        %v4397 = vpop.f32.mrb[0].mxu0
        %v4398 = vadd.f32 %v3672, %v4397
        %v4399 = vpop.f32.mrb[0].mxu0
        %v4400 = vadd.f32 %v3676, %v4399
        %4401 = vmatprep.mubr.bf16.mxu0 %v3524
        %4402 = vmatmul.mubr.bf16.gmra.mrb[0].mxu0 %v3523
        %v4403 = vpop.f32.mrb[0].mxu0
        %v4404 = vadd.f32 %v3672, %v4403
        %v4405 = vpop.f32.mrb[0].mxu0
        %v4406 = vadd.f32 %v3676, %v4405
        %v4407 = vpop.f32.mrb[0].mxu0
        %v4408 = vadd.f32 %v3672, %v4407
        %v4409 = vpop.f32.mrb[0].mxu0
        %v4410 = vadd.f32 %v3676, %v4409
        %4411 = vmatprep.mubr.bf16.mxu0 %v3528
        %4412 = vmatmul.mubr.bf16.gmra.mrb[0].mxu0 %v3527
        %v4413 = vpop.f32.mrb[0].mxu0
        %v4414 = vadd.f32 %v3672, %v4413
        %v4415 = vpop.f32.mrb[0].mxu0
        %v4416 = vadd.f32 %v3676, %v4415
        %v4417 = vpop.f32.mrb[0].mxu0
        %v4418 = vadd.f32 %v3672, %v4417
        %v4419 = vpop.f32.mrb[0].mxu0
        %v4420 = vadd.f32 %v3676, %v4419
        %4421 = vmatprep.mubr.bf16.mxu0 %v3532
        %4422 = vmatmul.mubr.bf16.gmra.mrb[0].mxu0 %v3531
        %v4423 = vpop.f32.mrb[0].mxu0
        %v4424 = vadd.f32 %v3672, %v4423
        %v4425 = vpop.f32.mrb[0].mxu0
        %v4426 = vadd.f32 %v3676, %v4425
        %v4427 = vpop.f32.mrb[0].mxu0
        %v4428 = vadd.f32 %v3672, %v4427
        %v4429 = vpop.f32.mrb[0].mxu0
        %v4430 = vadd.f32 %v3676, %v4429
        %4431 = vmatprep.mubr.bf16.mxu0 %v3536
        %4432 = vmatmul.mubr.bf16.gmra.mrb[0].mxu0 %v3535
        %v4433 = vpop.f32.mrb[0].mxu0
        %v4434 = vadd.f32 %v3672, %v4433
        %v4435 = vpop.f32.mrb[0].mxu0
        %v4436 = vadd.f32 %v3676, %v4435
        %v4437 = vpop.f32.mrb[0].mxu0
        %v4438 = vadd.f32 %v3672, %v4437
        %v4439 = vpop.f32.mrb[0].mxu0
        %v4440 = vadd.f32 %v3676, %v4439
        %4441 = vdwg.mxu0
        %4442 = vmatprep.subr.bf16.mxu0 %v4138
        %4443 = vmatpush1.bf16.msra.mxu0 %v4137
        %4444 = vmatprep.subr.bf16.mxu0 %v4142
        %4445 = vmatpush1.bf16.msra.mxu0 %v4141
        %4446 = vmatprep.subr.bf16.mxu0 %v4146
        %4447 = vmatpush1.bf16.msra.mxu0 %v4145
        %4448 = vmatprep.subr.bf16.mxu0 %v4150
        %4449 = vmatpush1.bf16.msra.mxu0 %v4149
        %4450 = vmatprep.subr.bf16.mxu0 %v4154
        %4451 = vmatpush1.bf16.msra.mxu0 %v4153
        %4452 = vmatprep.subr.bf16.mxu0 %v4158
        %4453 = vmatpush1.bf16.msra.mxu0 %v4157
        %4454 = vmatprep.subr.bf16.mxu0 %v4162
        %4455 = vmatpush1.bf16.msra.mxu0 %v4161
        %4456 = vmatprep.subr.bf16.mxu0 %v4166
        %4457 = vmatpush1.bf16.msra.mxu0 %v4165
        %4458 = vmatprep.subr.bf16.mxu0 %v4170
        %4459 = vmatpush1.bf16.msra.mxu0 %v4169
        %4460 = vmatprep.subr.bf16.mxu0 %v4174
        %4461 = vmatpush1.bf16.msra.mxu0 %v4173
        %4462 = vmatprep.subr.bf16.mxu0 %v4178
        %4463 = vmatpush1.bf16.msra.mxu0 %v4177
        %4464 = vmatprep.subr.bf16.mxu0 %v4182
        %4465 = vmatpush1.bf16.msra.mxu0 %v4181
        %4466 = vmatprep.subr.bf16.mxu0 %v4186
        %4467 = vmatpush1.bf16.msra.mxu0 %v4185
        %4468 = vmatprep.subr.bf16.mxu0 %v4190
        %4469 = vmatpush1.bf16.msra.mxu0 %v4189
        %4470 = vmatprep.subr.bf16.mxu0 %v4194
        %4471 = vmatpush1.bf16.msra.mxu0 %v4193
        %4472 = vmatprep.subr.bf16.mxu0 %v4198
        %4473 = vmatpush1.bf16.msra.mxu0 %v4197
        %4474 = vmatprep.mubr.bf16.mxu0 %v3510
        %4475 = vmatmul.mubr.bf16.gmra.mrb[0].mxu0 %v3509
        %v4476 = vpop.f32.mrb[0].mxu0
        %v4477 = vadd.f32 %v4364, %v4476
        %v4478 = vpop.f32.mrb[0].mxu0
        %v4479 = vadd.f32 %v4366, %v4478
        %v4480 = vpop.f32.mrb[0].mxu0
        %v4481 = vadd.f32 %v4368, %v4480
        %v4482 = vpop.f32.mrb[0].mxu0
        %v4483 = vadd.f32 %v4370, %v4482
        %4484 = vmatprep.mubr.bf16.mxu0 %v3514
        %4485 = vmatmul.mubr.bf16.gmra.mrb[0].mxu0 %v3513
        %v4486 = vpop.f32.mrb[0].mxu0
        %v4487 = vadd.f32 %v4374, %v4486
        %v4488 = vpop.f32.mrb[0].mxu0
        %v4489 = vadd.f32 %v4376, %v4488
        %v4490 = vpop.f32.mrb[0].mxu0
        %v4491 = vadd.f32 %v4378, %v4490
        %v4492 = vpop.f32.mrb[0].mxu0
        %v4493 = vadd.f32 %v4380, %v4492
        %4494 = vmatprep.mubr.bf16.mxu0 %v3518
        %4495 = vmatmul.mubr.bf16.gmra.mrb[0].mxu0 %v3517
        %v4496 = vpop.f32.mrb[0].mxu0
        %v4497 = vadd.f32 %v4384, %v4496
        %v4498 = vpop.f32.mrb[0].mxu0
        %v4499 = vadd.f32 %v4386, %v4498
        %v4500 = vpop.f32.mrb[0].mxu0
        %v4501 = vadd.f32 %v4388, %v4500
        %v4502 = vpop.f32.mrb[0].mxu0
        %v4503 = vadd.f32 %v4390, %v4502
        %4504 = vmatprep.mubr.bf16.mxu0 %v3522
        %4505 = vmatmul.mubr.bf16.gmra.mrb[0].mxu0 %v3521
        %v4506 = vpop.f32.mrb[0].mxu0
        %v4507 = vadd.f32 %v4394, %v4506
        %v4508 = vpop.f32.mrb[0].mxu0
        %v4509 = vadd.f32 %v4396, %v4508
        %v4510 = vpop.f32.mrb[0].mxu0
        %v4511 = vadd.f32 %v4398, %v4510
        %v4512 = vpop.f32.mrb[0].mxu0
        %v4513 = vadd.f32 %v4400, %v4512
        %4514 = vmatprep.mubr.bf16.mxu0 %v3526
        %4515 = vmatmul.mubr.bf16.gmra.mrb[0].mxu0 %v3525
        %v4516 = vpop.f32.mrb[0].mxu0
        %v4517 = vadd.f32 %v4404, %v4516
        %v4518 = vpop.f32.mrb[0].mxu0
        %v4519 = vadd.f32 %v4406, %v4518
        %v4520 = vpop.f32.mrb[0].mxu0
        %v4521 = vadd.f32 %v4408, %v4520
        %v4522 = vpop.f32.mrb[0].mxu0
        %v4523 = vadd.f32 %v4410, %v4522
        %4524 = vmatprep.mubr.bf16.mxu0 %v3530
        %4525 = vmatmul.mubr.bf16.gmra.mrb[0].mxu0 %v3529
        %v4526 = vpop.f32.mrb[0].mxu0
        %v4527 = vadd.f32 %v4414, %v4526
        %v4528 = vpop.f32.mrb[0].mxu0
        %v4529 = vadd.f32 %v4416, %v4528
        %v4530 = vpop.f32.mrb[0].mxu0
        %v4531 = vadd.f32 %v4418, %v4530
        %v4532 = vpop.f32.mrb[0].mxu0
        %v4533 = vadd.f32 %v4420, %v4532
        %4534 = vmatprep.mubr.bf16.mxu0 %v3534
        %4535 = vmatmul.mubr.bf16.gmra.mrb[0].mxu0 %v3533
        %v4536 = vpop.f32.mrb[0].mxu0
        %v4537 = vadd.f32 %v4424, %v4536
        %v4538 = vpop.f32.mrb[0].mxu0
        %v4539 = vadd.f32 %v4426, %v4538
        %v4540 = vpop.f32.mrb[0].mxu0
        %v4541 = vadd.f32 %v4428, %v4540
        %v4542 = vpop.f32.mrb[0].mxu0
        %v4543 = vadd.f32 %v4430, %v4542
        %4544 = vmatprep.mubr.bf16.mxu0 %v3538
        %4545 = vmatmul.mubr.bf16.gmra.mrb[0].mxu0 %v3537
        %v4546 = vpop.f32.mrb[0].mxu0
        %v4547 = vadd.f32 %v4434, %v4546
        %v4548 = vpop.f32.mrb[0].mxu0
        %v4549 = vadd.f32 %v4436, %v4548
        %v4550 = vpop.f32.mrb[0].mxu0
        %v4551 = vadd.f32 %v4438, %v4550
        %v4552 = vpop.f32.mrb[0].mxu0
        %v4553 = vadd.f32 %v4440, %v4552
        %4554 = vdwg.mxu0
        %4555 = vmatprep.subr.bf16.mxu0 %v4076
        %4556 = vmatpush1.bf16.msra.mxu0 %v4075
        %4557 = vmatprep.subr.bf16.mxu0 %v4080
        %4558 = vmatpush1.bf16.msra.mxu0 %v4079
        %4559 = vmatprep.subr.bf16.mxu0 %v4084
        %4560 = vmatpush1.bf16.msra.mxu0 %v4083
        %4561 = vmatprep.subr.bf16.mxu0 %v4088
        %4562 = vmatpush1.bf16.msra.mxu0 %v4087
        %4563 = vmatprep.subr.bf16.mxu0 %v4092
        %4564 = vmatpush1.bf16.msra.mxu0 %v4091
        %4565 = vmatprep.subr.bf16.mxu0 %v4096
        %4566 = vmatpush1.bf16.msra.mxu0 %v4095
        %4567 = vmatprep.subr.bf16.mxu0 %v4100
        %4568 = vmatpush1.bf16.msra.mxu0 %v4099
        %4569 = vmatprep.subr.bf16.mxu0 %v4104
        %4570 = vmatpush1.bf16.msra.mxu0 %v4103
        %4571 = vmatprep.subr.bf16.mxu0 %v4108
        %4572 = vmatpush1.bf16.msra.mxu0 %v4107
        %4573 = vmatprep.subr.bf16.mxu0 %v4112
        %4574 = vmatpush1.bf16.msra.mxu0 %v4111
        %4575 = vmatprep.subr.bf16.mxu0 %v4116
        %4576 = vmatpush1.bf16.msra.mxu0 %v4115
        %4577 = vmatprep.subr.bf16.mxu0 %v4120
        %4578 = vmatpush1.bf16.msra.mxu0 %v4119
        %4579 = vmatprep.subr.bf16.mxu0 %v4124
        %4580 = vmatpush1.bf16.msra.mxu0 %v4123
        %4581 = vmatprep.subr.bf16.mxu0 %v4128
        %4582 = vmatpush1.bf16.msra.mxu0 %v4127
        %4583 = vmatprep.subr.bf16.mxu0 %v4132
        %4584 = vmatpush1.bf16.msra.mxu0 %v4131
        %4585 = vmatprep.subr.bf16.mxu0 %v4136
        %4586 = vmatpush1.bf16.msra.mxu0 %v4135
        %4587 = vmatprep.mubr.bf16.mxu0 %v3508
        %4588 = vmatmul.mubr.bf16.gmra.mrb[0].mxu0 %v3507
        %v4589 = vpop.f32.mrb[0].mxu0
        %v4590 = vadd.f32 %v3680, %v4589
        %v4591 = vpop.f32.mrb[0].mxu0
        %v4592 = vadd.f32 %v3684, %v4591
        %v4593 = vpop.f32.mrb[0].mxu0
        %v4594 = vadd.f32 %v3680, %v4593
        %v4595 = vpop.f32.mrb[0].mxu0
        %v4596 = vadd.f32 %v3684, %v4595
        %4597 = vmatprep.mubr.bf16.mxu0 %v3512
        %4598 = vmatmul.mubr.bf16.gmra.mrb[0].mxu0 %v3511
        %v4599 = vpop.f32.mrb[0].mxu0
        %v4600 = vadd.f32 %v3680, %v4599
        %v4601 = vpop.f32.mrb[0].mxu0
        %v4602 = vadd.f32 %v3684, %v4601
        %v4603 = vpop.f32.mrb[0].mxu0
        %v4604 = vadd.f32 %v3680, %v4603
        %v4605 = vpop.f32.mrb[0].mxu0
        %v4606 = vadd.f32 %v3684, %v4605
        %4607 = vmatprep.mubr.bf16.mxu0 %v3516
        %4608 = vmatmul.mubr.bf16.gmra.mrb[0].mxu0 %v3515
        %v4609 = vpop.f32.mrb[0].mxu0
        %v4610 = vadd.f32 %v3680, %v4609
        %v4611 = vpop.f32.mrb[0].mxu0
        %v4612 = vadd.f32 %v3684, %v4611
        %v4613 = vpop.f32.mrb[0].mxu0
        %v4614 = vadd.f32 %v3680, %v4613
        %v4615 = vpop.f32.mrb[0].mxu0
        %v4616 = vadd.f32 %v3684, %v4615
        %4617 = vmatprep.mubr.bf16.mxu0 %v3520
        %4618 = vmatmul.mubr.bf16.gmra.mrb[0].mxu0 %v3519
        %v4619 = vpop.f32.mrb[0].mxu0
        %v4620 = vadd.f32 %v3680, %v4619
        %v4621 = vpop.f32.mrb[0].mxu0
        %v4622 = vadd.f32 %v3684, %v4621
        %v4623 = vpop.f32.mrb[0].mxu0
        %v4624 = vadd.f32 %v3680, %v4623
        %v4625 = vpop.f32.mrb[0].mxu0
        %v4626 = vadd.f32 %v3684, %v4625
        %4627 = vmatprep.mubr.bf16.mxu0 %v3524
        %4628 = vmatmul.mubr.bf16.gmra.mrb[0].mxu0 %v3523
        %v4629 = vpop.f32.mrb[0].mxu0
        %v4630 = vadd.f32 %v3680, %v4629
        %v4631 = vpop.f32.mrb[0].mxu0
        %v4632 = vadd.f32 %v3684, %v4631
        %v4633 = vpop.f32.mrb[0].mxu0
        %v4634 = vadd.f32 %v3680, %v4633
        %v4635 = vpop.f32.mrb[0].mxu0
        %v4636 = vadd.f32 %v3684, %v4635
        %4637 = vmatprep.mubr.bf16.mxu0 %v3528
        %4638 = vmatmul.mubr.bf16.gmra.mrb[0].mxu0 %v3527
        %v4639 = vpop.f32.mrb[0].mxu0
        %v4640 = vadd.f32 %v3680, %v4639
        %v4641 = vpop.f32.mrb[0].mxu0
        %v4642 = vadd.f32 %v3684, %v4641
        %v4643 = vpop.f32.mrb[0].mxu0
        %v4644 = vadd.f32 %v3680, %v4643
        %v4645 = vpop.f32.mrb[0].mxu0
        %v4646 = vadd.f32 %v3684, %v4645
        %4647 = vmatprep.mubr.bf16.mxu0 %v3532
        %4648 = vmatmul.mubr.bf16.gmra.mrb[0].mxu0 %v3531
        %v4649 = vpop.f32.mrb[0].mxu0
        %v4650 = vadd.f32 %v3680, %v4649
        %v4651 = vpop.f32.mrb[0].mxu0
        %v4652 = vadd.f32 %v3684, %v4651
        %v4653 = vpop.f32.mrb[0].mxu0
        %v4654 = vadd.f32 %v3680, %v4653
        %v4655 = vpop.f32.mrb[0].mxu0
        %v4656 = vadd.f32 %v3684, %v4655
        %4657 = vmatprep.mubr.bf16.mxu0 %v3536
        %4658 = vmatmul.mubr.bf16.gmra.mrb[0].mxu0 %v3535
        %v4659 = vpop.f32.mrb[0].mxu0
        %v4660 = vadd.f32 %v3680, %v4659
        %v4661 = vpop.f32.mrb[0].mxu0
        %v4662 = vadd.f32 %v3684, %v4661
        %v4663 = vpop.f32.mrb[0].mxu0
        %v4664 = vadd.f32 %v3680, %v4663
        %v4665 = vpop.f32.mrb[0].mxu0
        %v4666 = vadd.f32 %v3684, %v4665
        %4667 = vdwg.mxu0
        %4668 = vmatprep.subr.bf16.mxu0 %v4140
        %4669 = vmatpush1.bf16.msra.mxu0 %v4139
        %4670 = vmatprep.subr.bf16.mxu0 %v4144
        %4671 = vmatpush1.bf16.msra.mxu0 %v4143
        %4672 = vmatprep.subr.bf16.mxu0 %v4148
        %4673 = vmatpush1.bf16.msra.mxu0 %v4147
        %4674 = vmatprep.subr.bf16.mxu0 %v4152
        %4675 = vmatpush1.bf16.msra.mxu0 %v4151
        %4676 = vmatprep.subr.bf16.mxu0 %v4156
        %4677 = vmatpush1.bf16.msra.mxu0 %v4155
        %4678 = vmatprep.subr.bf16.mxu0 %v4160
        %4679 = vmatpush1.bf16.msra.mxu0 %v4159
        %4680 = vmatprep.subr.bf16.mxu0 %v4164
        %4681 = vmatpush1.bf16.msra.mxu0 %v4163
        %4682 = vmatprep.subr.bf16.mxu0 %v4168
        %4683 = vmatpush1.bf16.msra.mxu0 %v4167
        %4684 = vmatprep.subr.bf16.mxu0 %v4172
        %4685 = vmatpush1.bf16.msra.mxu0 %v4171
        %4686 = vmatprep.subr.bf16.mxu0 %v4176
        %4687 = vmatpush1.bf16.msra.mxu0 %v4175
        %4688 = vmatprep.subr.bf16.mxu0 %v4180
        %4689 = vmatpush1.bf16.msra.mxu0 %v4179
        %4690 = vmatprep.subr.bf16.mxu0 %v4184
        %4691 = vmatpush1.bf16.msra.mxu0 %v4183
        %4692 = vmatprep.subr.bf16.mxu0 %v4188
        %4693 = vmatpush1.bf16.msra.mxu0 %v4187
        %4694 = vmatprep.subr.bf16.mxu0 %v4192
        %4695 = vmatpush1.bf16.msra.mxu0 %v4191
        %4696 = vmatprep.subr.bf16.mxu0 %v4196
        %4697 = vmatpush1.bf16.msra.mxu0 %v4195
        %4698 = vmatprep.subr.bf16.mxu0 %v4200
        %4699 = vmatpush1.bf16.msra.mxu0 %v4199
        %4700 = vmatprep.mubr.bf16.mxu0 %v3510
        %4701 = vmatmul.mubr.bf16.gmra.mrb[0].mxu0 %v3509
        %v4702 = vpop.f32.mrb[0].mxu0
        %v4703 = vadd.f32 %v4590, %v4702
        %v4704 = vpop.f32.mrb[0].mxu0
        %v4705 = vadd.f32 %v4592, %v4704
        %v4706 = vpop.f32.mrb[0].mxu0
        %v4707 = vadd.f32 %v4594, %v4706
        %v4708 = vpop.f32.mrb[0].mxu0
        %v4709 = vadd.f32 %v4596, %v4708
        %4710 = vmatprep.mubr.bf16.mxu0 %v3514
        %4711 = vmatmul.mubr.bf16.gmra.mrb[0].mxu0 %v3513
        %v4712 = vpop.f32.mrb[0].mxu0
        %v4713 = vadd.f32 %v4600, %v4712
        %v4714 = vpop.f32.mrb[0].mxu0
        %v4715 = vadd.f32 %v4602, %v4714
        %v4716 = vpop.f32.mrb[0].mxu0
        %v4717 = vadd.f32 %v4604, %v4716
        %v4718 = vpop.f32.mrb[0].mxu0
        %v4719 = vadd.f32 %v4606, %v4718
        %4720 = vmatprep.mubr.bf16.mxu0 %v3518
        %4721 = vmatmul.mubr.bf16.gmra.mrb[0].mxu0 %v3517
        %v4722 = vpop.f32.mrb[0].mxu0
        %v4723 = vadd.f32 %v4610, %v4722
        %v4724 = vpop.f32.mrb[0].mxu0
        %v4725 = vadd.f32 %v4612, %v4724
        %v4726 = vpop.f32.mrb[0].mxu0
        %v4727 = vadd.f32 %v4614, %v4726
        %v4728 = vpop.f32.mrb[0].mxu0
        %v4729 = vadd.f32 %v4616, %v4728
        %4730 = vmatprep.mubr.bf16.mxu0 %v3522
        %4731 = vmatmul.mubr.bf16.gmra.mrb[0].mxu0 %v3521
        %v4732 = vpop.f32.mrb[0].mxu0
        %v4733 = vadd.f32 %v4620, %v4732
        %v4734 = vpop.f32.mrb[0].mxu0
        %v4735 = vadd.f32 %v4622, %v4734
        %v4736 = vpop.f32.mrb[0].mxu0
        %v4737 = vadd.f32 %v4624, %v4736
        %v4738 = vpop.f32.mrb[0].mxu0
        %v4739 = vadd.f32 %v4626, %v4738
        %4740 = vmatprep.mubr.bf16.mxu0 %v3526
        %4741 = vmatmul.mubr.bf16.gmra.mrb[0].mxu0 %v3525
        %v4742 = vpop.f32.mrb[0].mxu0
        %v4743 = vadd.f32 %v4630, %v4742
        %v4744 = vpop.f32.mrb[0].mxu0
        %v4745 = vadd.f32 %v4632, %v4744
        %v4746 = vpop.f32.mrb[0].mxu0
        %v4747 = vadd.f32 %v4634, %v4746
        %v4748 = vpop.f32.mrb[0].mxu0
        %v4749 = vadd.f32 %v4636, %v4748
        %4750 = vmatprep.mubr.bf16.mxu0 %v3530
        %4751 = vmatmul.mubr.bf16.gmra.mrb[0].mxu0 %v3529
        %v4752 = vpop.f32.mrb[0].mxu0
        %v4753 = vadd.f32 %v4640, %v4752
        %v4754 = vpop.f32.mrb[0].mxu0
        %v4755 = vadd.f32 %v4642, %v4754
        %v4756 = vpop.f32.mrb[0].mxu0
        %v4757 = vadd.f32 %v4644, %v4756
        %v4758 = vpop.f32.mrb[0].mxu0
        %v4759 = vadd.f32 %v4646, %v4758
        %4760 = vmatprep.mubr.bf16.mxu0 %v3534
        %4761 = vmatmul.mubr.bf16.gmra.mrb[0].mxu0 %v3533
        %v4762 = vpop.f32.mrb[0].mxu0
        %v4763 = vadd.f32 %v4650, %v4762
        %v4764 = vpop.f32.mrb[0].mxu0
        %v4765 = vadd.f32 %v4652, %v4764
        %v4766 = vpop.f32.mrb[0].mxu0
        %v4767 = vadd.f32 %v4654, %v4766
        %v4768 = vpop.f32.mrb[0].mxu0
        %v4769 = vadd.f32 %v4656, %v4768
        %4770 = vmatprep.mubr.bf16.mxu0 %v3538
        %4771 = vmatmul.mubr.bf16.gmra.mrb[0].mxu0 %v3537
        %v4772 = vpop.f32.mrb[0].mxu0
        %v4773 = vadd.f32 %v4660, %v4772
        %v4774 = vpop.f32.mrb[0].mxu0
        %v4775 = vadd.f32 %v4662, %v4774
        %v4776 = vpop.f32.mrb[0].mxu0
        %v4777 = vadd.f32 %v4664, %v4776
        %v4778 = vpop.f32.mrb[0].mxu0
        %v4779 = vadd.f32 %v4666, %v4778
        %4780 = vdwg.mxu0
        %v4781 = vmax.f32 %v4477, 0.0
        %v4782 = vmax.f32 %v4479, 0.0
        %v4783 = vmax.f32 %v4703, 0.0
        %v4784 = vmax.f32 %v4705, 0.0
        %v4785 = vmax.f32 %v4481, 0.0
        %v4786 = vmax.f32 %v4483, 0.0
        %v4787 = vmax.f32 %v4707, 0.0
        %v4788 = vmax.f32 %v4709, 0.0
        %v4789 = vmax.f32 %v4487, 0.0
        %v4790 = vmax.f32 %v4489, 0.0
        %v4791 = vmax.f32 %v4713, 0.0
        %v4792 = vmax.f32 %v4715, 0.0
        %v4793 = vmax.f32 %v4491, 0.0
        %v4794 = vmax.f32 %v4493, 0.0
        %v4795 = vmax.f32 %v4717, 0.0
        %v4796 = vmax.f32 %v4719, 0.0
        %v4797 = vmax.f32 %v4497, 0.0
        %v4798 = vmax.f32 %v4499, 0.0
        %v4799 = vmax.f32 %v4723, 0.0
        %v4800 = vmax.f32 %v4725, 0.0
        %v4801 = vmax.f32 %v4501, 0.0
        %v4802 = vmax.f32 %v4503, 0.0
        %v4803 = vmax.f32 %v4727, 0.0
        %v4804 = vmax.f32 %v4729, 0.0
        %v4805 = vmax.f32 %v4507, 0.0
        %v4806 = vmax.f32 %v4509, 0.0
        %v4807 = vmax.f32 %v4733, 0.0
        %v4808 = vmax.f32 %v4735, 0.0
        %v4809 = vmax.f32 %v4511, 0.0
        %v4810 = vmax.f32 %v4513, 0.0
        %v4811 = vmax.f32 %v4737, 0.0
        %v4812 = vmax.f32 %v4739, 0.0
        %v4813 = vmax.f32 %v4517, 0.0
        %v4814 = vmax.f32 %v4519, 0.0
        %v4815 = vmax.f32 %v4743, 0.0
        %v4816 = vmax.f32 %v4745, 0.0
        %v4817 = vmax.f32 %v4521, 0.0
        %v4818 = vmax.f32 %v4523, 0.0
        %v4819 = vmax.f32 %v4747, 0.0
        %v4820 = vmax.f32 %v4749, 0.0
        %v4821 = vmax.f32 %v4527, 0.0
        %v4822 = vmax.f32 %v4529, 0.0
        %v4823 = vmax.f32 %v4753, 0.0
        %v4824 = vmax.f32 %v4755, 0.0
        %v4825 = vmax.f32 %v4531, 0.0
        %v4826 = vmax.f32 %v4533, 0.0
        %v4827 = vmax.f32 %v4757, 0.0
        %v4828 = vmax.f32 %v4759, 0.0
        %v4829 = vmax.f32 %v4537, 0.0
        %v4830 = vmax.f32 %v4539, 0.0
        %v4831 = vmax.f32 %v4763, 0.0
        %v4832 = vmax.f32 %v4765, 0.0
        %v4833 = vmax.f32 %v4541, 0.0
        %v4834 = vmax.f32 %v4543, 0.0
        %v4835 = vmax.f32 %v4767, 0.0
        %v4836 = vmax.f32 %v4769, 0.0
        %v4837 = vmax.f32 %v4547, 0.0
        %v4838 = vmax.f32 %v4549, 0.0
        %v4839 = vmax.f32 %v4773, 0.0
        %v4840 = vmax.f32 %v4775, 0.0
        %v4841 = vmax.f32 %v4551, 0.0
        %v4842 = vmax.f32 %v4553, 0.0
        %v4843 = vmax.f32 %v4777, 0.0
        %v4844 = vmax.f32 %v4779, 0.0
        %v4845 = vpack.c.bf16 %v4785, %v4781
        %v4846 = vpack.c.bf16 %v4786, %v4782
        %v4847 = vpack.c.bf16 %v4787, %v4783
        %v4848 = vpack.c.bf16 %v4788, %v4784
        %v4849 = vpack.c.bf16 %v4793, %v4789
        %v4850 = vpack.c.bf16 %v4794, %v4790
        %v4851 = vpack.c.bf16 %v4795, %v4791
        %v4852 = vpack.c.bf16 %v4796, %v4792
        %v4853 = vpack.c.bf16 %v4801, %v4797
        %v4854 = vpack.c.bf16 %v4802, %v4798
        %v4855 = vpack.c.bf16 %v4803, %v4799
        %v4856 = vpack.c.bf16 %v4804, %v4800
        %v4857 = vpack.c.bf16 %v4809, %v4805
        %v4858 = vpack.c.bf16 %v4810, %v4806
        %v4859 = vpack.c.bf16 %v4811, %v4807
        %v4860 = vpack.c.bf16 %v4812, %v4808
        %v4861 = vpack.c.bf16 %v4817, %v4813
        %v4862 = vpack.c.bf16 %v4818, %v4814
        %v4863 = vpack.c.bf16 %v4819, %v4815
        %v4864 = vpack.c.bf16 %v4820, %v4816
        %v4865 = vpack.c.bf16 %v4825, %v4821
        %v4866 = vpack.c.bf16 %v4826, %v4822
        %v4867 = vpack.c.bf16 %v4827, %v4823
        %v4868 = vpack.c.bf16 %v4828, %v4824
        %v4869 = vpack.c.bf16 %v4833, %v4829
        %v4870 = vpack.c.bf16 %v4834, %v4830
        %v4871 = vpack.c.bf16 %v4835, %v4831
        %v4872 = vpack.c.bf16 %v4836, %v4832
        %v4873 = vpack.c.bf16 %v4841, %v4837
        %v4874 = vpack.c.bf16 %v4842, %v4838
        %v4875 = vpack.c.bf16 %v4843, %v4839
        %v4876 = vpack.c.bf16 %v4844, %v4840
        %v4877 = vld [vmem:[%s9] sm:$0xf]
        %v4878 = vld [vmem:[%s9 + $0x4] sm:$0xf]
        %v4879 = vld [vmem:[%s9 + $0x8] sm:$0xf]
        %v4880 = vld [vmem:[%s9 + $0xc] sm:$0xf]
        %v4881 = vld [vmem:[%s9 + $0x10] sm:$0xf]
        %v4882 = vld [vmem:[%s9 + $0x14] sm:$0xf]
        %v4883 = vld [vmem:[%s9 + $0x18] sm:$0xf]
        %v4884 = vld [vmem:[%s9 + $0x1c] sm:$0xf]
        %v4885 = vld [vmem:[%s9 + $0x20] sm:$0xf]
        %v4886 = vld [vmem:[%s9 + $0x24] sm:$0xf]
        %v4887 = vld [vmem:[%s9 + $0x28] sm:$0xf]
        %v4888 = vld [vmem:[%s9 + $0x2c] sm:$0xf]
        %v4889 = vld [vmem:[%s9 + $0x30] sm:$0xf]
        %v4890 = vld [vmem:[%s9 + $0x34] sm:$0xf]
        %v4891 = vld [vmem:[%s9 + $0x38] sm:$0xf]
        %v4892 = vld [vmem:[%s9 + $0x3c] sm:$0xf]
        %v4893 = vld [vmem:[%s9 + $0x40] sm:$0xf]
        %v4894 = vld [vmem:[%s9 + $0x44] sm:$0xf]
        %v4895 = vld [vmem:[%s9 + $0x48] sm:$0xf]
        %v4896 = vld [vmem:[%s9 + $0x4c] sm:$0xf]
        %v4897 = vld [vmem:[%s9 + $0x50] sm:$0xf]
        %v4898 = vld [vmem:[%s9 + $0x54] sm:$0xf]
        %v4899 = vld [vmem:[%s9 + $0x58] sm:$0xf]
        %v4900 = vld [vmem:[%s9 + $0x5c] sm:$0xf]
        %v4901 = vld [vmem:[%s9 + $0x60] sm:$0xf]
        %v4902 = vld [vmem:[%s9 + $0x64] sm:$0xf]
        %v4903 = vld [vmem:[%s9 + $0x68] sm:$0xf]
        %v4904 = vld [vmem:[%s9 + $0x6c] sm:$0xf]
        %v4905 = vld [vmem:[%s9 + $0x70] sm:$0xf]
        %v4906 = vld [vmem:[%s9 + $0x74] sm:$0xf]
        %v4907 = vld [vmem:[%s9 + $0x78] sm:$0xf]
        %v4908 = vld [vmem:[%s9 + $0x7c] sm:$0xf]
        %v4909 = vld [vmem:[%s9 + $0x80] sm:$0xf]
        %v4910 = vld [vmem:[%s9 + $0x84] sm:$0xf]
        %v4911 = vld [vmem:[%s9 + $0x88] sm:$0xf]
        %v4912 = vld [vmem:[%s9 + $0x8c] sm:$0xf]
        %v4913 = vld [vmem:[%s9 + $0x90] sm:$0xf]
        %v4914 = vld [vmem:[%s9 + $0x94] sm:$0xf]
        %v4915 = vld [vmem:[%s9 + $0x98] sm:$0xf]
        %v4916 = vld [vmem:[%s9 + $0x9c] sm:$0xf]
        %v4917 = vld [vmem:[%s9 + $0xa0] sm:$0xf]
        %v4918 = vld [vmem:[%s9 + $0xa4] sm:$0xf]
        %v4919 = vld [vmem:[%s9 + $0xa8] sm:$0xf]
        %v4920 = vld [vmem:[%s9 + $0xac] sm:$0xf]
        %v4921 = vld [vmem:[%s9 + $0xb0] sm:$0xf]
        %v4922 = vld [vmem:[%s9 + $0xb4] sm:$0xf]
        %v4923 = vld [vmem:[%s9 + $0xb8] sm:$0xf]
        %v4924 = vld [vmem:[%s9 + $0xbc] sm:$0xf]
        %v4925 = vld [vmem:[%s9 + $0xc0] sm:$0xf]
        %v4926 = vld [vmem:[%s9 + $0xc4] sm:$0xf]
        %v4927 = vld [vmem:[%s9 + $0xc8] sm:$0xf]
        %v4928 = vld [vmem:[%s9 + $0xcc] sm:$0xf]
        %v4929 = vld [vmem:[%s9 + $0xd0] sm:$0xf]
        %v4930 = vld [vmem:[%s9 + $0xd4] sm:$0xf]
        %v4931 = vld [vmem:[%s9 + $0xd8] sm:$0xf]
        %v4932 = vld [vmem:[%s9 + $0xdc] sm:$0xf]
        %v4933 = vld [vmem:[%s9 + $0xe0] sm:$0xf]
        %v4934 = vld [vmem:[%s9 + $0xe4] sm:$0xf]
        %v4935 = vld [vmem:[%s9 + $0xe8] sm:$0xf]
        %v4936 = vld [vmem:[%s9 + $0xec] sm:$0xf]
        %v4937 = vld [vmem:[%s9 + $0xf0] sm:$0xf]
        %v4938 = vld [vmem:[%s9 + $0xf4] sm:$0xf]
        %v4939 = vld [vmem:[%s9 + $0xf8] sm:$0xf]
        %v4940 = vld [vmem:[%s9 + $0xfc] sm:$0xf]
        %v4941 = vld [vmem:[#allocation2] sm:$0x1]
        %v4943 = vlaneseq
        %v4944 = vshrl.u32 %v4943, 7
        %v4945 = vsub.s32 0, %v4944
        %v4946 = vrot.slane %v4941, %v4945
        %v5012 = vunpack.c.l.b16 %v4877
        %v5013 = vunpack.c.l.b16 %v4878
        %v5014 = vunpack.c.l.b16 %v4879
        %v5015 = vunpack.c.l.b16 %v4880
        %v5016 = vunpack.c.l.b16 %v4881
        %v5017 = vunpack.c.l.b16 %v4882
        %v5018 = vunpack.c.l.b16 %v4883
        %v5019 = vunpack.c.l.b16 %v4884
        %v5020 = vunpack.c.l.b16 %v4885
        %v5021 = vunpack.c.l.b16 %v4886
        %v5022 = vunpack.c.l.b16 %v4887
        %v5023 = vunpack.c.l.b16 %v4888
        %v5024 = vunpack.c.l.b16 %v4889
        %v5025 = vunpack.c.l.b16 %v4890
        %v5026 = vunpack.c.l.b16 %v4891
        %v5027 = vunpack.c.l.b16 %v4892
        %v5028 = vunpack.c.l.b16 %v4893
        %v5029 = vunpack.c.l.b16 %v4894
        %v5030 = vunpack.c.l.b16 %v4895
        %v5031 = vunpack.c.l.b16 %v4896
        %v5032 = vunpack.c.l.b16 %v4897
        %v5033 = vunpack.c.l.b16 %v4898
        %v5034 = vunpack.c.l.b16 %v4899
        %v5035 = vunpack.c.l.b16 %v4900
        %v5036 = vunpack.c.l.b16 %v4901
        %v5037 = vunpack.c.l.b16 %v4902
        %v5038 = vunpack.c.l.b16 %v4903
        %v5039 = vunpack.c.l.b16 %v4904
        %v5040 = vunpack.c.l.b16 %v4905
        %v5041 = vunpack.c.l.b16 %v4906
        %v5042 = vunpack.c.l.b16 %v4907
        %v5043 = vunpack.c.l.b16 %v4908
        %v5044 = vunpack.c.l.b16 %v4909
        %v5045 = vunpack.c.l.b16 %v4910
        %v5046 = vunpack.c.l.b16 %v4911
        %v5047 = vunpack.c.l.b16 %v4912
        %v5048 = vunpack.c.l.b16 %v4913
        %v5049 = vunpack.c.l.b16 %v4914
        %v5050 = vunpack.c.l.b16 %v4915
        %v5051 = vunpack.c.l.b16 %v4916
        %v5052 = vunpack.c.l.b16 %v4917
        %v5053 = vunpack.c.l.b16 %v4918
        %v5054 = vunpack.c.l.b16 %v4919
        %v5055 = vunpack.c.l.b16 %v4920
        %v5056 = vunpack.c.l.b16 %v4921
        %v5057 = vunpack.c.l.b16 %v4922
        %v5058 = vunpack.c.l.b16 %v4923
        %v5059 = vunpack.c.l.b16 %v4924
        %v5060 = vunpack.c.l.b16 %v4925
        %v5061 = vunpack.c.l.b16 %v4926
        %v5062 = vunpack.c.l.b16 %v4927
        %v5063 = vunpack.c.l.b16 %v4928
        %v5064 = vunpack.c.l.b16 %v4929
        %v5065 = vunpack.c.l.b16 %v4930
        %v5066 = vunpack.c.l.b16 %v4931
        %v5067 = vunpack.c.l.b16 %v4932
        %v5068 = vunpack.c.l.b16 %v4933
        %v5069 = vunpack.c.l.b16 %v4934
        %v5070 = vunpack.c.l.b16 %v4935
        %v5071 = vunpack.c.l.b16 %v4936
        %v5072 = vunpack.c.l.b16 %v4937
        %v5073 = vunpack.c.l.b16 %v4938
        %v5074 = vunpack.c.l.b16 %v4939
        %v5075 = vunpack.c.l.b16 %v4940
        %v5076 = vpack.c.b16 %v5013, %v5012
        %v5077 = vpack.c.b16 %v5015, %v5014
        %v5078 = vpack.c.b16 %v5017, %v5016
        %v5079 = vpack.c.b16 %v5019, %v5018
        %v5080 = vpack.c.b16 %v5021, %v5020
        %v5081 = vpack.c.b16 %v5023, %v5022
        %v5082 = vpack.c.b16 %v5025, %v5024
        %v5083 = vpack.c.b16 %v5027, %v5026
        %v5084 = vpack.c.b16 %v5029, %v5028
        %v5085 = vpack.c.b16 %v5031, %v5030
        %v5086 = vpack.c.b16 %v5033, %v5032
        %v5087 = vpack.c.b16 %v5035, %v5034
        %v5088 = vpack.c.b16 %v5037, %v5036
        %v5089 = vpack.c.b16 %v5039, %v5038
        %v5090 = vpack.c.b16 %v5041, %v5040
        %v5091 = vpack.c.b16 %v5043, %v5042
        %v5092 = vpack.c.b16 %v5045, %v5044
        %v5093 = vpack.c.b16 %v5047, %v5046
        %v5094 = vpack.c.b16 %v5049, %v5048
        %v5095 = vpack.c.b16 %v5051, %v5050
        %v5096 = vpack.c.b16 %v5053, %v5052
        %v5097 = vpack.c.b16 %v5055, %v5054
        %v5098 = vpack.c.b16 %v5057, %v5056
        %v5099 = vpack.c.b16 %v5059, %v5058
        %v5100 = vpack.c.b16 %v5061, %v5060
        %v5101 = vpack.c.b16 %v5063, %v5062
        %v5102 = vpack.c.b16 %v5065, %v5064
        %v5103 = vpack.c.b16 %v5067, %v5066
        %v5104 = vpack.c.b16 %v5069, %v5068
        %v5105 = vpack.c.b16 %v5071, %v5070
        %v5106 = vpack.c.b16 %v5073, %v5072
        %v5107 = vpack.c.b16 %v5075, %v5074
        %5140 = vmatprep.subr.bf16.mxu0 0
        %5141 = vmatpush1.bf16.msra.mxu0 %v5076
        %5142 = vmatprep.subr.bf16.mxu0 0
        %5143 = vmatpush1.bf16.msra.mxu0 %v5077
        %5144 = vmatprep.subr.bf16.mxu0 0
        %5145 = vmatpush1.bf16.msra.mxu0 %v5078
        %5146 = vmatprep.subr.bf16.mxu0 0
        %5147 = vmatpush1.bf16.msra.mxu0 %v5079
        %5148 = vmatprep.subr.bf16.mxu0 0
        %5149 = vmatpush1.bf16.msra.mxu0 %v5080
        %5150 = vmatprep.subr.bf16.mxu0 0
        %5151 = vmatpush1.bf16.msra.mxu0 %v5081
        %5152 = vmatprep.subr.bf16.mxu0 0
        %5153 = vmatpush1.bf16.msra.mxu0 %v5082
        %5154 = vmatprep.subr.bf16.mxu0 0
        %5155 = vmatpush1.bf16.msra.mxu0 %v5083
        %5156 = vmatprep.subr.bf16.mxu0 0
        %5157 = vmatpush1.bf16.msra.mxu0 %v5084
        %5158 = vmatprep.subr.bf16.mxu0 0
        %5159 = vmatpush1.bf16.msra.mxu0 %v5085
        %5160 = vmatprep.subr.bf16.mxu0 0
        %5161 = vmatpush1.bf16.msra.mxu0 %v5086
        %5162 = vmatprep.subr.bf16.mxu0 0
        %5163 = vmatpush1.bf16.msra.mxu0 %v5087
        %5164 = vmatprep.subr.bf16.mxu0 0
        %5165 = vmatpush1.bf16.msra.mxu0 %v5088
        %5166 = vmatprep.subr.bf16.mxu0 0
        %5167 = vmatpush1.bf16.msra.mxu0 %v5089
        %5168 = vmatprep.subr.bf16.mxu0 0
        %5169 = vmatpush1.bf16.msra.mxu0 %v5090
        %5170 = vmatprep.subr.bf16.mxu0 0
        %5171 = vmatpush1.bf16.msra.mxu0 %v5091
        %5172 = vmatprep.mubr.bf16.mxu0 %v4846
        %5173 = vmatmul.mubr.bf16.gmra.mrb[0].mxu0 %v4845
        %v5174 = vpop.f32.mrb[0].mxu0
        %v5175 = vadd.f32 %v4946, %v5174
        %v5176 = vpop.f32.mrb[0].mxu0
        %v5177 = vpop.f32.mrb[0].mxu0
        %v5178 = vadd.f32 %v4946, %v5177
        %v5179 = vpop.f32.mrb[0].mxu0
        %5180 = vmatprep.mubr.bf16.mxu0 %v4850
        %5181 = vmatmul.mubr.bf16.gmra.mrb[0].mxu0 %v4849
        %v5182 = vpop.f32.mrb[0].mxu0
        %v5183 = vadd.f32 %v4946, %v5182
        %v5184 = vpop.f32.mrb[0].mxu0
        %v5185 = vpop.f32.mrb[0].mxu0
        %v5186 = vadd.f32 %v4946, %v5185
        %v5187 = vpop.f32.mrb[0].mxu0
        %5188 = vmatprep.mubr.bf16.mxu0 %v4854
        %5189 = vmatmul.mubr.bf16.gmra.mrb[0].mxu0 %v4853
        %v5190 = vpop.f32.mrb[0].mxu0
        %v5191 = vadd.f32 %v4946, %v5190
        %v5192 = vpop.f32.mrb[0].mxu0
        %v5193 = vpop.f32.mrb[0].mxu0
        %v5194 = vadd.f32 %v4946, %v5193
        %v5195 = vpop.f32.mrb[0].mxu0
        %5196 = vmatprep.mubr.bf16.mxu0 %v4858
        %5197 = vmatmul.mubr.bf16.gmra.mrb[0].mxu0 %v4857
        %v5198 = vpop.f32.mrb[0].mxu0
        %v5199 = vadd.f32 %v4946, %v5198
        %v5200 = vpop.f32.mrb[0].mxu0
        %v5201 = vpop.f32.mrb[0].mxu0
        %v5202 = vadd.f32 %v4946, %v5201
        %v5203 = vpop.f32.mrb[0].mxu0
        %5204 = vmatprep.mubr.bf16.mxu0 %v4862
        %5205 = vmatmul.mubr.bf16.gmra.mrb[0].mxu0 %v4861
        %v5206 = vpop.f32.mrb[0].mxu0
        %v5207 = vadd.f32 %v4946, %v5206
        %v5208 = vpop.f32.mrb[0].mxu0
        %v5209 = vpop.f32.mrb[0].mxu0
        %v5210 = vadd.f32 %v4946, %v5209
        %v5211 = vpop.f32.mrb[0].mxu0
        %5212 = vmatprep.mubr.bf16.mxu0 %v4866
        %5213 = vmatmul.mubr.bf16.gmra.mrb[0].mxu0 %v4865
        %v5214 = vpop.f32.mrb[0].mxu0
        %v5215 = vadd.f32 %v4946, %v5214
        %v5216 = vpop.f32.mrb[0].mxu0
        %v5217 = vpop.f32.mrb[0].mxu0
        %v5218 = vadd.f32 %v4946, %v5217
        %v5219 = vpop.f32.mrb[0].mxu0
        %5220 = vmatprep.mubr.bf16.mxu0 %v4870
        %5221 = vmatmul.mubr.bf16.gmra.mrb[0].mxu0 %v4869
        %v5222 = vpop.f32.mrb[0].mxu0
        %v5223 = vadd.f32 %v4946, %v5222
        %v5224 = vpop.f32.mrb[0].mxu0
        %v5225 = vpop.f32.mrb[0].mxu0
        %v5226 = vadd.f32 %v4946, %v5225
        %v5227 = vpop.f32.mrb[0].mxu0
        %5228 = vmatprep.mubr.bf16.mxu0 %v4874
        %5229 = vmatmul.mubr.bf16.gmra.mrb[0].mxu0 %v4873
        %v5230 = vpop.f32.mrb[0].mxu0
        %v5231 = vadd.f32 %v4946, %v5230
        %v5232 = vpop.f32.mrb[0].mxu0
        %v5233 = vpop.f32.mrb[0].mxu0
        %v5234 = vadd.f32 %v4946, %v5233
        %v5235 = vpop.f32.mrb[0].mxu0
        %5236 = vdwg.mxu0
        %5237 = vmatprep.subr.bf16.mxu0 0
        %5238 = vmatpush1.bf16.msra.mxu0 %v5092
        %5239 = vmatprep.subr.bf16.mxu0 0
        %5240 = vmatpush1.bf16.msra.mxu0 %v5093
        %5241 = vmatprep.subr.bf16.mxu0 0
        %5242 = vmatpush1.bf16.msra.mxu0 %v5094
        %5243 = vmatprep.subr.bf16.mxu0 0
        %5244 = vmatpush1.bf16.msra.mxu0 %v5095
        %5245 = vmatprep.subr.bf16.mxu0 0
        %5246 = vmatpush1.bf16.msra.mxu0 %v5096
        %5247 = vmatprep.subr.bf16.mxu0 0
        %5248 = vmatpush1.bf16.msra.mxu0 %v5097
        %5249 = vmatprep.subr.bf16.mxu0 0
        %5250 = vmatpush1.bf16.msra.mxu0 %v5098
        %5251 = vmatprep.subr.bf16.mxu0 0
        %5252 = vmatpush1.bf16.msra.mxu0 %v5099
        %5253 = vmatprep.subr.bf16.mxu0 0
        %5254 = vmatpush1.bf16.msra.mxu0 %v5100
        %5255 = vmatprep.subr.bf16.mxu0 0
        %5256 = vmatpush1.bf16.msra.mxu0 %v5101
        %5257 = vmatprep.subr.bf16.mxu0 0
        %5258 = vmatpush1.bf16.msra.mxu0 %v5102
        %5259 = vmatprep.subr.bf16.mxu0 0
        %5260 = vmatpush1.bf16.msra.mxu0 %v5103
        %5261 = vmatprep.subr.bf16.mxu0 0
        %5262 = vmatpush1.bf16.msra.mxu0 %v5104
        %5263 = vmatprep.subr.bf16.mxu0 0
        %5264 = vmatpush1.bf16.msra.mxu0 %v5105
        %5265 = vmatprep.subr.bf16.mxu0 0
        %5266 = vmatpush1.bf16.msra.mxu0 %v5106
        %5267 = vmatprep.subr.bf16.mxu0 0
        %5268 = vmatpush1.bf16.msra.mxu0 %v5107
        %5269 = vmatprep.mubr.bf16.mxu0 %v4848
        %5270 = vmatmul.mubr.bf16.gmra.mrb[0].mxu0 %v4847
        %v5271 = vpop.f32.mrb[0].mxu0
        %v5272 = vadd.f32 %v5175, %v5271
        %v5273 = vpop.f32.mrb[0].mxu0
        %v5274 = vpop.f32.mrb[0].mxu0
        %v5275 = vadd.f32 %v5178, %v5274
        %v5276 = vpop.f32.mrb[0].mxu0
        %5277 = vmatprep.mubr.bf16.mxu0 %v4852
        %5278 = vmatmul.mubr.bf16.gmra.mrb[0].mxu0 %v4851
        %v5279 = vpop.f32.mrb[0].mxu0
        %v5280 = vadd.f32 %v5183, %v5279
        %v5281 = vpop.f32.mrb[0].mxu0
        %v5282 = vpop.f32.mrb[0].mxu0
        %v5283 = vadd.f32 %v5186, %v5282
        %v5284 = vpop.f32.mrb[0].mxu0
        %5285 = vmatprep.mubr.bf16.mxu0 %v4856
        %5286 = vmatmul.mubr.bf16.gmra.mrb[0].mxu0 %v4855
        %v5287 = vpop.f32.mrb[0].mxu0
        %v5288 = vadd.f32 %v5191, %v5287
        %v5289 = vpop.f32.mrb[0].mxu0
        %v5290 = vpop.f32.mrb[0].mxu0
        %v5291 = vadd.f32 %v5194, %v5290
        %v5292 = vpop.f32.mrb[0].mxu0
        %5293 = vmatprep.mubr.bf16.mxu0 %v4860
        %5294 = vmatmul.mubr.bf16.gmra.mrb[0].mxu0 %v4859
        %v5295 = vpop.f32.mrb[0].mxu0
        %v5296 = vadd.f32 %v5199, %v5295
        %v5297 = vpop.f32.mrb[0].mxu0
        %v5298 = vpop.f32.mrb[0].mxu0
        %v5299 = vadd.f32 %v5202, %v5298
        %v5300 = vpop.f32.mrb[0].mxu0
        %5301 = vmatprep.mubr.bf16.mxu0 %v4864
        %5302 = vmatmul.mubr.bf16.gmra.mrb[0].mxu0 %v4863
        %v5303 = vpop.f32.mrb[0].mxu0
        %v5304 = vadd.f32 %v5207, %v5303
        %v5305 = vpop.f32.mrb[0].mxu0
        %v5306 = vpop.f32.mrb[0].mxu0
        %v5307 = vadd.f32 %v5210, %v5306
        %v5308 = vpop.f32.mrb[0].mxu0
        %5309 = vmatprep.mubr.bf16.mxu0 %v4868
        %5310 = vmatmul.mubr.bf16.gmra.mrb[0].mxu0 %v4867
        %v5311 = vpop.f32.mrb[0].mxu0
        %v5312 = vadd.f32 %v5215, %v5311
        %v5313 = vpop.f32.mrb[0].mxu0
        %v5314 = vpop.f32.mrb[0].mxu0
        %v5315 = vadd.f32 %v5218, %v5314
        %v5316 = vpop.f32.mrb[0].mxu0
        %5317 = vmatprep.mubr.bf16.mxu0 %v4872
        %5318 = vmatmul.mubr.bf16.gmra.mrb[0].mxu0 %v4871
        %v5319 = vpop.f32.mrb[0].mxu0
        %v5320 = vadd.f32 %v5223, %v5319
        %v5321 = vpop.f32.mrb[0].mxu0
        %v5322 = vpop.f32.mrb[0].mxu0
        %v5323 = vadd.f32 %v5226, %v5322
        %v5324 = vpop.f32.mrb[0].mxu0
        %5325 = vmatprep.mubr.bf16.mxu0 %v4876
        %5326 = vmatmul.mubr.bf16.gmra.mrb[0].mxu0 %v4875
        %v5327 = vpop.f32.mrb[0].mxu0
        %v5328 = vadd.f32 %v5231, %v5327
        %v5329 = vpop.f32.mrb[0].mxu0
        %v5330 = vpop.f32.mrb[0].mxu0
        %v5331 = vadd.f32 %v5234, %v5330
        %v5332 = vpop.f32.mrb[0].mxu0
        %5333 = vdwg.mxu0
        %v5334 = vsub.f32 0.0, %v5272
        %v5335 = vsub.f32 0.0, %v5275
        %v5336 = vsub.f32 0.0, %v5280
        %v5337 = vsub.f32 0.0, %v5283
        %v5338 = vsub.f32 0.0, %v5288
        %v5339 = vsub.f32 0.0, %v5291
        %v5340 = vsub.f32 0.0, %v5296
        %v5341 = vsub.f32 0.0, %v5299
        %v5342 = vsub.f32 0.0, %v5304
        %v5343 = vsub.f32 0.0, %v5307
        %v5344 = vsub.f32 0.0, %v5312
        %v5345 = vsub.f32 0.0, %v5315
        %v5346 = vsub.f32 0.0, %v5320
        %v5347 = vsub.f32 0.0, %v5323
        %v5348 = vsub.f32 0.0, %v5328
        %v5349 = vsub.f32 0.0, %v5331
        %v5350 = vmul.f32 %v5334, 1.442695
        %v5351 = vpow.pop %v5350
        %v5352 = vmul.f32 %v5335, 1.442695
        %v5353 = vpow.pop %v5352
        %v5354 = vmul.f32 %v5336, 1.442695
        %v5355 = vpow.pop %v5354
        %v5356 = vmul.f32 %v5337, 1.442695
        %v5357 = vpow.pop %v5356
        %v5358 = vmul.f32 %v5338, 1.442695
        %v5359 = vpow.pop %v5358
        %v5360 = vmul.f32 %v5339, 1.442695
        %v5361 = vpow.pop %v5360
        %v5362 = vmul.f32 %v5340, 1.442695
        %v5363 = vpow.pop %v5362
        %v5364 = vmul.f32 %v5341, 1.442695
        %v5365 = vpow.pop %v5364
        %v5366 = vmul.f32 %v5342, 1.442695
        %v5367 = vpow.pop %v5366
        %v5368 = vmul.f32 %v5343, 1.442695
        %v5369 = vpow.pop %v5368
        %v5370 = vmul.f32 %v5344, 1.442695
        %v5371 = vpow.pop %v5370
        %v5372 = vmul.f32 %v5345, 1.442695
        %v5373 = vpow.pop %v5372
        %v5374 = vmul.f32 %v5346, 1.442695
        %v5375 = vpow.pop %v5374
        %v5376 = vmul.f32 %v5347, 1.442695
        %v5377 = vpow.pop %v5376
        %v5378 = vmul.f32 %v5348, 1.442695
        %v5379 = vpow.pop %v5378
        %v5380 = vmul.f32 %v5349, 1.442695
        %v5381 = vpow.pop %v5380
        %v5382 = vadd.f32 %v5351, 1.0
        %v5383 = vadd.f32 %v5353, 1.0
        %v5384 = vadd.f32 %v5355, 1.0
        %v5385 = vadd.f32 %v5357, 1.0
        %v5386 = vadd.f32 %v5359, 1.0
        %v5387 = vadd.f32 %v5361, 1.0
        %v5388 = vadd.f32 %v5363, 1.0
        %v5389 = vadd.f32 %v5365, 1.0
        %v5390 = vadd.f32 %v5367, 1.0
        %v5391 = vadd.f32 %v5369, 1.0
        %v5392 = vadd.f32 %v5371, 1.0
        %v5393 = vadd.f32 %v5373, 1.0
        %v5394 = vadd.f32 %v5375, 1.0
        %v5395 = vadd.f32 %v5377, 1.0
        %v5396 = vadd.f32 %v5379, 1.0
        %v5397 = vadd.f32 %v5381, 1.0
        %v5398 = vrcp.pop %v5382
        %v5399 = vrcp.pop %v5383
        %v5400 = vrcp.pop %v5384
        %v5401 = vrcp.pop %v5385
        %v5402 = vrcp.pop %v5386
        %v5403 = vrcp.pop %v5387
        %v5404 = vrcp.pop %v5388
        %v5405 = vrcp.pop %v5389
        %v5406 = vrcp.pop %v5390
        %v5407 = vrcp.pop %v5391
        %v5408 = vrcp.pop %v5392
        %v5409 = vrcp.pop %v5393
        %v5410 = vrcp.pop %v5394
        %v5411 = vrcp.pop %v5395
        %v5412 = vrcp.pop %v5396
        %v5413 = vrcp.pop %v5397
        %vm5414 = vcmask 7168
        %5415 = vst.msk [vmem:[%s434] sm:$0xff] %vm5414, %v5398
        %5416 = vst.msk [vmem:[%s434 + $0x8] sm:$0xff] %vm5414, %v5399
        %5417 = vst.msk [vmem:[%s434 + $0x10] sm:$0xff] %vm5414, %v5400
        %5418 = vst.msk [vmem:[%s434 + $0x18] sm:$0xff] %vm5414, %v5401
        %5419 = vst.msk [vmem:[%s434 + $0x20] sm:$0xff] %vm5414, %v5402
        %5420 = vst.msk [vmem:[%s434 + $0x28] sm:$0xff] %vm5414, %v5403
        %5421 = vst.msk [vmem:[%s434 + $0x30] sm:$0xff] %vm5414, %v5404
        %5422 = vst.msk [vmem:[%s434 + $0x38] sm:$0xff] %vm5414, %v5405
        %5423 = vst.msk [vmem:[%s434 + $0x40] sm:$0xff] %vm5414, %v5406
        %5424 = vst.msk [vmem:[%s434 + $0x48] sm:$0xff] %vm5414, %v5407
        %5425 = vst.msk [vmem:[%s434 + $0x50] sm:$0xff] %vm5414, %v5408
        %5426 = vst.msk [vmem:[%s434 + $0x58] sm:$0xff] %vm5414, %v5409
        %5427 = vst.msk [vmem:[%s434 + $0x60] sm:$0xff] %vm5414, %v5410
        %5428 = vst.msk [vmem:[%s434 + $0x68] sm:$0xff] %vm5414, %v5411
        %5429 = vst.msk [vmem:[%s434 + $0x70] sm:$0xff] %vm5414, %v5412
        %5430 = vst.msk [vmem:[%s434 + $0x78] sm:$0xff] %vm5414, %v5413
        %s5431 = smul.u32 16, %s26
        %p5432 = scmp.lt.s32.totalorder %s5431, 31
        %s5433 = scalar_select %p5432, %s5431, 31
        %s5434 = smul.addr %s5433, 8
        %s5435 = scalar_lea.vmem %s11, %s5434
        // Predicated region
        $region77: #{tpu_custom_call.1} parent=63 // pred_check
          %p5436 = pneg %p280
        $region78: #{tpu_custom_call.1} parent=63 // pred_check_branch
          %5438 = sbr.rel (%p5436) target = $region80
        $region79: #{tpu_custom_call.1} parent=63 // pred_region
          %s5439 = smul.u32 16, %s26
        $region80: #{tpu_custom_call.1} parent=63 // pred_fallthru
          _
      $region64: #{tpu_custom_call.1} parent=5 // pred_fallthru
        _
      %p5440 = scmp.le.s32.totalorder 2, %s21
      // Predicated region
      $region81: #{tpu_custom_call.1} parent=5 // pred_check
        %p5441 = pneg %p5440
      $region82: #{tpu_custom_call.1} parent=5 // pred_check_branch
        %5443 = sbr.rel (%p5441) target = $region84
      $region83: #{tpu_custom_call.1} parent=5 // pred_region
        %s5444 = ssub.s32 %s21, 2
        // Predicated region
        $region85: #{tpu_custom_call.1} parent=83 // pred_check
          %p5445 = pneg %p286
        $region86: #{tpu_custom_call.1} parent=83 // pred_check_branch
          %5447 = sbr.rel (%p5445) target = $region88
        $region87: #{tpu_custom_call.1} parent=83 // pred_region
          %s5448 = smul.u32 16, %s27
          %p5449 = scmp.lt.s32.totalorder %s5448, 31
          %s5450 = scalar_select %p5449, %s5448, 31
          %s5451 = smul.addr %s5450, 8
          %s5452 = scalar_lea.vmem %s11, %s5451
        $region88: #{tpu_custom_call.1} parent=83 // pred_fallthru
          _
      $region84: #{tpu_custom_call.1} parent=5 // pred_fallthru
        _
    $region6: #{tpu_custom_call.1} parent=1 // loop_footer
      %s25 = sadd.s32 1, %s21
    $region7: #{tpu_custom_call.1} parent=1 // loop_footer_branch
      %20 = sbr.rel target = $region3
    $region8: #{tpu_custom_call.1} parent=1 // loop_exit
      _
    %5453 = vsyncpa [#allocation4], 1
    %s5454 = scalar_lea.sflag [#allocation4], 1
    %5455 = vsyncpa %s5454, 1
    %5456 = vsyncpa [#allocation6], 1

</llo_original>
